<compile_context>
chip_gen: v7x
topology: tpu7x:2x2x1
jax: 0.10.0
libtpu: 0.0.40
codegen_flags: <defaults>
</compile_context>

<pallas_src>
import numpy as np
import jax
import jax.numpy as jnp
from jax import lax
from jax.experimental import pallas as pl
from jax.experimental.pallas import tpu as pltpu


# ----------------------------- parameter init -----------------------------
def _orthogonal(key, shape):
    rows, cols = shape
    a = jax.random.normal(key, (rows, cols), jnp.float32)
    flip = rows < cols
    if flip:
        a = a.T
    q, r = jnp.linalg.qr(a)
    q = q * jnp.sign(jnp.diag(r))
    if flip:
        q = q.T
    return q[:rows, :cols]


def init_lstm_params(key, input_size, hidden_size, num_layers, bidirectional):
    """Mirrors LSTM.init_params(): orthogonal W_hh, kaiming-normal W_ih,
    zero biases, forget-gate chunk of bias_hh set to 1."""
    num_dir = 2 if bidirectional else 1
    params = {}
    for l in range(num_layers):
        layer_in = input_size if l == 0 else hidden_size * num_dir
        for d in range(num_dir):
            key, k1, k2 = jax.random.split(key, 3)
            w_hh = _orthogonal(k1, (4 * hidden_size, hidden_size))
            std = (2.0 / layer_in) ** 0.5  # kaiming_normal_, fan_in, gain=sqrt(2)
            w_ih = std * jax.random.normal(k2, (4 * hidden_size, layer_in), jnp.float32)
            b_ih = jnp.zeros((4 * hidden_size,), jnp.float32)
            b_hh = jnp.zeros((4 * hidden_size,), jnp.float32)
            b_hh = b_hh.at[hidden_size:2 * hidden_size].set(1.0)  # forget bias = 1
            params[(l, d)] = dict(w_ih=w_ih, w_hh=w_hh, b_ih=b_ih, b_hh=b_hh)
    return params


# ------------------------------- padding utils ------------------------------
def _round_up(x, m):
    return ((x + m - 1) // m) * m


def _pad_gate_rows(w, H, H_pad):
    """(4H, K) -> (4*H_pad, K): zero-pad each of the 4 gate row-blocks."""
    K = w.shape[1]
    w4 = w.reshape(4, H, K)
    w4 = jnp.pad(w4, ((0, 0), (0, H_pad - H), (0, 0)))
    return w4.reshape(4 * H_pad, K)


def _pad_gate_bias(b, H, H_pad):
    b4 = b.reshape(4, H)
    b4 = jnp.pad(b4, ((0, 0), (0, H_pad - H)))
    return b4.reshape(4 * H_pad)


def _pad_wih_cols(w_ih, H, H_pad, num_dir):
    """(4H, num_dir*H) -> (4H, num_dir*H_pad): zero-pad each direction's column
    block so W_ih lines up with the padded inter-layer activation layout."""
    if H == H_pad:
        return w_ih
    rows = w_ih.shape[0]
    w = w_ih.reshape(rows, num_dir, H)
    w = jnp.pad(w, ((0, 0), (0, 0), (0, H_pad - H)))
    return w.reshape(rows, num_dir * H_pad)


def _sigmoid(x):
    # sigmoid(x) == 0.5*tanh(0.5*x) + 0.5  -> one EUP op instead of exp + recip
    return 0.5 * jnp.tanh(0.5 * x) + 0.5


# ------------------------------ Pallas kernel ------------------------------
def make_lstm_kernel(TB, H_pad, num_dir, nblk):
    """Recurrent LSTM kernel over one time block.

    Grid = (num_dirs, num_time_blocks).  d==1 is the reverse direction: the
    index_maps hand us time blocks in reverse order; inside the block we walk
    the TB steps with STATIC indices (forward branch / backward branch under
    pl.when), so every gx/out VMEM offset is a Python constant.
    gates_x (= x@W_ih + b, precomputed, bf16) arrives per block; only
    h_prev @ W_hh runs per timestep (bf16 operands, f32 accumulation).
    """

    def kernel(gx_ref, whh_ref, len_ref, out_ref, hfin_ref, h_sc, c_sc):
        d = pl.program_id(0)
        t = pl.program_id(1)

        @pl.when(t == 0)
        def _():
            h_sc[...] = jnp.zeros_like(h_sc)
            c_sc[...] = jnp.zeros_like(c_sc)

        w_hh = whh_ref[...]          # (H_pad, 4*H_pad) bf16, hoisted out of loop
        len_col = len_ref[...]       # (B_pad, 1) int32, hoisted out of loop

        def run_block(reverse):
            # actual time block handled by index_map; only the absolute time of
            # each in-block step is needed here (for the length mask).
            tb = (nblk - 1 - t) if reverse else t
            t_base = tb * TB
            h = h_sc[...]
            c = c_sc[...]
            steps = range(TB - 1, -1, -1) if reverse else range(TB)
            for s in steps:                               # static unroll
                gates = gx_ref[s].astype(jnp.float32) + jnp.dot(
                    h.astype(jnp.bfloat16), w_hh,
                    preferred_element_type=jnp.float32)
                # PyTorch gate order i, f, g, o; slices on 128-lane boundaries.
                i_g = _sigmoid(gates[:, 0:H_pad])
                f_g = _sigmoid(gates[:, H_pad:2 * H_pad])
                g_g = jnp.tanh(gates[:, 2 * H_pad:3 * H_pad])
                o_g = _sigmoid(gates[:, 3 * H_pad:4 * H_pad])
                c_new = f_g * c + i_g * g_g
                h_new = o_g * jnp.tanh(c_new)
                # packed-sequence semantics: freeze state / zero output past len
                m = (t_base + s) < len_col                # (B_pad, 1) bool
                h = jnp.where(m, h_new, h)
                c = jnp.where(m, c_new, c)
                out_ref[s] = jnp.where(m, h_new, 0.0).astype(out_ref.dtype)
            h_sc[...] = h
            c_sc[...] = c

        if num_dir == 1:
            run_block(reverse=False)
        else:
            @pl.when(d == 0)
            def _fwd():
                run_block(reverse=False)

            @pl.when(d == 1)
            def _bwd():
                run_block(reverse=True)

        @pl.when(t == nblk - 1)
        def _():
            hfin_ref[...] = h_sc[...]

    return kernel


def lstm_layer_fused(layer_in_pad, lengths_col, dir_params, H, H_pad, TB,
                     first_layer):
    """Run all directions of one LSTM layer in a single pallas_call.

    layer_in_pad: (T_pad, B_pad, Fin) — already padded over T and B (and, for
    layers > 0, over the per-direction hidden columns).
    Returns (out_pad, hfin_pad):
      out_pad : (T_pad, B_pad, num_dir*H_pad) bf16   (padded, fed to next layer)
      hfin_pad: (num_dir, B_pad, H_pad) f32
    """
    T_pad, B_pad, Fin = layer_in_pad.shape
    num_dir = len(dir_params)
    nblk = T_pad // TB

    # ---- hoisted input projection (one bf16 matmul per direction, plain XLA)
    x2d = layer_in_pad.reshape(T_pad * B_pad, Fin).astype(jnp.bfloat16)
    gx_list, whh_list = [], []
    for p in dir_params:
        w_ih = p['w_ih'] if first_layer else _pad_wih_cols(p['w_ih'], H, H_pad, num_dir)
        wih_p = _pad_gate_rows(w_ih, H, H_pad)                    # (4Hp, Fin)
        b_p = _pad_gate_bias(p['b_ih'] + p['b_hh'], H, H_pad)     # (4Hp,)
        gx = (jnp.dot(x2d, wih_p.T.astype(jnp.bfloat16),
                      preferred_element_type=jnp.float32) + b_p[None, :])
        gx_list.append(gx.astype(jnp.bfloat16).reshape(T_pad, B_pad, 4 * H_pad))

        whh_p = _pad_gate_rows(p['w_hh'], H, H_pad)               # (4Hp, H)
        whh_p = jnp.pad(whh_p, ((0, 0), (0, H_pad - H)))          # (4Hp, Hp)
        whh_list.append(whh_p.T.astype(jnp.bfloat16))             # (Hp, 4Hp) bf16

    gx_all = jnp.stack(gx_list, axis=0)     # (num_dir, T_pad, B_pad, 4Hp) bf16
    whh_all = jnp.stack(whh_list, axis=0)   # (num_dir, Hp, 4Hp)           bf16

    def t_map(d, t):
        # reverse direction walks time blocks back-to-front
        return jnp.where(d == 1, nblk - 1 - t, t)

    # ---- explicit VMEM working-set budget -> vmem_limit_bytes
    gx_blk = TB * B_pad * 4 * H_pad * 2          # bf16
    out_blk = TB * B_pad * H_pad * 2             # bf16
    whh_blk = H_pad * 4 * H_pad * 2              # bf16
    hfin_blk = B_pad * H_pad * 4                 # f32
    len_blk = B_pad * 128 * 4                    # lane-padded int32
    scratch_bytes = 2 * B_pad * H_pad * 4        # f32 h/c state
    budget = (2 * (gx_blk + out_blk + hfin_blk) + 2 * whh_blk
              + len_blk + scratch_bytes)
    vmem_limit = int(min(128 << 20, 2 * budget + (16 << 20)))

    kernel = make_lstm_kernel(TB, H_pad, num_dir, nblk)

    def _call(single_buffer_whh):
        whh_kwargs = {"pipeline_mode": pl.Buffered(1)} if single_buffer_whh else {}
        grid_spec = pltpu.PrefetchScalarGridSpec(
            num_scalar_prefetch=0,
            grid=(num_dir, nblk),
            in_specs=[
                pl.BlockSpec((None, TB, B_pad, 4 * H_pad),
                             lambda d, t: (d, t_map(d, t), 0, 0)),
                # W_hh block is constant over t -> single-buffer it.
                pl.BlockSpec((None, H_pad, 4 * H_pad),
                             lambda d, t: (d, 0, 0), **whh_kwargs),
                pl.BlockSpec((B_pad, 1), lambda d, t: (0, 0)),
            ],
            out_specs=[
                # both directions write one padded buffer; lane offset = d*H_pad
                pl.BlockSpec((TB, B_pad, H_pad),
                             lambda d, t: (t_map(d, t), 0, d)),
                pl.BlockSpec((None, B_pad, H_pad), lambda d, t: (d, 0, 0)),
            ],
            scratch_shapes=[pltpu.VMEM((B_pad, H_pad), jnp.float32),
                            pltpu.VMEM((B_pad, H_pad), jnp.float32)],
        )
        return pl.pallas_call(
            kernel,
            out_shape=(jax.ShapeDtypeStruct((T_pad, B_pad, num_dir * H_pad),
                                            jnp.bfloat16),
                       jax.ShapeDtypeStruct((num_dir, B_pad, H_pad), jnp.float32)),
            grid_spec=grid_spec,
            compiler_params=pltpu.CompilerParams(
                # direction axis independent -> split across TCs on v7x;
                # time axis carries recurrent state -> sequential.
                dimension_semantics=("parallel", "arbitrary"),
                vmem_limit_bytes=vmem_limit),
        )(gx_all, whh_all, lengths_col)

    try:
        out_pad, hfin_pad = _call(True)
    except Exception:
        # pl.Buffered(1) not supported by this jax version -> default buffering
        # (identical semantics, just 2x W_hh VMEM).
        out_pad, hfin_pad = _call(False)
    return out_pad, hfin_pad


def lstm_model(x, lengths, params, num_layers, bidirectional, block_t=8):
    T, B, _ = x.shape
    num_dir = 2 if bidirectional else 1
    H = params[(0, 0)]['w_hh'].shape[1]
    H_pad = _round_up(H, 128)        # lane-dense stores / aligned gate slices
    B_pad = _round_up(B, 8)          # full sublane tile
    TB = block_t                     # raise to 16-32 on v5e/v6e for long seqs
    T_pad = _round_up(T, TB)

    lengths_col = jnp.pad(lengths.astype(jnp.int32), (0, B_pad - B)).reshape(B_pad, 1)

    # pad once up front; activations stay padded (and bf16) between layers
    layer_in = jnp.pad(x, ((0, T_pad - T), (0, B_pad - B), (0, 0)))

    hiddens = []
    out_pad = None
    for l in range(num_layers):
        dir_params = [params[(l, d)] for d in range(num_dir)]
        out_pad, hfin_pad = lstm_layer_fused(layer_in, lengths_col, dir_params,
                                             H, H_pad, TB, first_layer=(l == 0))
        for d in range(num_dir):
            hiddens.append(hfin_pad[d, :B, :H])
        layer_in = out_pad           # padded bf16, no slice/concat between layers
        # TODO(synk): inter-layer dropout (training mode) omitted.

    hidden = jnp.stack(hiddens, axis=0)                      # (L*num_dir, B, H)
    out = out_pad.reshape(T_pad, B_pad, num_dir, H_pad)[:T, :B, :, :H]
    output = out.reshape(T, B, num_dir * H).astype(jnp.float32)
    return hidden, output


# ------------------------- pure-JAX reference check -------------------------
def _lstm_layer_ref(x, lengths, w_ih, w_hh, b_ih, b_hh, reverse):
    T, B, _ = x.shape
    H = w_hh.shape[1]
    b = (b_ih + b_hh)[None, :]
    ts = jnp.arange(T)
    if reverse:
        ts = ts[::-1]

    def step(carry, t):
        h, c = carry
        x_t = x[t]
        gates = x_t @ w_ih.T + h @ w_hh.T + b
        i_g = jax.nn.sigmoid(gates[:, 0:H])
        f_g = jax.nn.sigmoid(gates[:, H:2 * H])
        g_g = jnp.tanh(gates[:, 2 * H:3 * H])
        o_g = jax.nn.sigmoid(gates[:, 3 * H:4 * H])
        c_new = f_g * c + i_g * g_g
        h_new = o_g * jnp.tanh(c_new)
        m = (t < lengths)[:, None]
        return (jnp.where(m, h_new, h), jnp.where(m, c_new, c)), jnp.where(m, h_new, 0.0)

    init = (jnp.zeros((B, H), jnp.float32), jnp.zeros((B, H), jnp.float32))
    (h_f, _), outs = lax.scan(step, init, ts)
    if reverse:
        outs = outs[::-1]
    return outs, h_f


def lstm_model_ref(x, lengths, params, num_layers, bidirectional):
    num_dir = 2 if bidirectional else 1
    hiddens, layer_in = [], x
    for l in range(num_layers):
        outs = []
        for d in range(num_dir):
            p = params[(l, d)]
            out, h_fin = _lstm_layer_ref(layer_in, lengths, p['w_ih'], p['w_hh'],
                                         p['b_ih'], p['b_hh'], reverse=(d == 1))
            outs.append(out)
            hiddens.append(h_fin)
        layer_in = jnp.concatenate(outs, axis=-1) if num_dir == 2 else outs[0]
    return jnp.stack(hiddens, axis=0), layer_in


# ----------------------------------- main -----------------------------------
if __name__ == "__main__":
    T, B = 8, 4
    input_size, hidden_size = 16, 32
    num_layers, bidirectional = 2, True

    key = jax.random.PRNGKey(0)
    kx, kp = jax.random.split(key)
    x = jax.random.normal(kx, (T, B, input_size), jnp.float32)
    # pack_padded_sequence (enforce_sorted=True) expects descending lengths
    lengths = jnp.array([8, 7, 5, 3], jnp.int32)

    params = init_lstm_params(kp, input_size, hidden_size, num_layers, bidirectional)

    # block_t=4 -> 2 time blocks: exercises state carry across grid steps.
    hidden, output = lstm_model(x, lengths, params, num_layers, bidirectional,
                                block_t=4)
    jax.block_until_ready((hidden, output))

    hidden_ref, output_ref = lstm_model_ref(x, lengths, params, num_layers, bidirectional)
    # tolerance accounts for the bf16 streams (gates_x, inter-layer activations,
    # recurrent W_hh / h operands); all accumulation and h/c state are f32.
    np.testing.assert_allclose(np.asarray(hidden), np.asarray(hidden_ref),
                               atol=4e-2, rtol=4e-2)
    np.testing.assert_allclose(np.asarray(output), np.asarray(output_ref),
                               atol=4e-2, rtol=4e-2)

    print("KERNEL_OK")
</pallas_src>

<mosaic_0001>
module attributes {stable_mosaic.version = 11 : i64} {
  func.func @kernel(%arg0: i32, %arg1: i32, %arg2: memref<1x4x8x512xbf16, #tpu.memory_space<vmem>>, %arg3: memref<1x128x512xbf16, #tpu.memory_space<vmem>>, %arg4: memref<8x1xi32, #tpu.memory_space<vmem>>, %arg5: memref<4x8x128xbf16, #tpu.memory_space<vmem>>, %arg6: memref<1x8x128xf32, #tpu.memory_space<vmem>>, %arg7: memref<8x128xf32, #tpu.memory_space<vmem>>, %arg8: memref<8x128xf32, #tpu.memory_space<vmem>>) attributes {dimension_semantics = [#tpu.dimension_semantics<parallel>, #tpu.dimension_semantics<arbitrary>], iteration_bounds = array<i64: 2, 2>, scalar_prefetch = 0 : i64, scratch_operands = 2 : i64, tpu.core_type = #tpu.core_type<tc>, window_params = [{transform_indices = @transform_0, window_bounds = array<i64: 1, 4, 8, 512>}, {pipeline_mode = #tpu.pipeline_mode<synchronous>, transform_indices = @transform_1, window_bounds = array<i64: 1, 128, 512>}, {pipeline_mode = #tpu.pipeline_mode<synchronous>, transform_indices = @transform_2, window_bounds = array<i64: 8, 1>}, {transform_indices = @transform_3, window_bounds = array<i64: 4, 8, 128>}, {transform_indices = @transform_4, window_bounds = array<i64: 1, 8, 128>}]} {
    %c0_i32 = arith.constant 0 : i32
    %0 = arith.cmpi eq, %arg1, %c0_i32 : i32
    %1 = arith.extui %0 : i1 to i32
    %c0_i32_0 = arith.constant 0 : i32
    %2 = arith.cmpi ne, %1, %c0_i32_0 : i32
    scf.if %2 {
      %cst = arith.constant 0.000000e+00 : f32
      %15 = vector.broadcast %cst : f32 to vector<8x128xf32>
      %c0_10 = arith.constant 0 : index
      %c0_11 = arith.constant 0 : index
      %16 = vector.load %arg7[%c0_10, %c0_11] : memref<8x128xf32, #tpu.memory_space<vmem>>, vector<8x128xf32>
      tpu.vector_store %arg7[%c0_10, %c0_11], %15 {strides = array<i32>} : memref<8x128xf32, #tpu.memory_space<vmem>>, vector<8x128xf32>,
      %cst_12 = arith.constant 0.000000e+00 : f32
      %17 = vector.broadcast %cst_12 : f32 to vector<8x128xf32>
      %c0_13 = arith.constant 0 : index
      %c0_14 = arith.constant 0 : index
      %18 = vector.load %arg8[%c0_13, %c0_14] : memref<8x128xf32, #tpu.memory_space<vmem>>, vector<8x128xf32>
      tpu.vector_store %arg8[%c0_13, %c0_14], %17 {strides = array<i32>} : memref<8x128xf32, #tpu.memory_space<vmem>>, vector<8x128xf32>,
    } else {
    }
    %c0 = arith.constant 0 : index
    %c0_1 = arith.constant 0 : index
    %c0_2 = arith.constant 0 : index
    %3 = vector.load %arg3[%c0, %c0_1, %c0_2] : memref<1x128x512xbf16, #tpu.memory_space<vmem>>, vector<1x128x512xbf16>
    %4 = vector.shape_cast %3 : vector<1x128x512xbf16> to vector<128x512xbf16>
    %c0_3 = arith.constant 0 : index
    %c0_4 = arith.constant 0 : index
    %5 = vector.load %arg4[%c0_3, %c0_4] : memref<8x1xi32, #tpu.memory_space<vmem>>, vector<8x1xi32>
    %c0_i32_5 = arith.constant 0 : i32
    %6 = arith.cmpi eq, %arg0, %c0_i32_5 : i32
    %7 = arith.extui %6 : i1 to i32
    %c0_i32_6 = arith.constant 0 : i32
    %8 = arith.cmpi ne, %7, %c0_i32_6 : i32
    scf.if %8 {
      %c4_i32 = arith.constant 4 : i32
      %15 = arith.muli %arg1, %c4_i32 : i32
      %c0_10 = arith.constant 0 : index
      %c0_11 = arith.constant 0 : index
      %16 = vector.load %arg7[%c0_10, %c0_11] : memref<8x128xf32, #tpu.memory_space<vmem>>, vector<8x128xf32>
      %c0_12 = arith.constant 0 : index
      %c0_13 = arith.constant 0 : index
      %17 = vector.load %arg8[%c0_12, %c0_13] : memref<8x128xf32, #tpu.memory_space<vmem>>, vector<8x128xf32>
      %c0_14 = arith.constant 0 : index
      %c0_15 = arith.constant 0 : index
      %c0_16 = arith.constant 0 : index
      %c0_17 = arith.constant 0 : index
      %18 = vector.load %arg2[%c0_14, %c0_15, %c0_16, %c0_17] : memref<1x4x8x512xbf16, #tpu.memory_space<vmem>>, vector<1x1x8x512xbf16>
      %19 = vector.shape_cast %18 : vector<1x1x8x512xbf16> to vector<8x512xbf16>
      %20 = arith.extf %19 : vector<8x512xbf16> to vector<8x512xf32>
      %21 = arith.truncf %16 : vector<8x128xf32> to vector<8x128xbf16>
      %cst = arith.constant dense<0.000000e+00> : vector<8x512xf32>
      %22 = tpu.matmul %21, %4, %cst {dimension_numbers = #tpu.dot_dimension_numbers<[1], [0], [0], [1], [0, 0, 1, 1], [], []>} : vector<8x128xbf16>, vector<128x512xbf16>, vector<8x512xf32> -> vector<8x512xf32>
      %23 = arith.addf %20, %22 : vector<8x512xf32>
      %24 = vector.extract_strided_slice %23 {offsets = [0, 0], sizes = [8, 128], strides = [1, 1]} : vector<8x512xf32> to vector<8x128xf32>
      %cst_18 = arith.constant 5.000000e-01 : f32
      %25 = vector.broadcast %cst_18 : f32 to vector<8x128xf32>
      %26 = arith.mulf %25, %24 : vector<8x128xf32>
      %27 = math.tanh %26 : vector<8x128xf32>
      %cst_19 = arith.constant 5.000000e-01 : f32
      %28 = vector.broadcast %cst_19 : f32 to vector<8x128xf32>
      %29 = arith.mulf %28, %27 : vector<8x128xf32>
      %cst_20 = arith.constant 5.000000e-01 : f32
      %30 = vector.broadcast %cst_20 : f32 to vector<8x128xf32>
      %31 = arith.addf %29, %30 : vector<8x128xf32>
      %32 = vector.extract_strided_slice %23 {offsets = [0, 128], sizes = [8, 128], strides = [1, 1]} : vector<8x512xf32> to vector<8x128xf32>
      %cst_21 = arith.constant 5.000000e-01 : f32
      %33 = vector.broadcast %cst_21 : f32 to vector<8x128xf32>
      %34 = arith.mulf %33, %32 : vector<8x128xf32>
      %35 = math.tanh %34 : vector<8x128xf32>
      %cst_22 = arith.constant 5.000000e-01 : f32
      %36 = vector.broadcast %cst_22 : f32 to vector<8x128xf32>
      %37 = arith.mulf %36, %35 : vector<8x128xf32>
      %cst_23 = arith.constant 5.000000e-01 : f32
      %38 = vector.broadcast %cst_23 : f32 to vector<8x128xf32>
      %39 = arith.addf %37, %38 : vector<8x128xf32>
      %40 = vector.extract_strided_slice %23 {offsets = [0, 256], sizes = [8, 128], strides = [1, 1]} : vector<8x512xf32> to vector<8x128xf32>
      %41 = math.tanh %40 : vector<8x128xf32>
      %42 = vector.extract_strided_slice %23 {offsets = [0, 384], sizes = [8, 128], strides = [1, 1]} : vector<8x512xf32> to vector<8x128xf32>
      %cst_24 = arith.constant 5.000000e-01 : f32
      %43 = vector.broadcast %cst_24 : f32 to vector<8x128xf32>
      %44 = arith.mulf %43, %42 : vector<8x128xf32>
      %45 = math.tanh %44 : vector<8x128xf32>
      %cst_25 = arith.constant 5.000000e-01 : f32
      %46 = vector.broadcast %cst_25 : f32 to vector<8x128xf32>
      %47 = arith.mulf %46, %45 : vector<8x128xf32>
      %cst_26 = arith.constant 5.000000e-01 : f32
      %48 = vector.broadcast %cst_26 : f32 to vector<8x128xf32>
      %49 = arith.addf %47, %48 : vector<8x128xf32>
      %50 = arith.mulf %39, %17 : vector<8x128xf32>
      %51 = arith.mulf %31, %41 : vector<8x128xf32>
      %52 = arith.addf %50, %51 : vector<8x128xf32>
      %53 = math.tanh %52 : vector<8x128xf32>
      %54 = arith.mulf %49, %53 : vector<8x128xf32>
      %c0_i32_27 = arith.constant 0 : i32
      %55 = arith.addi %15, %c0_i32_27 : i32
      %56 = vector.broadcast %55 : i32 to vector<8x1xi32>
      %57 = arith.cmpi slt, %56, %5 : vector<8x1xi32>
      %58 = vector.shape_cast %57 : vector<8x1xi1> to vector<8x1xi1>
      %59 = vector.broadcast %58 : vector<8x1xi1> to vector<8x128xi1>
      %60 = arith.select %59, %54, %16 : vector<8x128xi1>, vector<8x128xf32>
      %61 = vector.shape_cast %57 : vector<8x1xi1> to vector<8x1xi1>
      %62 = vector.broadcast %61 : vector<8x1xi1> to vector<8x128xi1>
      %63 = arith.select %62, %52, %17 : vector<8x128xi1>, vector<8x128xf32>
      %cst_28 = arith.constant 0.000000e+00 : f32
      %64 = vector.shape_cast %57 : vector<8x1xi1> to vector<8x1xi1>
      %65 = vector.broadcast %64 : vector<8x1xi1> to vector<8x128xi1>
      %66 = vector.broadcast %cst_28 : f32 to vector<8x128xf32>
      %67 = arith.select %65, %54, %66 : vector<8x128xi1>, vector<8x128xf32>
      %68 = arith.truncf %67 : vector<8x128xf32> to vector<8x128xbf16>
      %c0_29 = arith.constant 0 : index
      %c0_30 = arith.constant 0 : index
      %c0_31 = arith.constant 0 : index
      %69 = vector.load %arg5[%c0_29, %c0_30, %c0_31] : memref<4x8x128xbf16, #tpu.memory_space<vmem>>, vector<1x8x128xbf16>
      %70 = vector.shape_cast %69 : vector<1x8x128xbf16> to vector<8x128xbf16>
      %71 = vector.shape_cast %68 : vector<8x128xbf16> to vector<1x8x128xbf16>
      tpu.vector_store %arg5[%c0_29, %c0_30, %c0_31], %71 {strides = array<i32>} : memref<4x8x128xbf16, #tpu.memory_space<vmem>>, vector<1x8x128xbf16>,
      %c0_32 = arith.constant 0 : index
      %c1 = arith.constant 1 : index
      %c0_33 = arith.constant 0 : index
      %c0_34 = arith.constant 0 : index
      %72 = vector.load %arg2[%c0_32, %c1, %c0_33, %c0_34] : memref<1x4x8x512xbf16, #tpu.memory_space<vmem>>, vector<1x1x8x512xbf16>
      %73 = vector.shape_cast %72 : vector<1x1x8x512xbf16> to vector<8x512xbf16>
      %74 = arith.extf %73 : vector<8x512xbf16> to vector<8x512xf32>
      %75 = arith.truncf %60 : vector<8x128xf32> to vector<8x128xbf16>
      %cst_35 = arith.constant dense<0.000000e+00> : vector<8x512xf32>
      %76 = tpu.matmul %75, %4, %cst_35 {dimension_numbers = #tpu.dot_dimension_numbers<[1], [0], [0], [1], [0, 0, 1, 1], [], []>} : vector<8x128xbf16>, vector<128x512xbf16>, vector<8x512xf32> -> vector<8x512xf32>
      %77 = arith.addf %74, %76 : vector<8x512xf32>
      %78 = vector.extract_strided_slice %77 {offsets = [0, 0], sizes = [8, 128], strides = [1, 1]} : vector<8x512xf32> to vector<8x128xf32>
      %cst_36 = arith.constant 5.000000e-01 : f32
      %79 = vector.broadcast %cst_36 : f32 to vector<8x128xf32>
      %80 = arith.mulf %79, %78 : vector<8x128xf32>
      %81 = math.tanh %80 : vector<8x128xf32>
      %cst_37 = arith.constant 5.000000e-01 : f32
      %82 = vector.broadcast %cst_37 : f32 to vector<8x128xf32>
      %83 = arith.mulf %82, %81 : vector<8x128xf32>
      %cst_38 = arith.constant 5.000000e-01 : f32
      %84 = vector.broadcast %cst_38 : f32 to vector<8x128xf32>
      %85 = arith.addf %83, %84 : vector<8x128xf32>
      %86 = vector.extract_strided_slice %77 {offsets = [0, 128], sizes = [8, 128], strides = [1, 1]} : vector<8x512xf32> to vector<8x128xf32>
      %cst_39 = arith.constant 5.000000e-01 : f32
      %87 = vector.broadcast %cst_39 : f32 to vector<8x128xf32>
      %88 = arith.mulf %87, %86 : vector<8x128xf32>
      %89 = math.tanh %88 : vector<8x128xf32>
      %cst_40 = arith.constant 5.000000e-01 : f32
      %90 = vector.broadcast %cst_40 : f32 to vector<8x128xf32>
      %91 = arith.mulf %90, %89 : vector<8x128xf32>
      %cst_41 = arith.constant 5.000000e-01 : f32
      %92 = vector.broadcast %cst_41 : f32 to vector<8x128xf32>
      %93 = arith.addf %91, %92 : vector<8x128xf32>
      %94 = vector.extract_strided_slice %77 {offsets = [0, 256], sizes = [8, 128], strides = [1, 1]} : vector<8x512xf32> to vector<8x128xf32>
      %95 = math.tanh %94 : vector<8x128xf32>
      %96 = vector.extract_strided_slice %77 {offsets = [0, 384], sizes = [8, 128], strides = [1, 1]} : vector<8x512xf32> to vector<8x128xf32>
      %cst_42 = arith.constant 5.000000e-01 : f32
      %97 = vector.broadcast %cst_42 : f32 to vector<8x128xf32>
      %98 = arith.mulf %97, %96 : vector<8x128xf32>
      %99 = math.tanh %98 : vector<8x128xf32>
      %cst_43 = arith.constant 5.000000e-01 : f32
      %100 = vector.broadcast %cst_43 : f32 to vector<8x128xf32>
      %101 = arith.mulf %100, %99 : vector<8x128xf32>
      %cst_44 = arith.constant 5.000000e-01 : f32
      %102 = vector.broadcast %cst_44 : f32 to vector<8x128xf32>
      %103 = arith.addf %101, %102 : vector<8x128xf32>
      %104 = arith.mulf %93, %63 : vector<8x128xf32>
      %105 = arith.mulf %85, %95 : vector<8x128xf32>
      %106 = arith.addf %104, %105 : vector<8x128xf32>
      %107 = math.tanh %106 : vector<8x128xf32>
      %108 = arith.mulf %103, %107 : vector<8x128xf32>
      %c1_i32_45 = arith.constant 1 : i32
      %109 = arith.addi %15, %c1_i32_45 : i32
      %110 = vector.broadcast %109 : i32 to vector<8x1xi32>
      %111 = arith.cmpi slt, %110, %5 : vector<8x1xi32>
      %112 = vector.shape_cast %111 : vector<8x1xi1> to vector<8x1xi1>
      %113 = vector.broadcast %112 : vector<8x1xi1> to vector<8x128xi1>
      %114 = arith.select %113, %108, %60 : vector<8x128xi1>, vector<8x128xf32>
      %115 = vector.shape_cast %111 : vector<8x1xi1> to vector<8x1xi1>
      %116 = vector.broadcast %115 : vector<8x1xi1> to vector<8x128xi1>
      %117 = arith.select %116, %106, %63 : vector<8x128xi1>, vector<8x128xf32>
      %cst_46 = arith.constant 0.000000e+00 : f32
      %118 = vector.shape_cast %111 : vector<8x1xi1> to vector<8x1xi1>
      %119 = vector.broadcast %118 : vector<8x1xi1> to vector<8x128xi1>
      %120 = vector.broadcast %cst_46 : f32 to vector<8x128xf32>
      %121 = arith.select %119, %108, %120 : vector<8x128xi1>, vector<8x128xf32>
      %122 = arith.truncf %121 : vector<8x128xf32> to vector<8x128xbf16>
      %c1_47 = arith.constant 1 : index
      %c0_48 = arith.constant 0 : index
      %c0_49 = arith.constant 0 : index
      %123 = vector.load %arg5[%c1_47, %c0_48, %c0_49] : memref<4x8x128xbf16, #tpu.memory_space<vmem>>, vector<1x8x128xbf16>
      %124 = vector.shape_cast %123 : vector<1x8x128xbf16> to vector<8x128xbf16>
      %125 = vector.shape_cast %122 : vector<8x128xbf16> to vector<1x8x128xbf16>
      tpu.vector_store %arg5[%c1_47, %c0_48, %c0_49], %125 {strides = array<i32>} : memref<4x8x128xbf16, #tpu.memory_space<vmem>>, vector<1x8x128xbf16>,
      %c0_50 = arith.constant 0 : index
      %c2 = arith.constant 2 : index
      %c0_51 = arith.constant 0 : index
      %c0_52 = arith.constant 0 : index
      %126 = vector.load %arg2[%c0_50, %c2, %c0_51, %c0_52] : memref<1x4x8x512xbf16, #tpu.memory_space<vmem>>, vector<1x1x8x512xbf16>
      %127 = vector.shape_cast %126 : vector<1x1x8x512xbf16> to vector<8x512xbf16>
      %128 = arith.extf %127 : vector<8x512xbf16> to vector<8x512xf32>
      %129 = arith.truncf %114 : vector<8x128xf32> to vector<8x128xbf16>
      %cst_53 = arith.constant dense<0.000000e+00> : vector<8x512xf32>
      %130 = tpu.matmul %129, %4, %cst_53 {dimension_numbers = #tpu.dot_dimension_numbers<[1], [0], [0], [1], [0, 0, 1, 1], [], []>} : vector<8x128xbf16>, vector<128x512xbf16>, vector<8x512xf32> -> vector<8x512xf32>
      %131 = arith.addf %128, %130 : vector<8x512xf32>
      %132 = vector.extract_strided_slice %131 {offsets = [0, 0], sizes = [8, 128], strides = [1, 1]} : vector<8x512xf32> to vector<8x128xf32>
      %cst_54 = arith.constant 5.000000e-01 : f32
      %133 = vector.broadcast %cst_54 : f32 to vector<8x128xf32>
      %134 = arith.mulf %133, %132 : vector<8x128xf32>
      %135 = math.tanh %134 : vector<8x128xf32>
      %cst_55 = arith.constant 5.000000e-01 : f32
      %136 = vector.broadcast %cst_55 : f32 to vector<8x128xf32>
      %137 = arith.mulf %136, %135 : vector<8x128xf32>
      %cst_56 = arith.constant 5.000000e-01 : f32
      %138 = vector.broadcast %cst_56 : f32 to vector<8x128xf32>
      %139 = arith.addf %137, %138 : vector<8x128xf32>
      %140 = vector.extract_strided_slice %131 {offsets = [0, 128], sizes = [8, 128], strides = [1, 1]} : vector<8x512xf32> to vector<8x128xf32>
      %cst_57 = arith.constant 5.000000e-01 : f32
      %141 = vector.broadcast %cst_57 : f32 to vector<8x128xf32>
      %142 = arith.mulf %141, %140 : vector<8x128xf32>
      %143 = math.tanh %142 : vector<8x128xf32>
      %cst_58 = arith.constant 5.000000e-01 : f32
      %144 = vector.broadcast %cst_58 : f32 to vector<8x128xf32>
      %145 = arith.mulf %144, %143 : vector<8x128xf32>
      %cst_59 = arith.constant 5.000000e-01 : f32
      %146 = vector.broadcast %cst_59 : f32 to vector<8x128xf32>
      %147 = arith.addf %145, %146 : vector<8x128xf32>
      %148 = vector.extract_strided_slice %131 {offsets = [0, 256], sizes = [8, 128], strides = [1, 1]} : vector<8x512xf32> to vector<8x128xf32>
      %149 = math.tanh %148 : vector<8x128xf32>
      %150 = vector.extract_strided_slice %131 {offsets = [0, 384], sizes = [8, 128], strides = [1, 1]} : vector<8x512xf32> to vector<8x128xf32>
      %cst_60 = arith.constant 5.000000e-01 : f32
      %151 = vector.broadcast %cst_60 : f32 to vector<8x128xf32>
      %152 = arith.mulf %151, %150 : vector<8x128xf32>
      %153 = math.tanh %152 : vector<8x128xf32>
      %cst_61 = arith.constant 5.000000e-01 : f32
      %154 = vector.broadcast %cst_61 : f32 to vector<8x128xf32>
      %155 = arith.mulf %154, %153 : vector<8x128xf32>
      %cst_62 = arith.constant 5.000000e-01 : f32
      %156 = vector.broadcast %cst_62 : f32 to vector<8x128xf32>
      %157 = arith.addf %155, %156 : vector<8x128xf32>
      %158 = arith.mulf %147, %117 : vector<8x128xf32>
      %159 = arith.mulf %139, %149 : vector<8x128xf32>
      %160 = arith.addf %158, %159 : vector<8x128xf32>
      %161 = math.tanh %160 : vector<8x128xf32>
      %162 = arith.mulf %157, %161 : vector<8x128xf32>
      %c2_i32 = arith.constant 2 : i32
      %163 = arith.addi %15, %c2_i32 : i32
      %164 = vector.broadcast %163 : i32 to vector<8x1xi32>
      %165 = arith.cmpi slt, %164, %5 : vector<8x1xi32>
      %166 = vector.shape_cast %165 : vector<8x1xi1> to vector<8x1xi1>
      %167 = vector.broadcast %166 : vector<8x1xi1> to vector<8x128xi1>
      %168 = arith.select %167, %162, %114 : vector<8x128xi1>, vector<8x128xf32>
      %169 = vector.shape_cast %165 : vector<8x1xi1> to vector<8x1xi1>
      %170 = vector.broadcast %169 : vector<8x1xi1> to vector<8x128xi1>
      %171 = arith.select %170, %160, %117 : vector<8x128xi1>, vector<8x128xf32>
      %cst_63 = arith.constant 0.000000e+00 : f32
      %172 = vector.shape_cast %165 : vector<8x1xi1> to vector<8x1xi1>
      %173 = vector.broadcast %172 : vector<8x1xi1> to vector<8x128xi1>
      %174 = vector.broadcast %cst_63 : f32 to vector<8x128xf32>
      %175 = arith.select %173, %162, %174 : vector<8x128xi1>, vector<8x128xf32>
      %176 = arith.truncf %175 : vector<8x128xf32> to vector<8x128xbf16>
      %c2_64 = arith.constant 2 : index
      %c0_65 = arith.constant 0 : index
      %c0_66 = arith.constant 0 : index
      %177 = vector.load %arg5[%c2_64, %c0_65, %c0_66] : memref<4x8x128xbf16, #tpu.memory_space<vmem>>, vector<1x8x128xbf16>
      %178 = vector.shape_cast %177 : vector<1x8x128xbf16> to vector<8x128xbf16>
      %179 = vector.shape_cast %176 : vector<8x128xbf16> to vector<1x8x128xbf16>
      tpu.vector_store %arg5[%c2_64, %c0_65, %c0_66], %179 {strides = array<i32>} : memref<4x8x128xbf16, #tpu.memory_space<vmem>>, vector<1x8x128xbf16>,
      %c0_67 = arith.constant 0 : index
      %c3 = arith.constant 3 : index
      %c0_68 = arith.constant 0 : index
      %c0_69 = arith.constant 0 : index
      %180 = vector.load %arg2[%c0_67, %c3, %c0_68, %c0_69] : memref<1x4x8x512xbf16, #tpu.memory_space<vmem>>, vector<1x1x8x512xbf16>
      %181 = vector.shape_cast %180 : vector<1x1x8x512xbf16> to vector<8x512xbf16>
      %182 = arith.extf %181 : vector<8x512xbf16> to vector<8x512xf32>
      %183 = arith.truncf %168 : vector<8x128xf32> to vector<8x128xbf16>
      %cst_70 = arith.constant dense<0.000000e+00> : vector<8x512xf32>
      %184 = tpu.matmul %183, %4, %cst_70 {dimension_numbers = #tpu.dot_dimension_numbers<[1], [0], [0], [1], [0, 0, 1, 1], [], []>} : vector<8x128xbf16>, vector<128x512xbf16>, vector<8x512xf32> -> vector<8x512xf32>
      %185 = arith.addf %182, %184 : vector<8x512xf32>
      %186 = vector.extract_strided_slice %185 {offsets = [0, 0], sizes = [8, 128], strides = [1, 1]} : vector<8x512xf32> to vector<8x128xf32>
      %cst_71 = arith.constant 5.000000e-01 : f32
      %187 = vector.broadcast %cst_71 : f32 to vector<8x128xf32>
      %188 = arith.mulf %187, %186 : vector<8x128xf32>
      %189 = math.tanh %188 : vector<8x128xf32>
      %cst_72 = arith.constant 5.000000e-01 : f32
      %190 = vector.broadcast %cst_72 : f32 to vector<8x128xf32>
      %191 = arith.mulf %190, %189 : vector<8x128xf32>
      %cst_73 = arith.constant 5.000000e-01 : f32
      %192 = vector.broadcast %cst_73 : f32 to vector<8x128xf32>
      %193 = arith.addf %191, %192 : vector<8x128xf32>
      %194 = vector.extract_strided_slice %185 {offsets = [0, 128], sizes = [8, 128], strides = [1, 1]} : vector<8x512xf32> to vector<8x128xf32>
      %cst_74 = arith.constant 5.000000e-01 : f32
      %195 = vector.broadcast %cst_74 : f32 to vector<8x128xf32>
      %196 = arith.mulf %195, %194 : vector<8x128xf32>
      %197 = math.tanh %196 : vector<8x128xf32>
      %cst_75 = arith.constant 5.000000e-01 : f32
      %198 = vector.broadcast %cst_75 : f32 to vector<8x128xf32>
      %199 = arith.mulf %198, %197 : vector<8x128xf32>
      %cst_76 = arith.constant 5.000000e-01 : f32
      %200 = vector.broadcast %cst_76 : f32 to vector<8x128xf32>
      %201 = arith.addf %199, %200 : vector<8x128xf32>
      %202 = vector.extract_strided_slice %185 {offsets = [0, 256], sizes = [8, 128], strides = [1, 1]} : vector<8x512xf32> to vector<8x128xf32>
      %203 = math.tanh %202 : vector<8x128xf32>
      %204 = vector.extract_strided_slice %185 {offsets = [0, 384], sizes = [8, 128], strides = [1, 1]} : vector<8x512xf32> to vector<8x128xf32>
      %cst_77 = arith.constant 5.000000e-01 : f32
      %205 = vector.broadcast %cst_77 : f32 to vector<8x128xf32>
      %206 = arith.mulf %205, %204 : vector<8x128xf32>
      %207 = math.tanh %206 : vector<8x128xf32>
      %cst_78 = arith.constant 5.000000e-01 : f32
      %208 = vector.broadcast %cst_78 : f32 to vector<8x128xf32>
      %209 = arith.mulf %208, %207 : vector<8x128xf32>
      %cst_79 = arith.constant 5.000000e-01 : f32
      %210 = vector.broadcast %cst_79 : f32 to vector<8x128xf32>
      %211 = arith.addf %209, %210 : vector<8x128xf32>
      %212 = arith.mulf %201, %171 : vector<8x128xf32>
      %213 = arith.mulf %193, %203 : vector<8x128xf32>
      %214 = arith.addf %212, %213 : vector<8x128xf32>
      %215 = math.tanh %214 : vector<8x128xf32>
      %216 = arith.mulf %211, %215 : vector<8x128xf32>
      %c3_i32 = arith.constant 3 : i32
      %217 = arith.addi %15, %c3_i32 : i32
      %218 = vector.broadcast %217 : i32 to vector<8x1xi32>
      %219 = arith.cmpi slt, %218, %5 : vector<8x1xi32>
      %220 = vector.shape_cast %219 : vector<8x1xi1> to vector<8x1xi1>
      %221 = vector.broadcast %220 : vector<8x1xi1> to vector<8x128xi1>
      %222 = arith.select %221, %216, %168 : vector<8x128xi1>, vector<8x128xf32>
      %223 = vector.shape_cast %219 : vector<8x1xi1> to vector<8x1xi1>
      %224 = vector.broadcast %223 : vector<8x1xi1> to vector<8x128xi1>
      %225 = arith.select %224, %214, %171 : vector<8x128xi1>, vector<8x128xf32>
      %cst_80 = arith.constant 0.000000e+00 : f32
      %226 = vector.shape_cast %219 : vector<8x1xi1> to vector<8x1xi1>
      %227 = vector.broadcast %226 : vector<8x1xi1> to vector<8x128xi1>
      %228 = vector.broadcast %cst_80 : f32 to vector<8x128xf32>
      %229 = arith.select %227, %216, %228 : vector<8x128xi1>, vector<8x128xf32>
      %230 = arith.truncf %229 : vector<8x128xf32> to vector<8x128xbf16>
      %c3_81 = arith.constant 3 : index
      %c0_82 = arith.constant 0 : index
      %c0_83 = arith.constant 0 : index
      %231 = vector.load %arg5[%c3_81, %c0_82, %c0_83] : memref<4x8x128xbf16, #tpu.memory_space<vmem>>, vector<1x8x128xbf16>
      %232 = vector.shape_cast %231 : vector<1x8x128xbf16> to vector<8x128xbf16>
      %233 = vector.shape_cast %230 : vector<8x128xbf16> to vector<1x8x128xbf16>
      tpu.vector_store %arg5[%c3_81, %c0_82, %c0_83], %233 {strides = array<i32>} : memref<4x8x128xbf16, #tpu.memory_space<vmem>>, vector<1x8x128xbf16>,
      %c0_84 = arith.constant 0 : index
      %c0_85 = arith.constant 0 : index
      %234 = vector.load %arg7[%c0_84, %c0_85] : memref<8x128xf32, #tpu.memory_space<vmem>>, vector<8x128xf32>
      tpu.vector_store %arg7[%c0_84, %c0_85], %222 {strides = array<i32>} : memref<8x128xf32, #tpu.memory_space<vmem>>, vector<8x128xf32>,
      %c0_86 = arith.constant 0 : index
      %c0_87 = arith.constant 0 : index
      %235 = vector.load %arg8[%c0_86, %c0_87] : memref<8x128xf32, #tpu.memory_space<vmem>>, vector<8x128xf32>
      tpu.vector_store %arg8[%c0_86, %c0_87], %225 {strides = array<i32>} : memref<8x128xf32, #tpu.memory_space<vmem>>, vector<8x128xf32>,
    } else {
    }
    %c1_i32 = arith.constant 1 : i32
    %9 = arith.cmpi eq, %arg0, %c1_i32 : i32
    %10 = arith.extui %9 : i1 to i32
    %c0_i32_7 = arith.constant 0 : i32
    %11 = arith.cmpi ne, %10, %c0_i32_7 : i32
    scf.if %11 {
      %c1_i32_10 = arith.constant 1 : i32
      %15 = arith.subi %c1_i32_10, %arg1 : i32
      %c4_i32 = arith.constant 4 : i32
      %16 = arith.muli %15, %c4_i32 : i32
      %c0_11 = arith.constant 0 : index
      %c0_12 = arith.constant 0 : index
      %17 = vector.load %arg7[%c0_11, %c0_12] : memref<8x128xf32, #tpu.memory_space<vmem>>, vector<8x128xf32>
      %c0_13 = arith.constant 0 : index
      %c0_14 = arith.constant 0 : index
      %18 = vector.load %arg8[%c0_13, %c0_14] : memref<8x128xf32, #tpu.memory_space<vmem>>, vector<8x128xf32>
      %c0_15 = arith.constant 0 : index
      %c3 = arith.constant 3 : index
      %c0_16 = arith.constant 0 : index
      %c0_17 = arith.constant 0 : index
      %19 = vector.load %arg2[%c0_15, %c3, %c0_16, %c0_17] : memref<1x4x8x512xbf16, #tpu.memory_space<vmem>>, vector<1x1x8x512xbf16>
      %20 = vector.shape_cast %19 : vector<1x1x8x512xbf16> to vector<8x512xbf16>
      %21 = arith.extf %20 : vector<8x512xbf16> to vector<8x512xf32>
      %22 = arith.truncf %17 : vector<8x128xf32> to vector<8x128xbf16>
      %cst = arith.constant dense<0.000000e+00> : vector<8x512xf32>
      %23 = tpu.matmul %22, %4, %cst {dimension_numbers = #tpu.dot_dimension_numbers<[1], [0], [0], [1], [0, 0, 1, 1], [], []>} : vector<8x128xbf16>, vector<128x512xbf16>, vector<8x512xf32> -> vector<8x512xf32>
      %24 = arith.addf %21, %23 : vector<8x512xf32>
      %25 = vector.extract_strided_slice %24 {offsets = [0, 0], sizes = [8, 128], strides = [1, 1]} : vector<8x512xf32> to vector<8x128xf32>
      %cst_18 = arith.constant 5.000000e-01 : f32
      %26 = vector.broadcast %cst_18 : f32 to vector<8x128xf32>
      %27 = arith.mulf %26, %25 : vector<8x128xf32>
      %28 = math.tanh %27 : vector<8x128xf32>
      %cst_19 = arith.constant 5.000000e-01 : f32
      %29 = vector.broadcast %cst_19 : f32 to vector<8x128xf32>
      %30 = arith.mulf %29, %28 : vector<8x128xf32>
      %cst_20 = arith.constant 5.000000e-01 : f32
      %31 = vector.broadcast %cst_20 : f32 to vector<8x128xf32>
      %32 = arith.addf %30, %31 : vector<8x128xf32>
      %33 = vector.extract_strided_slice %24 {offsets = [0, 128], sizes = [8, 128], strides = [1, 1]} : vector<8x512xf32> to vector<8x128xf32>
      %cst_21 = arith.constant 5.000000e-01 : f32
      %34 = vector.broadcast %cst_21 : f32 to vector<8x128xf32>
      %35 = arith.mulf %34, %33 : vector<8x128xf32>
      %36 = math.tanh %35 : vector<8x128xf32>
      %cst_22 = arith.constant 5.000000e-01 : f32
      %37 = vector.broadcast %cst_22 : f32 to vector<8x128xf32>
      %38 = arith.mulf %37, %36 : vector<8x128xf32>
      %cst_23 = arith.constant 5.000000e-01 : f32
      %39 = vector.broadcast %cst_23 : f32 to vector<8x128xf32>
      %40 = arith.addf %38, %39 : vector<8x128xf32>
      %41 = vector.extract_strided_slice %24 {offsets = [0, 256], sizes = [8, 128], strides = [1, 1]} : vector<8x512xf32> to vector<8x128xf32>
      %42 = math.tanh %41 : vector<8x128xf32>
      %43 = vector.extract_strided_slice %24 {offsets = [0, 384], sizes = [8, 128], strides = [1, 1]} : vector<8x512xf32> to vector<8x128xf32>
      %cst_24 = arith.constant 5.000000e-01 : f32
      %44 = vector.broadcast %cst_24 : f32 to vector<8x128xf32>
      %45 = arith.mulf %44, %43 : vector<8x128xf32>
      %46 = math.tanh %45 : vector<8x128xf32>
      %cst_25 = arith.constant 5.000000e-01 : f32
      %47 = vector.broadcast %cst_25 : f32 to vector<8x128xf32>
      %48 = arith.mulf %47, %46 : vector<8x128xf32>
      %cst_26 = arith.constant 5.000000e-01 : f32
      %49 = vector.broadcast %cst_26 : f32 to vector<8x128xf32>
      %50 = arith.addf %48, %49 : vector<8x128xf32>
      %51 = arith.mulf %40, %18 : vector<8x128xf32>
      %52 = arith.mulf %32, %42 : vector<8x128xf32>
      %53 = arith.addf %51, %52 : vector<8x128xf32>
      %54 = math.tanh %53 : vector<8x128xf32>
      %55 = arith.mulf %50, %54 : vector<8x128xf32>
      %c3_i32 = arith.constant 3 : i32
      %56 = arith.addi %16, %c3_i32 : i32
      %57 = vector.broadcast %56 : i32 to vector<8x1xi32>
      %58 = arith.cmpi slt, %57, %5 : vector<8x1xi32>
      %59 = vector.shape_cast %58 : vector<8x1xi1> to vector<8x1xi1>
      %60 = vector.broadcast %59 : vector<8x1xi1> to vector<8x128xi1>
      %61 = arith.select %60, %55, %17 : vector<8x128xi1>, vector<8x128xf32>
      %62 = vector.shape_cast %58 : vector<8x1xi1> to vector<8x1xi1>
      %63 = vector.broadcast %62 : vector<8x1xi1> to vector<8x128xi1>
      %64 = arith.select %63, %53, %18 : vector<8x128xi1>, vector<8x128xf32>
      %cst_27 = arith.constant 0.000000e+00 : f32
      %65 = vector.shape_cast %58 : vector<8x1xi1> to vector<8x1xi1>
      %66 = vector.broadcast %65 : vector<8x1xi1> to vector<8x128xi1>
      %67 = vector.broadcast %cst_27 : f32 to vector<8x128xf32>
      %68 = arith.select %66, %55, %67 : vector<8x128xi1>, vector<8x128xf32>
      %69 = arith.truncf %68 : vector<8x128xf32> to vector<8x128xbf16>
      %c3_28 = arith.constant 3 : index
      %c0_29 = arith.constant 0 : index
      %c0_30 = arith.constant 0 : index
      %70 = vector.load %arg5[%c3_28, %c0_29, %c0_30] : memref<4x8x128xbf16, #tpu.memory_space<vmem>>, vector<1x8x128xbf16>
      %71 = vector.shape_cast %70 : vector<1x8x128xbf16> to vector<8x128xbf16>
      %72 = vector.shape_cast %69 : vector<8x128xbf16> to vector<1x8x128xbf16>
      tpu.vector_store %arg5[%c3_28, %c0_29, %c0_30], %72 {strides = array<i32>} : memref<4x8x128xbf16, #tpu.memory_space<vmem>>, vector<1x8x128xbf16>,
      %c0_31 = arith.constant 0 : index
      %c2 = arith.constant 2 : index
      %c0_32 = arith.constant 0 : index
      %c0_33 = arith.constant 0 : index
      %73 = vector.load %arg2[%c0_31, %c2, %c0_32, %c0_33] : memref<1x4x8x512xbf16, #tpu.memory_space<vmem>>, vector<1x1x8x512xbf16>
      %74 = vector.shape_cast %73 : vector<1x1x8x512xbf16> to vector<8x512xbf16>
      %75 = arith.extf %74 : vector<8x512xbf16> to vector<8x512xf32>
      %76 = arith.truncf %61 : vector<8x128xf32> to vector<8x128xbf16>
      %cst_34 = arith.constant dense<0.000000e+00> : vector<8x512xf32>
      %77 = tpu.matmul %76, %4, %cst_34 {dimension_numbers = #tpu.dot_dimension_numbers<[1], [0], [0], [1], [0, 0, 1, 1], [], []>} : vector<8x128xbf16>, vector<128x512xbf16>, vector<8x512xf32> -> vector<8x512xf32>
      %78 = arith.addf %75, %77 : vector<8x512xf32>
      %79 = vector.extract_strided_slice %78 {offsets = [0, 0], sizes = [8, 128], strides = [1, 1]} : vector<8x512xf32> to vector<8x128xf32>
      %cst_35 = arith.constant 5.000000e-01 : f32
      %80 = vector.broadcast %cst_35 : f32 to vector<8x128xf32>
      %81 = arith.mulf %80, %79 : vector<8x128xf32>
      %82 = math.tanh %81 : vector<8x128xf32>
      %cst_36 = arith.constant 5.000000e-01 : f32
      %83 = vector.broadcast %cst_36 : f32 to vector<8x128xf32>
      %84 = arith.mulf %83, %82 : vector<8x128xf32>
      %cst_37 = arith.constant 5.000000e-01 : f32
      %85 = vector.broadcast %cst_37 : f32 to vector<8x128xf32>
      %86 = arith.addf %84, %85 : vector<8x128xf32>
      %87 = vector.extract_strided_slice %78 {offsets = [0, 128], sizes = [8, 128], strides = [1, 1]} : vector<8x512xf32> to vector<8x128xf32>
      %cst_38 = arith.constant 5.000000e-01 : f32
      %88 = vector.broadcast %cst_38 : f32 to vector<8x128xf32>
      %89 = arith.mulf %88, %87 : vector<8x128xf32>
      %90 = math.tanh %89 : vector<8x128xf32>
      %cst_39 = arith.constant 5.000000e-01 : f32
      %91 = vector.broadcast %cst_39 : f32 to vector<8x128xf32>
      %92 = arith.mulf %91, %90 : vector<8x128xf32>
      %cst_40 = arith.constant 5.000000e-01 : f32
      %93 = vector.broadcast %cst_40 : f32 to vector<8x128xf32>
      %94 = arith.addf %92, %93 : vector<8x128xf32>
      %95 = vector.extract_strided_slice %78 {offsets = [0, 256], sizes = [8, 128], strides = [1, 1]} : vector<8x512xf32> to vector<8x128xf32>
      %96 = math.tanh %95 : vector<8x128xf32>
      %97 = vector.extract_strided_slice %78 {offsets = [0, 384], sizes = [8, 128], strides = [1, 1]} : vector<8x512xf32> to vector<8x128xf32>
      %cst_41 = arith.constant 5.000000e-01 : f32
      %98 = vector.broadcast %cst_41 : f32 to vector<8x128xf32>
      %99 = arith.mulf %98, %97 : vector<8x128xf32>
      %100 = math.tanh %99 : vector<8x128xf32>
      %cst_42 = arith.constant 5.000000e-01 : f32
      %101 = vector.broadcast %cst_42 : f32 to vector<8x128xf32>
      %102 = arith.mulf %101, %100 : vector<8x128xf32>
      %cst_43 = arith.constant 5.000000e-01 : f32
      %103 = vector.broadcast %cst_43 : f32 to vector<8x128xf32>
      %104 = arith.addf %102, %103 : vector<8x128xf32>
      %105 = arith.mulf %94, %64 : vector<8x128xf32>
      %106 = arith.mulf %86, %96 : vector<8x128xf32>
      %107 = arith.addf %105, %106 : vector<8x128xf32>
      %108 = math.tanh %107 : vector<8x128xf32>
      %109 = arith.mulf %104, %108 : vector<8x128xf32>
      %c2_i32 = arith.constant 2 : i32
      %110 = arith.addi %16, %c2_i32 : i32
      %111 = vector.broadcast %110 : i32 to vector<8x1xi32>
      %112 = arith.cmpi slt, %111, %5 : vector<8x1xi32>
      %113 = vector.shape_cast %112 : vector<8x1xi1> to vector<8x1xi1>
      %114 = vector.broadcast %113 : vector<8x1xi1> to vector<8x128xi1>
      %115 = arith.select %114, %109, %61 : vector<8x128xi1>, vector<8x128xf32>
      %116 = vector.shape_cast %112 : vector<8x1xi1> to vector<8x1xi1>
      %117 = vector.broadcast %116 : vector<8x1xi1> to vector<8x128xi1>
      %118 = arith.select %117, %107, %64 : vector<8x128xi1>, vector<8x128xf32>
      %cst_44 = arith.constant 0.000000e+00 : f32
      %119 = vector.shape_cast %112 : vector<8x1xi1> to vector<8x1xi1>
      %120 = vector.broadcast %119 : vector<8x1xi1> to vector<8x128xi1>
      %121 = vector.broadcast %cst_44 : f32 to vector<8x128xf32>
      %122 = arith.select %120, %109, %121 : vector<8x128xi1>, vector<8x128xf32>
      %123 = arith.truncf %122 : vector<8x128xf32> to vector<8x128xbf16>
      %c2_45 = arith.constant 2 : index
      %c0_46 = arith.constant 0 : index
      %c0_47 = arith.constant 0 : index
      %124 = vector.load %arg5[%c2_45, %c0_46, %c0_47] : memref<4x8x128xbf16, #tpu.memory_space<vmem>>, vector<1x8x128xbf16>
      %125 = vector.shape_cast %124 : vector<1x8x128xbf16> to vector<8x128xbf16>
      %126 = vector.shape_cast %123 : vector<8x128xbf16> to vector<1x8x128xbf16>
      tpu.vector_store %arg5[%c2_45, %c0_46, %c0_47], %126 {strides = array<i32>} : memref<4x8x128xbf16, #tpu.memory_space<vmem>>, vector<1x8x128xbf16>,
      %c0_48 = arith.constant 0 : index
      %c1 = arith.constant 1 : index
      %c0_49 = arith.constant 0 : index
      %c0_50 = arith.constant 0 : index
      %127 = vector.load %arg2[%c0_48, %c1, %c0_49, %c0_50] : memref<1x4x8x512xbf16, #tpu.memory_space<vmem>>, vector<1x1x8x512xbf16>
      %128 = vector.shape_cast %127 : vector<1x1x8x512xbf16> to vector<8x512xbf16>
      %129 = arith.extf %128 : vector<8x512xbf16> to vector<8x512xf32>
      %130 = arith.truncf %115 : vector<8x128xf32> to vector<8x128xbf16>
      %cst_51 = arith.constant dense<0.000000e+00> : vector<8x512xf32>
      %131 = tpu.matmul %130, %4, %cst_51 {dimension_numbers = #tpu.dot_dimension_numbers<[1], [0], [0], [1], [0, 0, 1, 1], [], []>} : vector<8x128xbf16>, vector<128x512xbf16>, vector<8x512xf32> -> vector<8x512xf32>
      %132 = arith.addf %129, %131 : vector<8x512xf32>
      %133 = vector.extract_strided_slice %132 {offsets = [0, 0], sizes = [8, 128], strides = [1, 1]} : vector<8x512xf32> to vector<8x128xf32>
      %cst_52 = arith.constant 5.000000e-01 : f32
      %134 = vector.broadcast %cst_52 : f32 to vector<8x128xf32>
      %135 = arith.mulf %134, %133 : vector<8x128xf32>
      %136 = math.tanh %135 : vector<8x128xf32>
      %cst_53 = arith.constant 5.000000e-01 : f32
      %137 = vector.broadcast %cst_53 : f32 to vector<8x128xf32>
      %138 = arith.mulf %137, %136 : vector<8x128xf32>
      %cst_54 = arith.constant 5.000000e-01 : f32
      %139 = vector.broadcast %cst_54 : f32 to vector<8x128xf32>
      %140 = arith.addf %138, %139 : vector<8x128xf32>
      %141 = vector.extract_strided_slice %132 {offsets = [0, 128], sizes = [8, 128], strides = [1, 1]} : vector<8x512xf32> to vector<8x128xf32>
      %cst_55 = arith.constant 5.000000e-01 : f32
      %142 = vector.broadcast %cst_55 : f32 to vector<8x128xf32>
      %143 = arith.mulf %142, %141 : vector<8x128xf32>
      %144 = math.tanh %143 : vector<8x128xf32>
      %cst_56 = arith.constant 5.000000e-01 : f32
      %145 = vector.broadcast %cst_56 : f32 to vector<8x128xf32>
      %146 = arith.mulf %145, %144 : vector<8x128xf32>
      %cst_57 = arith.constant 5.000000e-01 : f32
      %147 = vector.broadcast %cst_57 : f32 to vector<8x128xf32>
      %148 = arith.addf %146, %147 : vector<8x128xf32>
      %149 = vector.extract_strided_slice %132 {offsets = [0, 256], sizes = [8, 128], strides = [1, 1]} : vector<8x512xf32> to vector<8x128xf32>
      %150 = math.tanh %149 : vector<8x128xf32>
      %151 = vector.extract_strided_slice %132 {offsets = [0, 384], sizes = [8, 128], strides = [1, 1]} : vector<8x512xf32> to vector<8x128xf32>
      %cst_58 = arith.constant 5.000000e-01 : f32
      %152 = vector.broadcast %cst_58 : f32 to vector<8x128xf32>
      %153 = arith.mulf %152, %151 : vector<8x128xf32>
      %154 = math.tanh %153 : vector<8x128xf32>
      %cst_59 = arith.constant 5.000000e-01 : f32
      %155 = vector.broadcast %cst_59 : f32 to vector<8x128xf32>
      %156 = arith.mulf %155, %154 : vector<8x128xf32>
      %cst_60 = arith.constant 5.000000e-01 : f32
      %157 = vector.broadcast %cst_60 : f32 to vector<8x128xf32>
      %158 = arith.addf %156, %157 : vector<8x128xf32>
      %159 = arith.mulf %148, %118 : vector<8x128xf32>
      %160 = arith.mulf %140, %150 : vector<8x128xf32>
      %161 = arith.addf %159, %160 : vector<8x128xf32>
      %162 = math.tanh %161 : vector<8x128xf32>
      %163 = arith.mulf %158, %162 : vector<8x128xf32>
      %c1_i32_61 = arith.constant 1 : i32
      %164 = arith.addi %16, %c1_i32_61 : i32
      %165 = vector.broadcast %164 : i32 to vector<8x1xi32>
      %166 = arith.cmpi slt, %165, %5 : vector<8x1xi32>
      %167 = vector.shape_cast %166 : vector<8x1xi1> to vector<8x1xi1>
      %168 = vector.broadcast %167 : vector<8x1xi1> to vector<8x128xi1>
      %169 = arith.select %168, %163, %115 : vector<8x128xi1>, vector<8x128xf32>
      %170 = vector.shape_cast %166 : vector<8x1xi1> to vector<8x1xi1>
      %171 = vector.broadcast %170 : vector<8x1xi1> to vector<8x128xi1>
      %172 = arith.select %171, %161, %118 : vector<8x128xi1>, vector<8x128xf32>
      %cst_62 = arith.constant 0.000000e+00 : f32
      %173 = vector.shape_cast %166 : vector<8x1xi1> to vector<8x1xi1>
      %174 = vector.broadcast %173 : vector<8x1xi1> to vector<8x128xi1>
      %175 = vector.broadcast %cst_62 : f32 to vector<8x128xf32>
      %176 = arith.select %174, %163, %175 : vector<8x128xi1>, vector<8x128xf32>
      %177 = arith.truncf %176 : vector<8x128xf32> to vector<8x128xbf16>
      %c1_63 = arith.constant 1 : index
      %c0_64 = arith.constant 0 : index
      %c0_65 = arith.constant 0 : index
      %178 = vector.load %arg5[%c1_63, %c0_64, %c0_65] : memref<4x8x128xbf16, #tpu.memory_space<vmem>>, vector<1x8x128xbf16>
      %179 = vector.shape_cast %178 : vector<1x8x128xbf16> to vector<8x128xbf16>
      %180 = vector.shape_cast %177 : vector<8x128xbf16> to vector<1x8x128xbf16>
      tpu.vector_store %arg5[%c1_63, %c0_64, %c0_65], %180 {strides = array<i32>} : memref<4x8x128xbf16, #tpu.memory_space<vmem>>, vector<1x8x128xbf16>,
      %c0_66 = arith.constant 0 : index
      %c0_67 = arith.constant 0 : index
      %c0_68 = arith.constant 0 : index
      %c0_69 = arith.constant 0 : index
      %181 = vector.load %arg2[%c0_66, %c0_67, %c0_68, %c0_69] : memref<1x4x8x512xbf16, #tpu.memory_space<vmem>>, vector<1x1x8x512xbf16>
      %182 = vector.shape_cast %181 : vector<1x1x8x512xbf16> to vector<8x512xbf16>
      %183 = arith.extf %182 : vector<8x512xbf16> to vector<8x512xf32>
      %184 = arith.truncf %169 : vector<8x128xf32> to vector<8x128xbf16>
      %cst_70 = arith.constant dense<0.000000e+00> : vector<8x512xf32>
      %185 = tpu.matmul %184, %4, %cst_70 {dimension_numbers = #tpu.dot_dimension_numbers<[1], [0], [0], [1], [0, 0, 1, 1], [], []>} : vector<8x128xbf16>, vector<128x512xbf16>, vector<8x512xf32> -> vector<8x512xf32>
      %186 = arith.addf %183, %185 : vector<8x512xf32>
      %187 = vector.extract_strided_slice %186 {offsets = [0, 0], sizes = [8, 128], strides = [1, 1]} : vector<8x512xf32> to vector<8x128xf32>
      %cst_71 = arith.constant 5.000000e-01 : f32
      %188 = vector.broadcast %cst_71 : f32 to vector<8x128xf32>
      %189 = arith.mulf %188, %187 : vector<8x128xf32>
      %190 = math.tanh %189 : vector<8x128xf32>
      %cst_72 = arith.constant 5.000000e-01 : f32
      %191 = vector.broadcast %cst_72 : f32 to vector<8x128xf32>
      %192 = arith.mulf %191, %190 : vector<8x128xf32>
      %cst_73 = arith.constant 5.000000e-01 : f32
      %193 = vector.broadcast %cst_73 : f32 to vector<8x128xf32>
      %194 = arith.addf %192, %193 : vector<8x128xf32>
      %195 = vector.extract_strided_slice %186 {offsets = [0, 128], sizes = [8, 128], strides = [1, 1]} : vector<8x512xf32> to vector<8x128xf32>
      %cst_74 = arith.constant 5.000000e-01 : f32
      %196 = vector.broadcast %cst_74 : f32 to vector<8x128xf32>
      %197 = arith.mulf %196, %195 : vector<8x128xf32>
      %198 = math.tanh %197 : vector<8x128xf32>
      %cst_75 = arith.constant 5.000000e-01 : f32
      %199 = vector.broadcast %cst_75 : f32 to vector<8x128xf32>
      %200 = arith.mulf %199, %198 : vector<8x128xf32>
      %cst_76 = arith.constant 5.000000e-01 : f32
      %201 = vector.broadcast %cst_76 : f32 to vector<8x128xf32>
      %202 = arith.addf %200, %201 : vector<8x128xf32>
      %203 = vector.extract_strided_slice %186 {offsets = [0, 256], sizes = [8, 128], strides = [1, 1]} : vector<8x512xf32> to vector<8x128xf32>
      %204 = math.tanh %203 : vector<8x128xf32>
      %205 = vector.extract_strided_slice %186 {offsets = [0, 384], sizes = [8, 128], strides = [1, 1]} : vector<8x512xf32> to vector<8x128xf32>
      %cst_77 = arith.constant 5.000000e-01 : f32
      %206 = vector.broadcast %cst_77 : f32 to vector<8x128xf32>
      %207 = arith.mulf %206, %205 : vector<8x128xf32>
      %208 = math.tanh %207 : vector<8x128xf32>
      %cst_78 = arith.constant 5.000000e-01 : f32
      %209 = vector.broadcast %cst_78 : f32 to vector<8x128xf32>
      %210 = arith.mulf %209, %208 : vector<8x128xf32>
      %cst_79 = arith.constant 5.000000e-01 : f32
      %211 = vector.broadcast %cst_79 : f32 to vector<8x128xf32>
      %212 = arith.addf %210, %211 : vector<8x128xf32>
      %213 = arith.mulf %202, %172 : vector<8x128xf32>
      %214 = arith.mulf %194, %204 : vector<8x128xf32>
      %215 = arith.addf %213, %214 : vector<8x128xf32>
      %216 = math.tanh %215 : vector<8x128xf32>
      %217 = arith.mulf %212, %216 : vector<8x128xf32>
      %c0_i32_80 = arith.constant 0 : i32
      %218 = arith.addi %16, %c0_i32_80 : i32
      %219 = vector.broadcast %218 : i32 to vector<8x1xi32>
      %220 = arith.cmpi slt, %219, %5 : vector<8x1xi32>
      %221 = vector.shape_cast %220 : vector<8x1xi1> to vector<8x1xi1>
      %222 = vector.broadcast %221 : vector<8x1xi1> to vector<8x128xi1>
      %223 = arith.select %222, %217, %169 : vector<8x128xi1>, vector<8x128xf32>
      %224 = vector.shape_cast %220 : vector<8x1xi1> to vector<8x1xi1>
      %225 = vector.broadcast %224 : vector<8x1xi1> to vector<8x128xi1>
      %226 = arith.select %225, %215, %172 : vector<8x128xi1>, vector<8x128xf32>
      %cst_81 = arith.constant 0.000000e+00 : f32
      %227 = vector.shape_cast %220 : vector<8x1xi1> to vector<8x1xi1>
      %228 = vector.broadcast %227 : vector<8x1xi1> to vector<8x128xi1>
      %229 = vector.broadcast %cst_81 : f32 to vector<8x128xf32>
      %230 = arith.select %228, %217, %229 : vector<8x128xi1>, vector<8x128xf32>
      %231 = arith.truncf %230 : vector<8x128xf32> to vector<8x128xbf16>
      %c0_82 = arith.constant 0 : index
      %c0_83 = arith.constant 0 : index
      %c0_84 = arith.constant 0 : index
      %232 = vector.load %arg5[%c0_82, %c0_83, %c0_84] : memref<4x8x128xbf16, #tpu.memory_space<vmem>>, vector<1x8x128xbf16>
      %233 = vector.shape_cast %232 : vector<1x8x128xbf16> to vector<8x128xbf16>
      %234 = vector.shape_cast %231 : vector<8x128xbf16> to vector<1x8x128xbf16>
      tpu.vector_store %arg5[%c0_82, %c0_83, %c0_84], %234 {strides = array<i32>} : memref<4x8x128xbf16, #tpu.memory_space<vmem>>, vector<1x8x128xbf16>,
      %c0_85 = arith.constant 0 : index
      %c0_86 = arith.constant 0 : index
      %235 = vector.load %arg7[%c0_85, %c0_86] : memref<8x128xf32, #tpu.memory_space<vmem>>, vector<8x128xf32>
      tpu.vector_store %arg7[%c0_85, %c0_86], %223 {strides = array<i32>} : memref<8x128xf32, #tpu.memory_space<vmem>>, vector<8x128xf32>,
      %c0_87 = arith.constant 0 : index
      %c0_88 = arith.constant 0 : index
      %236 = vector.load %arg8[%c0_87, %c0_88] : memref<8x128xf32, #tpu.memory_space<vmem>>, vector<8x128xf32>
      tpu.vector_store %arg8[%c0_87, %c0_88], %226 {strides = array<i32>} : memref<8x128xf32, #tpu.memory_space<vmem>>, vector<8x128xf32>,
    } else {
    }
    %c1_i32_8 = arith.constant 1 : i32
    %12 = arith.cmpi eq, %arg1, %c1_i32_8 : i32
    %13 = arith.extui %12 : i1 to i32
    %c0_i32_9 = arith.constant 0 : i32
    %14 = arith.cmpi ne, %13, %c0_i32_9 : i32
    scf.if %14 {
      %c0_10 = arith.constant 0 : index
      %c0_11 = arith.constant 0 : index
      %15 = vector.load %arg7[%c0_10, %c0_11] : memref<8x128xf32, #tpu.memory_space<vmem>>, vector<8x128xf32>
      %c0_12 = arith.constant 0 : index
      %c0_13 = arith.constant 0 : index
      %c0_14 = arith.constant 0 : index
      %16 = vector.load %arg6[%c0_12, %c0_13, %c0_14] : memref<1x8x128xf32, #tpu.memory_space<vmem>>, vector<1x8x128xf32>
      %17 = vector.shape_cast %16 : vector<1x8x128xf32> to vector<8x128xf32>
      %18 = vector.shape_cast %15 : vector<8x128xf32> to vector<1x8x128xf32>
      tpu.vector_store %arg6[%c0_12, %c0_13, %c0_14], %18 {strides = array<i32>} : memref<1x8x128xf32, #tpu.memory_space<vmem>>, vector<1x8x128xf32>,
    } else {
    }
    return
  }
  func.func @transform_0(%arg0: i32, %arg1: i32) -> (i32, i32, i32, i32) {
    %c1_i32 = arith.constant 1 : i32
    %0 = arith.cmpi eq, %arg0, %c1_i32 : i32
    %c1_i32_0 = arith.constant 1 : i32
    %1 = arith.subi %c1_i32_0, %arg1 : i32
    %2 = arith.select %0, %1, %arg1 : i32
    %c0_i32 = arith.constant 0 : i32
    %c0_i32_1 = arith.constant 0 : i32
    %c0_i32_2 = arith.constant 0 : i32
    return %arg0, %2, %c0_i32, %c0_i32_1 : i32, i32, i32, i32
  }
  func.func @transform_1(%arg0: i32, %arg1: i32) -> (i32, i32, i32) {
    %c0_i32 = arith.constant 0 : i32
    %c0_i32_0 = arith.constant 0 : i32
    %c0_i32_1 = arith.constant 0 : i32
    return %arg0, %c0_i32, %c0_i32_0 : i32, i32, i32
  }
  func.func @transform_2(%arg0: i32, %arg1: i32) -> (i32, i32) {
    %c0_i32 = arith.constant 0 : i32
    %c0_i32_0 = arith.constant 0 : i32
    %c0_i32_1 = arith.constant 0 : i32
    return %c0_i32, %c0_i32_0 : i32, i32
  }
  func.func @transform_3(%arg0: i32, %arg1: i32) -> (i32, i32, i32) {
    %c1_i32 = arith.constant 1 : i32
    %0 = arith.cmpi eq, %arg0, %c1_i32 : i32
    %c1_i32_0 = arith.constant 1 : i32
    %1 = arith.subi %c1_i32_0, %arg1 : i32
    %2 = arith.select %0, %1, %arg1 : i32
    %c0_i32 = arith.constant 0 : i32
    %c0_i32_1 = arith.constant 0 : i32
    return %2, %c0_i32, %arg0 : i32, i32, i32
  }
  func.func @transform_4(%arg0: i32, %arg1: i32) -> (i32, i32, i32) {
    %c0_i32 = arith.constant 0 : i32
    %c0_i32_0 = arith.constant 0 : i32
    %c0_i32_1 = arith.constant 0 : i32
    return %arg0, %c0_i32, %c0_i32_0 : i32, i32, i32
  }
}

module attributes {stable_mosaic.version = 11 : i64} {
  func.func @kernel(%arg0: i32, %arg1: i32, %arg2: memref<1x4x8x512xbf16, #tpu.memory_space<vmem>>, %arg3: memref<1x128x512xbf16, #tpu.memory_space<vmem>>, %arg4: memref<8x1xi32, #tpu.memory_space<vmem>>, %arg5: memref<4x8x128xbf16, #tpu.memory_space<vmem>>, %arg6: memref<1x8x128xf32, #tpu.memory_space<vmem>>, %arg7: memref<8x128xf32, #tpu.memory_space<vmem>>, %arg8: memref<8x128xf32, #tpu.memory_space<vmem>>) attributes {dimension_semantics = [#tpu.dimension_semantics<parallel>, #tpu.dimension_semantics<arbitrary>], iteration_bounds = array<i64: 2, 2>, scalar_prefetch = 0 : i64, scratch_operands = 2 : i64, tpu.core_type = #tpu.core_type<tc>, window_params = [{transform_indices = @transform_0, window_bounds = array<i64: 1, 4, 8, 512>}, {transform_indices = @transform_1, window_bounds = array<i64: 1, 128, 512>}, {pipeline_mode = #tpu.pipeline_mode<synchronous>, transform_indices = @transform_2, window_bounds = array<i64: 8, 1>}, {transform_indices = @transform_3, window_bounds = array<i64: 4, 8, 128>}, {transform_indices = @transform_4, window_bounds = array<i64: 1, 8, 128>}]} {
    %c0_i32 = arith.constant 0 : i32
    %0 = arith.cmpi eq, %arg1, %c0_i32 : i32
    %1 = arith.extui %0 : i1 to i32
    %c0_i32_0 = arith.constant 0 : i32
    %2 = arith.cmpi ne, %1, %c0_i32_0 : i32
    scf.if %2 {
      %cst = arith.constant 0.000000e+00 : f32
      %15 = vector.broadcast %cst : f32 to vector<8x128xf32>
      %c0_10 = arith.constant 0 : index
      %c0_11 = arith.constant 0 : index
      %16 = vector.load %arg7[%c0_10, %c0_11] : memref<8x128xf32, #tpu.memory_space<vmem>>, vector<8x128xf32>
      tpu.vector_store %arg7[%c0_10, %c0_11], %15 {strides = array<i32>} : memref<8x128xf32, #tpu.memory_space<vmem>>, vector<8x128xf32>,
      %cst_12 = arith.constant 0.000000e+00 : f32
      %17 = vector.broadcast %cst_12 : f32 to vector<8x128xf32>
      %c0_13 = arith.constant 0 : index
      %c0_14 = arith.constant 0 : index
      %18 = vector.load %arg8[%c0_13, %c0_14] : memref<8x128xf32, #tpu.memory_space<vmem>>, vector<8x128xf32>
      tpu.vector_store %arg8[%c0_13, %c0_14], %17 {strides = array<i32>} : memref<8x128xf32, #tpu.memory_space<vmem>>, vector<8x128xf32>,
    } else {
    }
    %c0 = arith.constant 0 : index
    %c0_1 = arith.constant 0 : index
    %c0_2 = arith.constant 0 : index
    %3 = vector.load %arg3[%c0, %c0_1, %c0_2] : memref<1x128x512xbf16, #tpu.memory_space<vmem>>, vector<1x128x512xbf16>
    %4 = vector.shape_cast %3 : vector<1x128x512xbf16> to vector<128x512xbf16>
    %c0_3 = arith.constant 0 : index
    %c0_4 = arith.constant 0 : index
    %5 = vector.load %arg4[%c0_3, %c0_4] : memref<8x1xi32, #tpu.memory_space<vmem>>, vector<8x1xi32>
    %c0_i32_5 = arith.constant 0 : i32
    %6 = arith.cmpi eq, %arg0, %c0_i32_5 : i32
    %7 = arith.extui %6 : i1 to i32
    %c0_i32_6 = arith.constant 0 : i32
    %8 = arith.cmpi ne, %7, %c0_i32_6 : i32
    scf.if %8 {
      %c4_i32 = arith.constant 4 : i32
      %15 = arith.muli %arg1, %c4_i32 : i32
      %c0_10 = arith.constant 0 : index
      %c0_11 = arith.constant 0 : index
      %16 = vector.load %arg7[%c0_10, %c0_11] : memref<8x128xf32, #tpu.memory_space<vmem>>, vector<8x128xf32>
      %c0_12 = arith.constant 0 : index
      %c0_13 = arith.constant 0 : index
      %17 = vector.load %arg8[%c0_12, %c0_13] : memref<8x128xf32, #tpu.memory_space<vmem>>, vector<8x128xf32>
      %c0_14 = arith.constant 0 : index
      %c0_15 = arith.constant 0 : index
      %c0_16 = arith.constant 0 : index
      %c0_17 = arith.constant 0 : index
      %18 = vector.load %arg2[%c0_14, %c0_15, %c0_16, %c0_17] : memref<1x4x8x512xbf16, #tpu.memory_space<vmem>>, vector<1x1x8x512xbf16>
      %19 = vector.shape_cast %18 : vector<1x1x8x512xbf16> to vector<8x512xbf16>
      %20 = arith.extf %19 : vector<8x512xbf16> to vector<8x512xf32>
      %21 = arith.truncf %16 : vector<8x128xf32> to vector<8x128xbf16>
      %cst = arith.constant dense<0.000000e+00> : vector<8x512xf32>
      %22 = tpu.matmul %21, %4, %cst {dimension_numbers = #tpu.dot_dimension_numbers<[1], [0], [0], [1], [0, 0, 1, 1], [], []>} : vector<8x128xbf16>, vector<128x512xbf16>, vector<8x512xf32> -> vector<8x512xf32>
      %23 = arith.addf %20, %22 : vector<8x512xf32>
      %24 = vector.extract_strided_slice %23 {offsets = [0, 0], sizes = [8, 128], strides = [1, 1]} : vector<8x512xf32> to vector<8x128xf32>
      %cst_18 = arith.constant 5.000000e-01 : f32
      %25 = vector.broadcast %cst_18 : f32 to vector<8x128xf32>
      %26 = arith.mulf %25, %24 : vector<8x128xf32>
      %27 = math.tanh %26 : vector<8x128xf32>
      %cst_19 = arith.constant 5.000000e-01 : f32
      %28 = vector.broadcast %cst_19 : f32 to vector<8x128xf32>
      %29 = arith.mulf %28, %27 : vector<8x128xf32>
      %cst_20 = arith.constant 5.000000e-01 : f32
      %30 = vector.broadcast %cst_20 : f32 to vector<8x128xf32>
      %31 = arith.addf %29, %30 : vector<8x128xf32>
      %32 = vector.extract_strided_slice %23 {offsets = [0, 128], sizes = [8, 128], strides = [1, 1]} : vector<8x512xf32> to vector<8x128xf32>
      %cst_21 = arith.constant 5.000000e-01 : f32
      %33 = vector.broadcast %cst_21 : f32 to vector<8x128xf32>
      %34 = arith.mulf %33, %32 : vector<8x128xf32>
      %35 = math.tanh %34 : vector<8x128xf32>
      %cst_22 = arith.constant 5.000000e-01 : f32
      %36 = vector.broadcast %cst_22 : f32 to vector<8x128xf32>
      %37 = arith.mulf %36, %35 : vector<8x128xf32>
      %cst_23 = arith.constant 5.000000e-01 : f32
      %38 = vector.broadcast %cst_23 : f32 to vector<8x128xf32>
      %39 = arith.addf %37, %38 : vector<8x128xf32>
      %40 = vector.extract_strided_slice %23 {offsets = [0, 256], sizes = [8, 128], strides = [1, 1]} : vector<8x512xf32> to vector<8x128xf32>
      %41 = math.tanh %40 : vector<8x128xf32>
      %42 = vector.extract_strided_slice %23 {offsets = [0, 384], sizes = [8, 128], strides = [1, 1]} : vector<8x512xf32> to vector<8x128xf32>
      %cst_24 = arith.constant 5.000000e-01 : f32
      %43 = vector.broadcast %cst_24 : f32 to vector<8x128xf32>
      %44 = arith.mulf %43, %42 : vector<8x128xf32>
      %45 = math.tanh %44 : vector<8x128xf32>
      %cst_25 = arith.constant 5.000000e-01 : f32
      %46 = vector.broadcast %cst_25 : f32 to vector<8x128xf32>
      %47 = arith.mulf %46, %45 : vector<8x128xf32>
      %cst_26 = arith.constant 5.000000e-01 : f32
      %48 = vector.broadcast %cst_26 : f32 to vector<8x128xf32>
      %49 = arith.addf %47, %48 : vector<8x128xf32>
      %50 = arith.mulf %39, %17 : vector<8x128xf32>
      %51 = arith.mulf %31, %41 : vector<8x128xf32>
      %52 = arith.addf %50, %51 : vector<8x128xf32>
      %53 = math.tanh %52 : vector<8x128xf32>
      %54 = arith.mulf %49, %53 : vector<8x128xf32>
      %c0_i32_27 = arith.constant 0 : i32
      %55 = arith.addi %15, %c0_i32_27 : i32
      %56 = vector.broadcast %55 : i32 to vector<8x1xi32>
      %57 = arith.cmpi slt, %56, %5 : vector<8x1xi32>
      %58 = vector.shape_cast %57 : vector<8x1xi1> to vector<8x1xi1>
      %59 = vector.broadcast %58 : vector<8x1xi1> to vector<8x128xi1>
      %60 = arith.select %59, %54, %16 : vector<8x128xi1>, vector<8x128xf32>
      %61 = vector.shape_cast %57 : vector<8x1xi1> to vector<8x1xi1>
      %62 = vector.broadcast %61 : vector<8x1xi1> to vector<8x128xi1>
      %63 = arith.select %62, %52, %17 : vector<8x128xi1>, vector<8x128xf32>
      %cst_28 = arith.constant 0.000000e+00 : f32
      %64 = vector.shape_cast %57 : vector<8x1xi1> to vector<8x1xi1>
      %65 = vector.broadcast %64 : vector<8x1xi1> to vector<8x128xi1>
      %66 = vector.broadcast %cst_28 : f32 to vector<8x128xf32>
      %67 = arith.select %65, %54, %66 : vector<8x128xi1>, vector<8x128xf32>
      %68 = arith.truncf %67 : vector<8x128xf32> to vector<8x128xbf16>
      %c0_29 = arith.constant 0 : index
      %c0_30 = arith.constant 0 : index
      %c0_31 = arith.constant 0 : index
      %69 = vector.load %arg5[%c0_29, %c0_30, %c0_31] : memref<4x8x128xbf16, #tpu.memory_space<vmem>>, vector<1x8x128xbf16>
      %70 = vector.shape_cast %69 : vector<1x8x128xbf16> to vector<8x128xbf16>
      %71 = vector.shape_cast %68 : vector<8x128xbf16> to vector<1x8x128xbf16>
      tpu.vector_store %arg5[%c0_29, %c0_30, %c0_31], %71 {strides = array<i32>} : memref<4x8x128xbf16, #tpu.memory_space<vmem>>, vector<1x8x128xbf16>,
      %c0_32 = arith.constant 0 : index
      %c1 = arith.constant 1 : index
      %c0_33 = arith.constant 0 : index
      %c0_34 = arith.constant 0 : index
      %72 = vector.load %arg2[%c0_32, %c1, %c0_33, %c0_34] : memref<1x4x8x512xbf16, #tpu.memory_space<vmem>>, vector<1x1x8x512xbf16>
      %73 = vector.shape_cast %72 : vector<1x1x8x512xbf16> to vector<8x512xbf16>
      %74 = arith.extf %73 : vector<8x512xbf16> to vector<8x512xf32>
      %75 = arith.truncf %60 : vector<8x128xf32> to vector<8x128xbf16>
      %cst_35 = arith.constant dense<0.000000e+00> : vector<8x512xf32>
      %76 = tpu.matmul %75, %4, %cst_35 {dimension_numbers = #tpu.dot_dimension_numbers<[1], [0], [0], [1], [0, 0, 1, 1], [], []>} : vector<8x128xbf16>, vector<128x512xbf16>, vector<8x512xf32> -> vector<8x512xf32>
      %77 = arith.addf %74, %76 : vector<8x512xf32>
      %78 = vector.extract_strided_slice %77 {offsets = [0, 0], sizes = [8, 128], strides = [1, 1]} : vector<8x512xf32> to vector<8x128xf32>
      %cst_36 = arith.constant 5.000000e-01 : f32
      %79 = vector.broadcast %cst_36 : f32 to vector<8x128xf32>
      %80 = arith.mulf %79, %78 : vector<8x128xf32>
      %81 = math.tanh %80 : vector<8x128xf32>
      %cst_37 = arith.constant 5.000000e-01 : f32
      %82 = vector.broadcast %cst_37 : f32 to vector<8x128xf32>
      %83 = arith.mulf %82, %81 : vector<8x128xf32>
      %cst_38 = arith.constant 5.000000e-01 : f32
      %84 = vector.broadcast %cst_38 : f32 to vector<8x128xf32>
      %85 = arith.addf %83, %84 : vector<8x128xf32>
      %86 = vector.extract_strided_slice %77 {offsets = [0, 128], sizes = [8, 128], strides = [1, 1]} : vector<8x512xf32> to vector<8x128xf32>
      %cst_39 = arith.constant 5.000000e-01 : f32
      %87 = vector.broadcast %cst_39 : f32 to vector<8x128xf32>
      %88 = arith.mulf %87, %86 : vector<8x128xf32>
      %89 = math.tanh %88 : vector<8x128xf32>
      %cst_40 = arith.constant 5.000000e-01 : f32
      %90 = vector.broadcast %cst_40 : f32 to vector<8x128xf32>
      %91 = arith.mulf %90, %89 : vector<8x128xf32>
      %cst_41 = arith.constant 5.000000e-01 : f32
      %92 = vector.broadcast %cst_41 : f32 to vector<8x128xf32>
      %93 = arith.addf %91, %92 : vector<8x128xf32>
      %94 = vector.extract_strided_slice %77 {offsets = [0, 256], sizes = [8, 128], strides = [1, 1]} : vector<8x512xf32> to vector<8x128xf32>
      %95 = math.tanh %94 : vector<8x128xf32>
      %96 = vector.extract_strided_slice %77 {offsets = [0, 384], sizes = [8, 128], strides = [1, 1]} : vector<8x512xf32> to vector<8x128xf32>
      %cst_42 = arith.constant 5.000000e-01 : f32
      %97 = vector.broadcast %cst_42 : f32 to vector<8x128xf32>
      %98 = arith.mulf %97, %96 : vector<8x128xf32>
      %99 = math.tanh %98 : vector<8x128xf32>
      %cst_43 = arith.constant 5.000000e-01 : f32
      %100 = vector.broadcast %cst_43 : f32 to vector<8x128xf32>
      %101 = arith.mulf %100, %99 : vector<8x128xf32>
      %cst_44 = arith.constant 5.000000e-01 : f32
      %102 = vector.broadcast %cst_44 : f32 to vector<8x128xf32>
      %103 = arith.addf %101, %102 : vector<8x128xf32>
      %104 = arith.mulf %93, %63 : vector<8x128xf32>
      %105 = arith.mulf %85, %95 : vector<8x128xf32>
      %106 = arith.addf %104, %105 : vector<8x128xf32>
      %107 = math.tanh %106 : vector<8x128xf32>
      %108 = arith.mulf %103, %107 : vector<8x128xf32>
      %c1_i32_45 = arith.constant 1 : i32
      %109 = arith.addi %15, %c1_i32_45 : i32
      %110 = vector.broadcast %109 : i32 to vector<8x1xi32>
      %111 = arith.cmpi slt, %110, %5 : vector<8x1xi32>
      %112 = vector.shape_cast %111 : vector<8x1xi1> to vector<8x1xi1>
      %113 = vector.broadcast %112 : vector<8x1xi1> to vector<8x128xi1>
      %114 = arith.select %113, %108, %60 : vector<8x128xi1>, vector<8x128xf32>
      %115 = vector.shape_cast %111 : vector<8x1xi1> to vector<8x1xi1>
      %116 = vector.broadcast %115 : vector<8x1xi1> to vector<8x128xi1>
      %117 = arith.select %116, %106, %63 : vector<8x128xi1>, vector<8x128xf32>
      %cst_46 = arith.constant 0.000000e+00 : f32
      %118 = vector.shape_cast %111 : vector<8x1xi1> to vector<8x1xi1>
      %119 = vector.broadcast %118 : vector<8x1xi1> to vector<8x128xi1>
      %120 = vector.broadcast %cst_46 : f32 to vector<8x128xf32>
      %121 = arith.select %119, %108, %120 : vector<8x128xi1>, vector<8x128xf32>
      %122 = arith.truncf %121 : vector<8x128xf32> to vector<8x128xbf16>
      %c1_47 = arith.constant 1 : index
      %c0_48 = arith.constant 0 : index
      %c0_49 = arith.constant 0 : index
      %123 = vector.load %arg5[%c1_47, %c0_48, %c0_49] : memref<4x8x128xbf16, #tpu.memory_space<vmem>>, vector<1x8x128xbf16>
      %124 = vector.shape_cast %123 : vector<1x8x128xbf16> to vector<8x128xbf16>
      %125 = vector.shape_cast %122 : vector<8x128xbf16> to vector<1x8x128xbf16>
      tpu.vector_store %arg5[%c1_47, %c0_48, %c0_49], %125 {strides = array<i32>} : memref<4x8x128xbf16, #tpu.memory_space<vmem>>, vector<1x8x128xbf16>,
      %c0_50 = arith.constant 0 : index
      %c2 = arith.constant 2 : index
      %c0_51 = arith.constant 0 : index
      %c0_52 = arith.constant 0 : index
      %126 = vector.load %arg2[%c0_50, %c2, %c0_51, %c0_52] : memref<1x4x8x512xbf16, #tpu.memory_space<vmem>>, vector<1x1x8x512xbf16>
      %127 = vector.shape_cast %126 : vector<1x1x8x512xbf16> to vector<8x512xbf16>
      %128 = arith.extf %127 : vector<8x512xbf16> to vector<8x512xf32>
      %129 = arith.truncf %114 : vector<8x128xf32> to vector<8x128xbf16>
      %cst_53 = arith.constant dense<0.000000e+00> : vector<8x512xf32>
      %130 = tpu.matmul %129, %4, %cst_53 {dimension_numbers = #tpu.dot_dimension_numbers<[1], [0], [0], [1], [0, 0, 1, 1], [], []>} : vector<8x128xbf16>, vector<128x512xbf16>, vector<8x512xf32> -> vector<8x512xf32>
      %131 = arith.addf %128, %130 : vector<8x512xf32>
      %132 = vector.extract_strided_slice %131 {offsets = [0, 0], sizes = [8, 128], strides = [1, 1]} : vector<8x512xf32> to vector<8x128xf32>
      %cst_54 = arith.constant 5.000000e-01 : f32
      %133 = vector.broadcast %cst_54 : f32 to vector<8x128xf32>
      %134 = arith.mulf %133, %132 : vector<8x128xf32>
      %135 = math.tanh %134 : vector<8x128xf32>
      %cst_55 = arith.constant 5.000000e-01 : f32
      %136 = vector.broadcast %cst_55 : f32 to vector<8x128xf32>
      %137 = arith.mulf %136, %135 : vector<8x128xf32>
      %cst_56 = arith.constant 5.000000e-01 : f32
      %138 = vector.broadcast %cst_56 : f32 to vector<8x128xf32>
      %139 = arith.addf %137, %138 : vector<8x128xf32>
      %140 = vector.extract_strided_slice %131 {offsets = [0, 128], sizes = [8, 128], strides = [1, 1]} : vector<8x512xf32> to vector<8x128xf32>
      %cst_57 = arith.constant 5.000000e-01 : f32
      %141 = vector.broadcast %cst_57 : f32 to vector<8x128xf32>
      %142 = arith.mulf %141, %140 : vector<8x128xf32>
      %143 = math.tanh %142 : vector<8x128xf32>
      %cst_58 = arith.constant 5.000000e-01 : f32
      %144 = vector.broadcast %cst_58 : f32 to vector<8x128xf32>
      %145 = arith.mulf %144, %143 : vector<8x128xf32>
      %cst_59 = arith.constant 5.000000e-01 : f32
      %146 = vector.broadcast %cst_59 : f32 to vector<8x128xf32>
      %147 = arith.addf %145, %146 : vector<8x128xf32>
      %148 = vector.extract_strided_slice %131 {offsets = [0, 256], sizes = [8, 128], strides = [1, 1]} : vector<8x512xf32> to vector<8x128xf32>
      %149 = math.tanh %148 : vector<8x128xf32>
      %150 = vector.extract_strided_slice %131 {offsets = [0, 384], sizes = [8, 128], strides = [1, 1]} : vector<8x512xf32> to vector<8x128xf32>
      %cst_60 = arith.constant 5.000000e-01 : f32
      %151 = vector.broadcast %cst_60 : f32 to vector<8x128xf32>
      %152 = arith.mulf %151, %150 : vector<8x128xf32>
      %153 = math.tanh %152 : vector<8x128xf32>
      %cst_61 = arith.constant 5.000000e-01 : f32
      %154 = vector.broadcast %cst_61 : f32 to vector<8x128xf32>
      %155 = arith.mulf %154, %153 : vector<8x128xf32>
      %cst_62 = arith.constant 5.000000e-01 : f32
      %156 = vector.broadcast %cst_62 : f32 to vector<8x128xf32>
      %157 = arith.addf %155, %156 : vector<8x128xf32>
      %158 = arith.mulf %147, %117 : vector<8x128xf32>
      %159 = arith.mulf %139, %149 : vector<8x128xf32>
      %160 = arith.addf %158, %159 : vector<8x128xf32>
      %161 = math.tanh %160 : vector<8x128xf32>
      %162 = arith.mulf %157, %161 : vector<8x128xf32>
      %c2_i32 = arith.constant 2 : i32
      %163 = arith.addi %15, %c2_i32 : i32
      %164 = vector.broadcast %163 : i32 to vector<8x1xi32>
      %165 = arith.cmpi slt, %164, %5 : vector<8x1xi32>
      %166 = vector.shape_cast %165 : vector<8x1xi1> to vector<8x1xi1>
      %167 = vector.broadcast %166 : vector<8x1xi1> to vector<8x128xi1>
      %168 = arith.select %167, %162, %114 : vector<8x128xi1>, vector<8x128xf32>
      %169 = vector.shape_cast %165 : vector<8x1xi1> to vector<8x1xi1>
      %170 = vector.broadcast %169 : vector<8x1xi1> to vector<8x128xi1>
      %171 = arith.select %170, %160, %117 : vector<8x128xi1>, vector<8x128xf32>
      %cst_63 = arith.constant 0.000000e+00 : f32
      %172 = vector.shape_cast %165 : vector<8x1xi1> to vector<8x1xi1>
      %173 = vector.broadcast %172 : vector<8x1xi1> to vector<8x128xi1>
      %174 = vector.broadcast %cst_63 : f32 to vector<8x128xf32>
      %175 = arith.select %173, %162, %174 : vector<8x128xi1>, vector<8x128xf32>
      %176 = arith.truncf %175 : vector<8x128xf32> to vector<8x128xbf16>
      %c2_64 = arith.constant 2 : index
      %c0_65 = arith.constant 0 : index
      %c0_66 = arith.constant 0 : index
      %177 = vector.load %arg5[%c2_64, %c0_65, %c0_66] : memref<4x8x128xbf16, #tpu.memory_space<vmem>>, vector<1x8x128xbf16>
      %178 = vector.shape_cast %177 : vector<1x8x128xbf16> to vector<8x128xbf16>
      %179 = vector.shape_cast %176 : vector<8x128xbf16> to vector<1x8x128xbf16>
      tpu.vector_store %arg5[%c2_64, %c0_65, %c0_66], %179 {strides = array<i32>} : memref<4x8x128xbf16, #tpu.memory_space<vmem>>, vector<1x8x128xbf16>,
      %c0_67 = arith.constant 0 : index
      %c3 = arith.constant 3 : index
      %c0_68 = arith.constant 0 : index
      %c0_69 = arith.constant 0 : index
      %180 = vector.load %arg2[%c0_67, %c3, %c0_68, %c0_69] : memref<1x4x8x512xbf16, #tpu.memory_space<vmem>>, vector<1x1x8x512xbf16>
      %181 = vector.shape_cast %180 : vector<1x1x8x512xbf16> to vector<8x512xbf16>
      %182 = arith.extf %181 : vector<8x512xbf16> to vector<8x512xf32>
      %183 = arith.truncf %168 : vector<8x128xf32> to vector<8x128xbf16>
      %cst_70 = arith.constant dense<0.000000e+00> : vector<8x512xf32>
      %184 = tpu.matmul %183, %4, %cst_70 {dimension_numbers = #tpu.dot_dimension_numbers<[1], [0], [0], [1], [0, 0, 1, 1], [], []>} : vector<8x128xbf16>, vector<128x512xbf16>, vector<8x512xf32> -> vector<8x512xf32>
      %185 = arith.addf %182, %184 : vector<8x512xf32>
      %186 = vector.extract_strided_slice %185 {offsets = [0, 0], sizes = [8, 128], strides = [1, 1]} : vector<8x512xf32> to vector<8x128xf32>
      %cst_71 = arith.constant 5.000000e-01 : f32
      %187 = vector.broadcast %cst_71 : f32 to vector<8x128xf32>
      %188 = arith.mulf %187, %186 : vector<8x128xf32>
      %189 = math.tanh %188 : vector<8x128xf32>
      %cst_72 = arith.constant 5.000000e-01 : f32
      %190 = vector.broadcast %cst_72 : f32 to vector<8x128xf32>
      %191 = arith.mulf %190, %189 : vector<8x128xf32>
      %cst_73 = arith.constant 5.000000e-01 : f32
      %192 = vector.broadcast %cst_73 : f32 to vector<8x128xf32>
      %193 = arith.addf %191, %192 : vector<8x128xf32>
      %194 = vector.extract_strided_slice %185 {offsets = [0, 128], sizes = [8, 128], strides = [1, 1]} : vector<8x512xf32> to vector<8x128xf32>
      %cst_74 = arith.constant 5.000000e-01 : f32
      %195 = vector.broadcast %cst_74 : f32 to vector<8x128xf32>
      %196 = arith.mulf %195, %194 : vector<8x128xf32>
      %197 = math.tanh %196 : vector<8x128xf32>
      %cst_75 = arith.constant 5.000000e-01 : f32
      %198 = vector.broadcast %cst_75 : f32 to vector<8x128xf32>
      %199 = arith.mulf %198, %197 : vector<8x128xf32>
      %cst_76 = arith.constant 5.000000e-01 : f32
      %200 = vector.broadcast %cst_76 : f32 to vector<8x128xf32>
      %201 = arith.addf %199, %200 : vector<8x128xf32>
      %202 = vector.extract_strided_slice %185 {offsets = [0, 256], sizes = [8, 128], strides = [1, 1]} : vector<8x512xf32> to vector<8x128xf32>
      %203 = math.tanh %202 : vector<8x128xf32>
      %204 = vector.extract_strided_slice %185 {offsets = [0, 384], sizes = [8, 128], strides = [1, 1]} : vector<8x512xf32> to vector<8x128xf32>
      %cst_77 = arith.constant 5.000000e-01 : f32
      %205 = vector.broadcast %cst_77 : f32 to vector<8x128xf32>
      %206 = arith.mulf %205, %204 : vector<8x128xf32>
      %207 = math.tanh %206 : vector<8x128xf32>
      %cst_78 = arith.constant 5.000000e-01 : f32
      %208 = vector.broadcast %cst_78 : f32 to vector<8x128xf32>
      %209 = arith.mulf %208, %207 : vector<8x128xf32>
      %cst_79 = arith.constant 5.000000e-01 : f32
      %210 = vector.broadcast %cst_79 : f32 to vector<8x128xf32>
      %211 = arith.addf %209, %210 : vector<8x128xf32>
      %212 = arith.mulf %201, %171 : vector<8x128xf32>
      %213 = arith.mulf %193, %203 : vector<8x128xf32>
      %214 = arith.addf %212, %213 : vector<8x128xf32>
      %215 = math.tanh %214 : vector<8x128xf32>
      %216 = arith.mulf %211, %215 : vector<8x128xf32>
      %c3_i32 = arith.constant 3 : i32
      %217 = arith.addi %15, %c3_i32 : i32
      %218 = vector.broadcast %217 : i32 to vector<8x1xi32>
      %219 = arith.cmpi slt, %218, %5 : vector<8x1xi32>
      %220 = vector.shape_cast %219 : vector<8x1xi1> to vector<8x1xi1>
      %221 = vector.broadcast %220 : vector<8x1xi1> to vector<8x128xi1>
      %222 = arith.select %221, %216, %168 : vector<8x128xi1>, vector<8x128xf32>
      %223 = vector.shape_cast %219 : vector<8x1xi1> to vector<8x1xi1>
      %224 = vector.broadcast %223 : vector<8x1xi1> to vector<8x128xi1>
      %225 = arith.select %224, %214, %171 : vector<8x128xi1>, vector<8x128xf32>
      %cst_80 = arith.constant 0.000000e+00 : f32
      %226 = vector.shape_cast %219 : vector<8x1xi1> to vector<8x1xi1>
      %227 = vector.broadcast %226 : vector<8x1xi1> to vector<8x128xi1>
      %228 = vector.broadcast %cst_80 : f32 to vector<8x128xf32>
      %229 = arith.select %227, %216, %228 : vector<8x128xi1>, vector<8x128xf32>
      %230 = arith.truncf %229 : vector<8x128xf32> to vector<8x128xbf16>
      %c3_81 = arith.constant 3 : index
      %c0_82 = arith.constant 0 : index
      %c0_83 = arith.constant 0 : index
      %231 = vector.load %arg5[%c3_81, %c0_82, %c0_83] : memref<4x8x128xbf16, #tpu.memory_space<vmem>>, vector<1x8x128xbf16>
      %232 = vector.shape_cast %231 : vector<1x8x128xbf16> to vector<8x128xbf16>
      %233 = vector.shape_cast %230 : vector<8x128xbf16> to vector<1x8x128xbf16>
      tpu.vector_store %arg5[%c3_81, %c0_82, %c0_83], %233 {strides = array<i32>} : memref<4x8x128xbf16, #tpu.memory_space<vmem>>, vector<1x8x128xbf16>,
      %c0_84 = arith.constant 0 : index
      %c0_85 = arith.constant 0 : index
      %234 = vector.load %arg7[%c0_84, %c0_85] : memref<8x128xf32, #tpu.memory_space<vmem>>, vector<8x128xf32>
      tpu.vector_store %arg7[%c0_84, %c0_85], %222 {strides = array<i32>} : memref<8x128xf32, #tpu.memory_space<vmem>>, vector<8x128xf32>,
      %c0_86 = arith.constant 0 : index
      %c0_87 = arith.constant 0 : index
      %235 = vector.load %arg8[%c0_86, %c0_87] : memref<8x128xf32, #tpu.memory_space<vmem>>, vector<8x128xf32>
      tpu.vector_store %arg8[%c0_86, %c0_87], %225 {strides = array<i32>} : memref<8x128xf32, #tpu.memory_space<vmem>>, vector<8x128xf32>,
    } else {
    }
    %c1_i32 = arith.constant 1 : i32
    %9 = arith.cmpi eq, %arg0, %c1_i32 : i32
    %10 = arith.extui %9 : i1 to i32
    %c0_i32_7 = arith.constant 0 : i32
    %11 = arith.cmpi ne, %10, %c0_i32_7 : i32
    scf.if %11 {
      %c1_i32_10 = arith.constant 1 : i32
      %15 = arith.subi %c1_i32_10, %arg1 : i32
      %c4_i32 = arith.constant 4 : i32
      %16 = arith.muli %15, %c4_i32 : i32
      %c0_11 = arith.constant 0 : index
      %c0_12 = arith.constant 0 : index
      %17 = vector.load %arg7[%c0_11, %c0_12] : memref<8x128xf32, #tpu.memory_space<vmem>>, vector<8x128xf32>
      %c0_13 = arith.constant 0 : index
      %c0_14 = arith.constant 0 : index
      %18 = vector.load %arg8[%c0_13, %c0_14] : memref<8x128xf32, #tpu.memory_space<vmem>>, vector<8x128xf32>
      %c0_15 = arith.constant 0 : index
      %c3 = arith.constant 3 : index
      %c0_16 = arith.constant 0 : index
      %c0_17 = arith.constant 0 : index
      %19 = vector.load %arg2[%c0_15, %c3, %c0_16, %c0_17] : memref<1x4x8x512xbf16, #tpu.memory_space<vmem>>, vector<1x1x8x512xbf16>
      %20 = vector.shape_cast %19 : vector<1x1x8x512xbf16> to vector<8x512xbf16>
      %21 = arith.extf %20 : vector<8x512xbf16> to vector<8x512xf32>
      %22 = arith.truncf %17 : vector<8x128xf32> to vector<8x128xbf16>
      %cst = arith.constant dense<0.000000e+00> : vector<8x512xf32>
      %23 = tpu.matmul %22, %4, %cst {dimension_numbers = #tpu.dot_dimension_numbers<[1], [0], [0], [1], [0, 0, 1, 1], [], []>} : vector<8x128xbf16>, vector<128x512xbf16>, vector<8x512xf32> -> vector<8x512xf32>
      %24 = arith.addf %21, %23 : vector<8x512xf32>
      %25 = vector.extract_strided_slice %24 {offsets = [0, 0], sizes = [8, 128], strides = [1, 1]} : vector<8x512xf32> to vector<8x128xf32>
      %cst_18 = arith.constant 5.000000e-01 : f32
      %26 = vector.broadcast %cst_18 : f32 to vector<8x128xf32>
      %27 = arith.mulf %26, %25 : vector<8x128xf32>
      %28 = math.tanh %27 : vector<8x128xf32>
      %cst_19 = arith.constant 5.000000e-01 : f32
      %29 = vector.broadcast %cst_19 : f32 to vector<8x128xf32>
      %30 = arith.mulf %29, %28 : vector<8x128xf32>
      %cst_20 = arith.constant 5.000000e-01 : f32
      %31 = vector.broadcast %cst_20 : f32 to vector<8x128xf32>
      %32 = arith.addf %30, %31 : vector<8x128xf32>
      %33 = vector.extract_strided_slice %24 {offsets = [0, 128], sizes = [8, 128], strides = [1, 1]} : vector<8x512xf32> to vector<8x128xf32>
      %cst_21 = arith.constant 5.000000e-01 : f32
      %34 = vector.broadcast %cst_21 : f32 to vector<8x128xf32>
      %35 = arith.mulf %34, %33 : vector<8x128xf32>
      %36 = math.tanh %35 : vector<8x128xf32>
      %cst_22 = arith.constant 5.000000e-01 : f32
      %37 = vector.broadcast %cst_22 : f32 to vector<8x128xf32>
      %38 = arith.mulf %37, %36 : vector<8x128xf32>
      %cst_23 = arith.constant 5.000000e-01 : f32
      %39 = vector.broadcast %cst_23 : f32 to vector<8x128xf32>
      %40 = arith.addf %38, %39 : vector<8x128xf32>
      %41 = vector.extract_strided_slice %24 {offsets = [0, 256], sizes = [8, 128], strides = [1, 1]} : vector<8x512xf32> to vector<8x128xf32>
      %42 = math.tanh %41 : vector<8x128xf32>
      %43 = vector.extract_strided_slice %24 {offsets = [0, 384], sizes = [8, 128], strides = [1, 1]} : vector<8x512xf32> to vector<8x128xf32>
      %cst_24 = arith.constant 5.000000e-01 : f32
      %44 = vector.broadcast %cst_24 : f32 to vector<8x128xf32>
      %45 = arith.mulf %44, %43 : vector<8x128xf32>
      %46 = math.tanh %45 : vector<8x128xf32>
      %cst_25 = arith.constant 5.000000e-01 : f32
      %47 = vector.broadcast %cst_25 : f32 to vector<8x128xf32>
      %48 = arith.mulf %47, %46 : vector<8x128xf32>
      %cst_26 = arith.constant 5.000000e-01 : f32
      %49 = vector.broadcast %cst_26 : f32 to vector<8x128xf32>
      %50 = arith.addf %48, %49 : vector<8x128xf32>
      %51 = arith.mulf %40, %18 : vector<8x128xf32>
      %52 = arith.mulf %32, %42 : vector<8x128xf32>
      %53 = arith.addf %51, %52 : vector<8x128xf32>
      %54 = math.tanh %53 : vector<8x128xf32>
      %55 = arith.mulf %50, %54 : vector<8x128xf32>
      %c3_i32 = arith.constant 3 : i32
      %56 = arith.addi %16, %c3_i32 : i32
      %57 = vector.broadcast %56 : i32 to vector<8x1xi32>
      %58 = arith.cmpi slt, %57, %5 : vector<8x1xi32>
      %59 = vector.shape_cast %58 : vector<8x1xi1> to vector<8x1xi1>
      %60 = vector.broadcast %59 : vector<8x1xi1> to vector<8x128xi1>
      %61 = arith.select %60, %55, %17 : vector<8x128xi1>, vector<8x128xf32>
      %62 = vector.shape_cast %58 : vector<8x1xi1> to vector<8x1xi1>
      %63 = vector.broadcast %62 : vector<8x1xi1> to vector<8x128xi1>
      %64 = arith.select %63, %53, %18 : vector<8x128xi1>, vector<8x128xf32>
      %cst_27 = arith.constant 0.000000e+00 : f32
      %65 = vector.shape_cast %58 : vector<8x1xi1> to vector<8x1xi1>
      %66 = vector.broadcast %65 : vector<8x1xi1> to vector<8x128xi1>
      %67 = vector.broadcast %cst_27 : f32 to vector<8x128xf32>
      %68 = arith.select %66, %55, %67 : vector<8x128xi1>, vector<8x128xf32>
      %69 = arith.truncf %68 : vector<8x128xf32> to vector<8x128xbf16>
      %c3_28 = arith.constant 3 : index
      %c0_29 = arith.constant 0 : index
      %c0_30 = arith.constant 0 : index
      %70 = vector.load %arg5[%c3_28, %c0_29, %c0_30] : memref<4x8x128xbf16, #tpu.memory_space<vmem>>, vector<1x8x128xbf16>
      %71 = vector.shape_cast %70 : vector<1x8x128xbf16> to vector<8x128xbf16>
      %72 = vector.shape_cast %69 : vector<8x128xbf16> to vector<1x8x128xbf16>
      tpu.vector_store %arg5[%c3_28, %c0_29, %c0_30], %72 {strides = array<i32>} : memref<4x8x128xbf16, #tpu.memory_space<vmem>>, vector<1x8x128xbf16>,
      %c0_31 = arith.constant 0 : index
      %c2 = arith.constant 2 : index
      %c0_32 = arith.constant 0 : index
      %c0_33 = arith.constant 0 : index
      %73 = vector.load %arg2[%c0_31, %c2, %c0_32, %c0_33] : memref<1x4x8x512xbf16, #tpu.memory_space<vmem>>, vector<1x1x8x512xbf16>
      %74 = vector.shape_cast %73 : vector<1x1x8x512xbf16> to vector<8x512xbf16>
      %75 = arith.extf %74 : vector<8x512xbf16> to vector<8x512xf32>
      %76 = arith.truncf %61 : vector<8x128xf32> to vector<8x128xbf16>
      %cst_34 = arith.constant dense<0.000000e+00> : vector<8x512xf32>
      %77 = tpu.matmul %76, %4, %cst_34 {dimension_numbers = #tpu.dot_dimension_numbers<[1], [0], [0], [1], [0, 0, 1, 1], [], []>} : vector<8x128xbf16>, vector<128x512xbf16>, vector<8x512xf32> -> vector<8x512xf32>
      %78 = arith.addf %75, %77 : vector<8x512xf32>
      %79 = vector.extract_strided_slice %78 {offsets = [0, 0], sizes = [8, 128], strides = [1, 1]} : vector<8x512xf32> to vector<8x128xf32>
      %cst_35 = arith.constant 5.000000e-01 : f32
      %80 = vector.broadcast %cst_35 : f32 to vector<8x128xf32>
      %81 = arith.mulf %80, %79 : vector<8x128xf32>
      %82 = math.tanh %81 : vector<8x128xf32>
      %cst_36 = arith.constant 5.000000e-01 : f32
      %83 = vector.broadcast %cst_36 : f32 to vector<8x128xf32>
      %84 = arith.mulf %83, %82 : vector<8x128xf32>
      %cst_37 = arith.constant 5.000000e-01 : f32
      %85 = vector.broadcast %cst_37 : f32 to vector<8x128xf32>
      %86 = arith.addf %84, %85 : vector<8x128xf32>
      %87 = vector.extract_strided_slice %78 {offsets = [0, 128], sizes = [8, 128], strides = [1, 1]} : vector<8x512xf32> to vector<8x128xf32>
      %cst_38 = arith.constant 5.000000e-01 : f32
      %88 = vector.broadcast %cst_38 : f32 to vector<8x128xf32>
      %89 = arith.mulf %88, %87 : vector<8x128xf32>
      %90 = math.tanh %89 : vector<8x128xf32>
      %cst_39 = arith.constant 5.000000e-01 : f32
      %91 = vector.broadcast %cst_39 : f32 to vector<8x128xf32>
      %92 = arith.mulf %91, %90 : vector<8x128xf32>
      %cst_40 = arith.constant 5.000000e-01 : f32
      %93 = vector.broadcast %cst_40 : f32 to vector<8x128xf32>
      %94 = arith.addf %92, %93 : vector<8x128xf32>
      %95 = vector.extract_strided_slice %78 {offsets = [0, 256], sizes = [8, 128], strides = [1, 1]} : vector<8x512xf32> to vector<8x128xf32>
      %96 = math.tanh %95 : vector<8x128xf32>
      %97 = vector.extract_strided_slice %78 {offsets = [0, 384], sizes = [8, 128], strides = [1, 1]} : vector<8x512xf32> to vector<8x128xf32>
      %cst_41 = arith.constant 5.000000e-01 : f32
      %98 = vector.broadcast %cst_41 : f32 to vector<8x128xf32>
      %99 = arith.mulf %98, %97 : vector<8x128xf32>
      %100 = math.tanh %99 : vector<8x128xf32>
      %cst_42 = arith.constant 5.000000e-01 : f32
      %101 = vector.broadcast %cst_42 : f32 to vector<8x128xf32>
      %102 = arith.mulf %101, %100 : vector<8x128xf32>
      %cst_43 = arith.constant 5.000000e-01 : f32
      %103 = vector.broadcast %cst_43 : f32 to vector<8x128xf32>
      %104 = arith.addf %102, %103 : vector<8x128xf32>
      %105 = arith.mulf %94, %64 : vector<8x128xf32>
      %106 = arith.mulf %86, %96 : vector<8x128xf32>
      %107 = arith.addf %105, %106 : vector<8x128xf32>
      %108 = math.tanh %107 : vector<8x128xf32>
      %109 = arith.mulf %104, %108 : vector<8x128xf32>
      %c2_i32 = arith.constant 2 : i32
      %110 = arith.addi %16, %c2_i32 : i32
      %111 = vector.broadcast %110 : i32 to vector<8x1xi32>
      %112 = arith.cmpi slt, %111, %5 : vector<8x1xi32>
      %113 = vector.shape_cast %112 : vector<8x1xi1> to vector<8x1xi1>
      %114 = vector.broadcast %113 : vector<8x1xi1> to vector<8x128xi1>
      %115 = arith.select %114, %109, %61 : vector<8x128xi1>, vector<8x128xf32>
      %116 = vector.shape_cast %112 : vector<8x1xi1> to vector<8x1xi1>
      %117 = vector.broadcast %116 : vector<8x1xi1> to vector<8x128xi1>
      %118 = arith.select %117, %107, %64 : vector<8x128xi1>, vector<8x128xf32>
      %cst_44 = arith.constant 0.000000e+00 : f32
      %119 = vector.shape_cast %112 : vector<8x1xi1> to vector<8x1xi1>
      %120 = vector.broadcast %119 : vector<8x1xi1> to vector<8x128xi1>
      %121 = vector.broadcast %cst_44 : f32 to vector<8x128xf32>
      %122 = arith.select %120, %109, %121 : vector<8x128xi1>, vector<8x128xf32>
      %123 = arith.truncf %122 : vector<8x128xf32> to vector<8x128xbf16>
      %c2_45 = arith.constant 2 : index
      %c0_46 = arith.constant 0 : index
      %c0_47 = arith.constant 0 : index
      %124 = vector.load %arg5[%c2_45, %c0_46, %c0_47] : memref<4x8x128xbf16, #tpu.memory_space<vmem>>, vector<1x8x128xbf16>
      %125 = vector.shape_cast %124 : vector<1x8x128xbf16> to vector<8x128xbf16>
      %126 = vector.shape_cast %123 : vector<8x128xbf16> to vector<1x8x128xbf16>
      tpu.vector_store %arg5[%c2_45, %c0_46, %c0_47], %126 {strides = array<i32>} : memref<4x8x128xbf16, #tpu.memory_space<vmem>>, vector<1x8x128xbf16>,
      %c0_48 = arith.constant 0 : index
      %c1 = arith.constant 1 : index
      %c0_49 = arith.constant 0 : index
      %c0_50 = arith.constant 0 : index
      %127 = vector.load %arg2[%c0_48, %c1, %c0_49, %c0_50] : memref<1x4x8x512xbf16, #tpu.memory_space<vmem>>, vector<1x1x8x512xbf16>
      %128 = vector.shape_cast %127 : vector<1x1x8x512xbf16> to vector<8x512xbf16>
      %129 = arith.extf %128 : vector<8x512xbf16> to vector<8x512xf32>
      %130 = arith.truncf %115 : vector<8x128xf32> to vector<8x128xbf16>
      %cst_51 = arith.constant dense<0.000000e+00> : vector<8x512xf32>
      %131 = tpu.matmul %130, %4, %cst_51 {dimension_numbers = #tpu.dot_dimension_numbers<[1], [0], [0], [1], [0, 0, 1, 1], [], []>} : vector<8x128xbf16>, vector<128x512xbf16>, vector<8x512xf32> -> vector<8x512xf32>
      %132 = arith.addf %129, %131 : vector<8x512xf32>
      %133 = vector.extract_strided_slice %132 {offsets = [0, 0], sizes = [8, 128], strides = [1, 1]} : vector<8x512xf32> to vector<8x128xf32>
      %cst_52 = arith.constant 5.000000e-01 : f32
      %134 = vector.broadcast %cst_52 : f32 to vector<8x128xf32>
      %135 = arith.mulf %134, %133 : vector<8x128xf32>
      %136 = math.tanh %135 : vector<8x128xf32>
      %cst_53 = arith.constant 5.000000e-01 : f32
      %137 = vector.broadcast %cst_53 : f32 to vector<8x128xf32>
      %138 = arith.mulf %137, %136 : vector<8x128xf32>
      %cst_54 = arith.constant 5.000000e-01 : f32
      %139 = vector.broadcast %cst_54 : f32 to vector<8x128xf32>
      %140 = arith.addf %138, %139 : vector<8x128xf32>
      %141 = vector.extract_strided_slice %132 {offsets = [0, 128], sizes = [8, 128], strides = [1, 1]} : vector<8x512xf32> to vector<8x128xf32>
      %cst_55 = arith.constant 5.000000e-01 : f32
      %142 = vector.broadcast %cst_55 : f32 to vector<8x128xf32>
      %143 = arith.mulf %142, %141 : vector<8x128xf32>
      %144 = math.tanh %143 : vector<8x128xf32>
      %cst_56 = arith.constant 5.000000e-01 : f32
      %145 = vector.broadcast %cst_56 : f32 to vector<8x128xf32>
      %146 = arith.mulf %145, %144 : vector<8x128xf32>
      %cst_57 = arith.constant 5.000000e-01 : f32
      %147 = vector.broadcast %cst_57 : f32 to vector<8x128xf32>
      %148 = arith.addf %146, %147 : vector<8x128xf32>
      %149 = vector.extract_strided_slice %132 {offsets = [0, 256], sizes = [8, 128], strides = [1, 1]} : vector<8x512xf32> to vector<8x128xf32>
      %150 = math.tanh %149 : vector<8x128xf32>
      %151 = vector.extract_strided_slice %132 {offsets = [0, 384], sizes = [8, 128], strides = [1, 1]} : vector<8x512xf32> to vector<8x128xf32>
      %cst_58 = arith.constant 5.000000e-01 : f32
      %152 = vector.broadcast %cst_58 : f32 to vector<8x128xf32>
      %153 = arith.mulf %152, %151 : vector<8x128xf32>
      %154 = math.tanh %153 : vector<8x128xf32>
      %cst_59 = arith.constant 5.000000e-01 : f32
      %155 = vector.broadcast %cst_59 : f32 to vector<8x128xf32>
      %156 = arith.mulf %155, %154 : vector<8x128xf32>
      %cst_60 = arith.constant 5.000000e-01 : f32
      %157 = vector.broadcast %cst_60 : f32 to vector<8x128xf32>
      %158 = arith.addf %156, %157 : vector<8x128xf32>
      %159 = arith.mulf %148, %118 : vector<8x128xf32>
      %160 = arith.mulf %140, %150 : vector<8x128xf32>
      %161 = arith.addf %159, %160 : vector<8x128xf32>
      %162 = math.tanh %161 : vector<8x128xf32>
      %163 = arith.mulf %158, %162 : vector<8x128xf32>
      %c1_i32_61 = arith.constant 1 : i32
      %164 = arith.addi %16, %c1_i32_61 : i32
      %165 = vector.broadcast %164 : i32 to vector<8x1xi32>
      %166 = arith.cmpi slt, %165, %5 : vector<8x1xi32>
      %167 = vector.shape_cast %166 : vector<8x1xi1> to vector<8x1xi1>
      %168 = vector.broadcast %167 : vector<8x1xi1> to vector<8x128xi1>
      %169 = arith.select %168, %163, %115 : vector<8x128xi1>, vector<8x128xf32>
      %170 = vector.shape_cast %166 : vector<8x1xi1> to vector<8x1xi1>
      %171 = vector.broadcast %170 : vector<8x1xi1> to vector<8x128xi1>
      %172 = arith.select %171, %161, %118 : vector<8x128xi1>, vector<8x128xf32>
      %cst_62 = arith.constant 0.000000e+00 : f32
      %173 = vector.shape_cast %166 : vector<8x1xi1> to vector<8x1xi1>
      %174 = vector.broadcast %173 : vector<8x1xi1> to vector<8x128xi1>
      %175 = vector.broadcast %cst_62 : f32 to vector<8x128xf32>
      %176 = arith.select %174, %163, %175 : vector<8x128xi1>, vector<8x128xf32>
      %177 = arith.truncf %176 : vector<8x128xf32> to vector<8x128xbf16>
      %c1_63 = arith.constant 1 : index
      %c0_64 = arith.constant 0 : index
      %c0_65 = arith.constant 0 : index
      %178 = vector.load %arg5[%c1_63, %c0_64, %c0_65] : memref<4x8x128xbf16, #tpu.memory_space<vmem>>, vector<1x8x128xbf16>
      %179 = vector.shape_cast %178 : vector<1x8x128xbf16> to vector<8x128xbf16>
      %180 = vector.shape_cast %177 : vector<8x128xbf16> to vector<1x8x128xbf16>
      tpu.vector_store %arg5[%c1_63, %c0_64, %c0_65], %180 {strides = array<i32>} : memref<4x8x128xbf16, #tpu.memory_space<vmem>>, vector<1x8x128xbf16>,
      %c0_66 = arith.constant 0 : index
      %c0_67 = arith.constant 0 : index
      %c0_68 = arith.constant 0 : index
      %c0_69 = arith.constant 0 : index
      %181 = vector.load %arg2[%c0_66, %c0_67, %c0_68, %c0_69] : memref<1x4x8x512xbf16, #tpu.memory_space<vmem>>, vector<1x1x8x512xbf16>
      %182 = vector.shape_cast %181 : vector<1x1x8x512xbf16> to vector<8x512xbf16>
      %183 = arith.extf %182 : vector<8x512xbf16> to vector<8x512xf32>
      %184 = arith.truncf %169 : vector<8x128xf32> to vector<8x128xbf16>
      %cst_70 = arith.constant dense<0.000000e+00> : vector<8x512xf32>
      %185 = tpu.matmul %184, %4, %cst_70 {dimension_numbers = #tpu.dot_dimension_numbers<[1], [0], [0], [1], [0, 0, 1, 1], [], []>} : vector<8x128xbf16>, vector<128x512xbf16>, vector<8x512xf32> -> vector<8x512xf32>
      %186 = arith.addf %183, %185 : vector<8x512xf32>
      %187 = vector.extract_strided_slice %186 {offsets = [0, 0], sizes = [8, 128], strides = [1, 1]} : vector<8x512xf32> to vector<8x128xf32>
      %cst_71 = arith.constant 5.000000e-01 : f32
      %188 = vector.broadcast %cst_71 : f32 to vector<8x128xf32>
      %189 = arith.mulf %188, %187 : vector<8x128xf32>
      %190 = math.tanh %189 : vector<8x128xf32>
      %cst_72 = arith.constant 5.000000e-01 : f32
      %191 = vector.broadcast %cst_72 : f32 to vector<8x128xf32>
      %192 = arith.mulf %191, %190 : vector<8x128xf32>
      %cst_73 = arith.constant 5.000000e-01 : f32
      %193 = vector.broadcast %cst_73 : f32 to vector<8x128xf32>
      %194 = arith.addf %192, %193 : vector<8x128xf32>
      %195 = vector.extract_strided_slice %186 {offsets = [0, 128], sizes = [8, 128], strides = [1, 1]} : vector<8x512xf32> to vector<8x128xf32>
      %cst_74 = arith.constant 5.000000e-01 : f32
      %196 = vector.broadcast %cst_74 : f32 to vector<8x128xf32>
      %197 = arith.mulf %196, %195 : vector<8x128xf32>
      %198 = math.tanh %197 : vector<8x128xf32>
      %cst_75 = arith.constant 5.000000e-01 : f32
      %199 = vector.broadcast %cst_75 : f32 to vector<8x128xf32>
      %200 = arith.mulf %199, %198 : vector<8x128xf32>
      %cst_76 = arith.constant 5.000000e-01 : f32
      %201 = vector.broadcast %cst_76 : f32 to vector<8x128xf32>
      %202 = arith.addf %200, %201 : vector<8x128xf32>
      %203 = vector.extract_strided_slice %186 {offsets = [0, 256], sizes = [8, 128], strides = [1, 1]} : vector<8x512xf32> to vector<8x128xf32>
      %204 = math.tanh %203 : vector<8x128xf32>
      %205 = vector.extract_strided_slice %186 {offsets = [0, 384], sizes = [8, 128], strides = [1, 1]} : vector<8x512xf32> to vector<8x128xf32>
      %cst_77 = arith.constant 5.000000e-01 : f32
      %206 = vector.broadcast %cst_77 : f32 to vector<8x128xf32>
      %207 = arith.mulf %206, %205 : vector<8x128xf32>
      %208 = math.tanh %207 : vector<8x128xf32>
      %cst_78 = arith.constant 5.000000e-01 : f32
      %209 = vector.broadcast %cst_78 : f32 to vector<8x128xf32>
      %210 = arith.mulf %209, %208 : vector<8x128xf32>
      %cst_79 = arith.constant 5.000000e-01 : f32
      %211 = vector.broadcast %cst_79 : f32 to vector<8x128xf32>
      %212 = arith.addf %210, %211 : vector<8x128xf32>
      %213 = arith.mulf %202, %172 : vector<8x128xf32>
      %214 = arith.mulf %194, %204 : vector<8x128xf32>
      %215 = arith.addf %213, %214 : vector<8x128xf32>
      %216 = math.tanh %215 : vector<8x128xf32>
      %217 = arith.mulf %212, %216 : vector<8x128xf32>
      %c0_i32_80 = arith.constant 0 : i32
      %218 = arith.addi %16, %c0_i32_80 : i32
      %219 = vector.broadcast %218 : i32 to vector<8x1xi32>
      %220 = arith.cmpi slt, %219, %5 : vector<8x1xi32>
      %221 = vector.shape_cast %220 : vector<8x1xi1> to vector<8x1xi1>
      %222 = vector.broadcast %221 : vector<8x1xi1> to vector<8x128xi1>
      %223 = arith.select %222, %217, %169 : vector<8x128xi1>, vector<8x128xf32>
      %224 = vector.shape_cast %220 : vector<8x1xi1> to vector<8x1xi1>
      %225 = vector.broadcast %224 : vector<8x1xi1> to vector<8x128xi1>
      %226 = arith.select %225, %215, %172 : vector<8x128xi1>, vector<8x128xf32>
      %cst_81 = arith.constant 0.000000e+00 : f32
      %227 = vector.shape_cast %220 : vector<8x1xi1> to vector<8x1xi1>
      %228 = vector.broadcast %227 : vector<8x1xi1> to vector<8x128xi1>
      %229 = vector.broadcast %cst_81 : f32 to vector<8x128xf32>
      %230 = arith.select %228, %217, %229 : vector<8x128xi1>, vector<8x128xf32>
      %231 = arith.truncf %230 : vector<8x128xf32> to vector<8x128xbf16>
      %c0_82 = arith.constant 0 : index
      %c0_83 = arith.constant 0 : index
      %c0_84 = arith.constant 0 : index
      %232 = vector.load %arg5[%c0_82, %c0_83, %c0_84] : memref<4x8x128xbf16, #tpu.memory_space<vmem>>, vector<1x8x128xbf16>
      %233 = vector.shape_cast %232 : vector<1x8x128xbf16> to vector<8x128xbf16>
      %234 = vector.shape_cast %231 : vector<8x128xbf16> to vector<1x8x128xbf16>
      tpu.vector_store %arg5[%c0_82, %c0_83, %c0_84], %234 {strides = array<i32>} : memref<4x8x128xbf16, #tpu.memory_space<vmem>>, vector<1x8x128xbf16>,
      %c0_85 = arith.constant 0 : index
      %c0_86 = arith.constant 0 : index
      %235 = vector.load %arg7[%c0_85, %c0_86] : memref<8x128xf32, #tpu.memory_space<vmem>>, vector<8x128xf32>
      tpu.vector_store %arg7[%c0_85, %c0_86], %223 {strides = array<i32>} : memref<8x128xf32, #tpu.memory_space<vmem>>, vector<8x128xf32>,
      %c0_87 = arith.constant 0 : index
      %c0_88 = arith.constant 0 : index
      %236 = vector.load %arg8[%c0_87, %c0_88] : memref<8x128xf32, #tpu.memory_space<vmem>>, vector<8x128xf32>
      tpu.vector_store %arg8[%c0_87, %c0_88], %226 {strides = array<i32>} : memref<8x128xf32, #tpu.memory_space<vmem>>, vector<8x128xf32>,
    } else {
    }
    %c1_i32_8 = arith.constant 1 : i32
    %12 = arith.cmpi eq, %arg1, %c1_i32_8 : i32
    %13 = arith.extui %12 : i1 to i32
    %c0_i32_9 = arith.constant 0 : i32
    %14 = arith.cmpi ne, %13, %c0_i32_9 : i32
    scf.if %14 {
      %c0_10 = arith.constant 0 : index
      %c0_11 = arith.constant 0 : index
      %15 = vector.load %arg7[%c0_10, %c0_11] : memref<8x128xf32, #tpu.memory_space<vmem>>, vector<8x128xf32>
      %c0_12 = arith.constant 0 : index
      %c0_13 = arith.constant 0 : index
      %c0_14 = arith.constant 0 : index
      %16 = vector.load %arg6[%c0_12, %c0_13, %c0_14] : memref<1x8x128xf32, #tpu.memory_space<vmem>>, vector<1x8x128xf32>
      %17 = vector.shape_cast %16 : vector<1x8x128xf32> to vector<8x128xf32>
      %18 = vector.shape_cast %15 : vector<8x128xf32> to vector<1x8x128xf32>
      tpu.vector_store %arg6[%c0_12, %c0_13, %c0_14], %18 {strides = array<i32>} : memref<1x8x128xf32, #tpu.memory_space<vmem>>, vector<1x8x128xf32>,
    } else {
    }
    return
  }
  func.func @transform_0(%arg0: i32, %arg1: i32) -> (i32, i32, i32, i32) {
    %c1_i32 = arith.constant 1 : i32
    %0 = arith.cmpi eq, %arg0, %c1_i32 : i32
    %c1_i32_0 = arith.constant 1 : i32
    %1 = arith.subi %c1_i32_0, %arg1 : i32
    %2 = arith.select %0, %1, %arg1 : i32
    %c0_i32 = arith.constant 0 : i32
    %c0_i32_1 = arith.constant 0 : i32
    %c0_i32_2 = arith.constant 0 : i32
    return %arg0, %2, %c0_i32, %c0_i32_1 : i32, i32, i32, i32
  }
  func.func @transform_1(%arg0: i32, %arg1: i32) -> (i32, i32, i32) {
    %c0_i32 = arith.constant 0 : i32
    %c0_i32_0 = arith.constant 0 : i32
    %c0_i32_1 = arith.constant 0 : i32
    return %arg0, %c0_i32, %c0_i32_0 : i32, i32, i32
  }
  func.func @transform_2(%arg0: i32, %arg1: i32) -> (i32, i32) {
    %c0_i32 = arith.constant 0 : i32
    %c0_i32_0 = arith.constant 0 : i32
    %c0_i32_1 = arith.constant 0 : i32
    return %c0_i32, %c0_i32_0 : i32, i32
  }
  func.func @transform_3(%arg0: i32, %arg1: i32) -> (i32, i32, i32) {
    %c1_i32 = arith.constant 1 : i32
    %0 = arith.cmpi eq, %arg0, %c1_i32 : i32
    %c1_i32_0 = arith.constant 1 : i32
    %1 = arith.subi %c1_i32_0, %arg1 : i32
    %2 = arith.select %0, %1, %arg1 : i32
    %c0_i32 = arith.constant 0 : i32
    %c0_i32_1 = arith.constant 0 : i32
    return %2, %c0_i32, %arg0 : i32, i32, i32
  }
  func.func @transform_4(%arg0: i32, %arg1: i32) -> (i32, i32, i32) {
    %c0_i32 = arith.constant 0 : i32
    %c0_i32_0 = arith.constant 0 : i32
    %c0_i32_1 = arith.constant 0 : i32
    return %arg0, %c0_i32, %c0_i32_0 : i32, i32, i32
  }
}

</mosaic_0001>

<llo_original>
// kernel: tpu_custom_call.1
$region0: #{tpu_custom_call.1}
  #allocation0 [shape = 'u32[]', space=smem, size = 0x4, offset = 0x4, fixed_abs, tag = 'smem constant byte address 0x4 - core index']
  #allocation1 [shape = 'u32[144,128]{1,0:T(1,128)}', space=vmem, size = 0x12000, scoped, tag = 'internal scratch']
  #allocation2 [shape = 'f32[8,128]{1,0:T(8,128)}', space=vmem, size = 0x1000, scoped, tag = 'scratch operand']
  #allocation3 [shape = 'f32[8,128]{1,0:T(8,128)}', space=vmem, size = 0x1000, scoped, tag = 'scratch operand']
  %s0 = inlined_call_operand.hbm [shape: bf16[2,8,8,512], index: 0, kind: input, shape index: {}]
  %s1 = inlined_call_operand.hbm [shape: bf16[2,128,512], index: 1, kind: input, shape index: {}]
  %s2 = inlined_call_operand.vmem [shape: s32[8,1], index: 2, kind: input, shape index: {}]
  %s3 = inlined_call_operand.hbm [shape: bf16[8,8,256], index: 3, kind: output, shape index: {0}]
  %s4 = inlined_call_operand.hbm [shape: f32[2,8,128], index: 4, kind: output, shape index: {1}]
  %5 = xla_tuple %s3, %s4
  %s6 = sld [smem:[#allocation0]]
  $region77: #{tpu_custom_call.1} parent=0
    _
  %s8 = ssub.s32 1, %s6
  %s9 = scalar_select 0, %s8, %s6
  $region1: #{tpu_custom_call.1} parent=0
    #allocation4 [shape = 'u8[65536]{0}', space=vmem, size = 0x10000, scoped, tag = 'input window, operand 0']
    #allocation5 [shape = 's32[2]{0}', space=sflag, size = 0x8, scoped, tag = 'scoped memory for tpu_custom_call.1']
    #allocation6 [shape = 's32[2]{0}', space=sflag, size = 0x8, scoped, tag = 'scoped memory for tpu_custom_call.1']
    #allocation7 [shape = 'u8[131072]{0}', space=vmem, size = 0x20000, scoped, tag = 'input window, operand 1, single buffered']
    #allocation8 [shape = 's32[1]{0}', space=sflag, size = 0x4, scoped, tag = 'scoped memory for tpu_custom_call.1']
    #allocation9 [shape = 'u8[16384]{0}', space=vmem, size = 0x4000, scoped, tag = 'output window, operand 0']
    #allocation10 [shape = 'u8[8192]{0}', space=vmem, size = 0x2000, scoped, tag = 'output window, operand 1']
    #allocation11 [shape = 's32[2]{0}', space=sflag, size = 0x8, scoped, tag = 'scoped memory for tpu_custom_call.1']
    %10 = vsyncpa [#allocation5], 0
    %s11 = scalar_lea.sflag [#allocation5], 1
    %12 = vsyncpa %s11, 0
    %13 = vsyncpa [#allocation8], 0
    %14 = vsyncpa [#allocation6], 0
    %s15 = scalar_lea.sflag [#allocation6], 1
    %16 = vsyncpa %s15, 0
    %17 = vsyncpa [#allocation11], 0
    %s18 = scalar_lea.sflag [#allocation11], 1
    %19 = vsyncpa %s18, 0
    loop: start=0, step=1, limit=6
    $region2: #{tpu_custom_call.1} parent=1 // loop_pre_header
      _
    $region3: #{tpu_custom_call.1} parent=1 // loop_header
      %s21 = sphi 0, %s25
      %p22 = scmp.ge.s32.totalorder %s21, 6
      %s28 = sphi 0, %s40
      %s29 = sphi 0, %s36
      %s30 = sphi 0, %s28
      %s31 = sphi 0, %s29
      %s32 = sphi 0, %s30
      %s33 = sphi 0, %s31
      %s51 = sphi 0, %s53
      %s54 = sphi 0, %s51
      %s55 = sphi 0, %s54
      %s71 = sphi 0, %s55
      %s77 = sphi 0, %s79
      %s80 = sphi 0, %s77
      %s81 = sphi 0, %s80
      %s97 = sphi 0, %s81
      %s101 = sphi 0, %s101
      %s103 = sphi 0, %s101
      %s104 = sphi 0, %s103
      %s118 = sphi 0, %s104
      %s132 = sphi 0, %s134
      %s135 = sphi 0, %s132
      %s136 = sphi 0, %s135
      %s152 = sphi 0, %s136
      %s158 = sphi 0, %s160
      %s161 = sphi 0, %s158
      %s162 = sphi 0, %s161
      %s178 = sphi 0, %s162
    $region4: #{tpu_custom_call.1} parent=1 // loop_header_branch
      %24 = sbr.rel (%p22) target = $region8
    $region5: #{tpu_custom_call.1} parent=1 // loop_body
      %s26 = ssub.s32 %s21, 1
      %s27 = ssub.s32 %s21, 2
      %s34 = sadd.s32 1, %s29
      %p35 = scmp.ge.s32.totalorder %s34, 2
      %s36 = scalar_select %p35, 0, %s34
      %s37 = sadd.s32 1, %s28
      %s38 = scalar_select %p35, %s37, %s28
      %p39 = scmp.ge.s32.totalorder %s38, 2
      %s40 = scalar_select %p39, 0, %s38
      %p41 = scmp.eq.s32.totalorder %s28, 1
      %s42 = ssub.s32 1, %s29
      %s43 = scalar_select %p41, %s42, %s29
      %p44 = scmp.eq.s32.totalorder %s40, 1
      %s45 = ssub.s32 1, %s36
      %s46 = scalar_select %p44, %s45, %s36
      %s47 = ssub.s32 %s28, %s40
      %s48 = ssub.s32 %s43, %s46
      %s49 = sor.u32 %s47, %s48
      %p50 = scmp.eq.s32.totalorder %s49, 0
      %s52 = sadd.s32 %s51, 1
      %s53 = scalar_select %p50, %s51, %s52
      %p56 = pneg %p50
      %p57 = scmp.eq.s32.totalorder %s21, 3
      %p58 = por %p56, %p57
      %p59 = scmp.ne.s32.totalorder %s51, %s54
      %p60 = scmp.eq.s32.totalorder %s21, 0
      %p61 = por %p59, %p60
      %p62 = scmp.ne.s32.totalorder %s51, %s54
      %p63 = scmp.eq.s32.totalorder %s26, 3
      %p64 = por %p62, %p63
      %p65 = scmp.ne.s32.totalorder %s54, %s55
      %p66 = scmp.eq.s32.totalorder %s26, 0
      %p67 = por %p65, %p66
      %p68 = scmp.ne.s32.totalorder %s54, %s55
      %p69 = scmp.eq.s32.totalorder %s27, 3
      %p70 = por %p68, %p69
      %p72 = scmp.ne.s32.totalorder %s55, %s71
      %p73 = scmp.eq.s32.totalorder %s27, 0
      %p74 = por %p72, %p73
      %s75 = ssub.s32 %s28, %s40
      %p76 = scmp.eq.s32.totalorder %s75, 0
      %s78 = sadd.s32 %s77, 1
      %s79 = scalar_select %p76, %s77, %s78
      %p82 = pneg %p76
      %p83 = scmp.eq.s32.totalorder %s21, 3
      %p84 = por %p82, %p83
      %p85 = scmp.ne.s32.totalorder %s77, %s80
      %p86 = scmp.eq.s32.totalorder %s21, 0
      %p87 = por %p85, %p86
      %p88 = scmp.ne.s32.totalorder %s77, %s80
      %p89 = scmp.eq.s32.totalorder %s26, 3
      %p90 = por %p88, %p89
      %p91 = scmp.ne.s32.totalorder %s80, %s81
      %p92 = scmp.eq.s32.totalorder %s26, 0
      %p93 = por %p91, %p92
      %p94 = scmp.ne.s32.totalorder %s80, %s81
      %p95 = scmp.eq.s32.totalorder %s27, 3
      %p96 = por %p94, %p95
      %p98 = scmp.ne.s32.totalorder %s81, %s97
      %p99 = scmp.eq.s32.totalorder %s27, 0
      %p100 = por %p98, %p99
      %s102 = sadd.s32 %s101, 1
      %p105 = scmp.eq.s32.totalorder %s21, 3
      %p106 = scmp.ne.s32.totalorder %s101, %s103
      %p107 = scmp.eq.s32.totalorder %s21, 0
      %p108 = por %p106, %p107
      %p109 = scmp.ne.s32.totalorder %s101, %s103
      %p110 = scmp.eq.s32.totalorder %s26, 3
      %p111 = por %p109, %p110
      %p112 = scmp.ne.s32.totalorder %s103, %s104
      %p113 = scmp.eq.s32.totalorder %s26, 0
      %p114 = por %p112, %p113
      %p115 = scmp.ne.s32.totalorder %s103, %s104
      %p116 = scmp.eq.s32.totalorder %s27, 3
      %p117 = por %p115, %p116
      %p119 = scmp.ne.s32.totalorder %s104, %s118
      %p120 = scmp.eq.s32.totalorder %s27, 0
      %p121 = por %p119, %p120
      %p122 = scmp.eq.s32.totalorder %s28, 1
      %s123 = ssub.s32 1, %s29
      %s124 = scalar_select %p122, %s123, %s29
      %p125 = scmp.eq.s32.totalorder %s40, 1
      %s126 = ssub.s32 1, %s36
      %s127 = scalar_select %p125, %s126, %s36
      %s128 = ssub.s32 %s124, %s127
      %s129 = ssub.s32 %s28, %s40
      %s130 = sor.u32 %s128, %s129
      %p131 = scmp.eq.s32.totalorder %s130, 0
      %s133 = sadd.s32 %s132, 1
      %s134 = scalar_select %p131, %s132, %s133
      %p137 = pneg %p131
      %p138 = scmp.eq.s32.totalorder %s21, 3
      %p139 = por %p137, %p138
      %p140 = scmp.ne.s32.totalorder %s132, %s135
      %p141 = scmp.eq.s32.totalorder %s21, 0
      %p142 = por %p140, %p141
      %p143 = scmp.ne.s32.totalorder %s132, %s135
      %p144 = scmp.eq.s32.totalorder %s26, 3
      %p145 = por %p143, %p144
      %p146 = scmp.ne.s32.totalorder %s135, %s136
      %p147 = scmp.eq.s32.totalorder %s26, 0
      %p148 = por %p146, %p147
      %p149 = scmp.ne.s32.totalorder %s135, %s136
      %p150 = scmp.eq.s32.totalorder %s27, 3
      %p151 = por %p149, %p150
      %p153 = scmp.ne.s32.totalorder %s136, %s152
      %p154 = scmp.eq.s32.totalorder %s27, 0
      %p155 = por %p153, %p154
      %s156 = ssub.s32 %s28, %s40
      %p157 = scmp.eq.s32.totalorder %s156, 0
      %s159 = sadd.s32 %s158, 1
      %s160 = scalar_select %p157, %s158, %s159
      %p163 = pneg %p157
      %p164 = scmp.eq.s32.totalorder %s21, 3
      %p165 = por %p163, %p164
      %p166 = scmp.ne.s32.totalorder %s158, %s161
      %p167 = scmp.eq.s32.totalorder %s21, 0
      %p168 = por %p166, %p167
      %p169 = scmp.ne.s32.totalorder %s158, %s161
      %p170 = scmp.eq.s32.totalorder %s26, 3
      %p171 = por %p169, %p170
      %p172 = scmp.ne.s32.totalorder %s161, %s162
      %p173 = scmp.eq.s32.totalorder %s26, 0
      %p174 = por %p172, %p173
      %p175 = scmp.ne.s32.totalorder %s161, %s162
      %p176 = scmp.eq.s32.totalorder %s27, 3
      %p177 = por %p175, %p176
      %p179 = scmp.ne.s32.totalorder %s162, %s178
      %p180 = scmp.eq.s32.totalorder %s27, 0
      %p181 = por %p179, %p180
      %p182 = scmp.le.s32.totalorder 1, %s21
      %p183 = scmp.lt.s32.totalorder %s21, 5
      %p184 = pnand %p182, %p183
      %p185 = pneg %p184
      // Predicated region
      $region9: #{tpu_custom_call.1} parent=5 // pred_check
        _
      $region10: #{tpu_custom_call.1} parent=5 // pred_check_branch
        %187 = sbr.rel (%p184) target = $region12
      $region11: #{tpu_custom_call.1} parent=5 // pred_region
        %s188 = ssub.s32 %s21, 1
        // Predicated region
        $region13: #{tpu_custom_call.1} parent=11 // pred_check
          %p189 = pneg %p93
        $region14: #{tpu_custom_call.1} parent=11 // pred_check_branch
          %191 = sbr.rel (%p189) target = $region16
        $region15: #{tpu_custom_call.1} parent=11 // pred_region
          %s193 = ssub.s32 4096, 4096
          %194 = vsyncadd [#allocation8], %s193
          %s195 = smul.addr %s30, 64
          %s196 = smul.addr %s195, 64
          %s197 = scalar_lea.hbm %s1, %s196
          %s198 = sshll.u32 [#allocation7], 4
          %s199 = int_to_ptr.vmem [resolvable:$true] %s198
          %204 = dma.hbm_to_vmem [thread:$0]  %s197, 4096, %s199, [#allocation8], 256, 256, 16
        $region16: #{tpu_custom_call.1} parent=11 // pred_fallthru
          _
        // Predicated region
        $region17: #{tpu_custom_call.1} parent=11 // pred_check
          %p205 = pneg %p114
        $region18: #{tpu_custom_call.1} parent=11 // pred_check_branch
          %207 = sbr.rel (%p205) target = $region20
        $region19: #{tpu_custom_call.1} parent=11 // pred_region
          _
        $region20: #{tpu_custom_call.1} parent=11 // pred_fallthru
          _
      $region12: #{tpu_custom_call.1} parent=5 // pred_fallthru
        _
      %p208 = scmp.lt.s32.totalorder %s21, 4
      // Predicated region
      $region21: #{tpu_custom_call.1} parent=5 // pred_check
        %p209 = pneg %p208
      $region22: #{tpu_custom_call.1} parent=5 // pred_check_branch
        %211 = sbr.rel (%p209) target = $region24
      $region23: #{tpu_custom_call.1} parent=5 // pred_region
        // Predicated region
        $region25: #{tpu_custom_call.1} parent=23 // pred_check
          %p212 = pneg %p61
        $region26: #{tpu_custom_call.1} parent=23 // pred_check_branch
          %214 = sbr.rel (%p212) target = $region28
        $region27: #{tpu_custom_call.1} parent=23 // pred_region
          %s215 = sand.u32 %s51, 1
          %s216 = scalar_lea.sflag [#allocation5], %s215
          %s217 = sand.u32 %s51, 1
          %s218 = smul.addr %s217, 64
          %s219 = scalar_lea.vmem [#allocation4], %s218
          %p220 = scmp.eq.s32.totalorder %s28, 1
          %s221 = ssub.s32 1, %s29
          %s222 = scalar_select %p220, %s221, %s29
          %s223 = smul.u32 4, %s222
          %s225 = ssub.s32 1024, 1024
          %226 = vsyncadd %s216, %s225
          %s227 = smul.addr %s223, 4
          %s228 = smul.addr %s28, 32
          %s229 = sadd.s32 %s227, %s228
          %s230 = smul.addr %s229, 64
          %s231 = scalar_lea.hbm %s0, %s230
          %s232 = sshll.u32 %s219, 4
          %s233 = int_to_ptr.vmem [resolvable:$true] %s232
          %238 = dma.hbm_to_vmem [thread:$0]  %s231, 1024, %s233, %s216, 256, 256, 16
        $region28: #{tpu_custom_call.1} parent=23 // pred_fallthru
          _
      $region24: #{tpu_custom_call.1} parent=5 // pred_fallthru
        _
      %p239 = scmp.le.s32.totalorder 1, %s21
      %p240 = scmp.lt.s32.totalorder %s21, 5
      %p241 = pnand %p239, %p240
      %p242 = pneg %p241
      // Predicated region
      $region29: #{tpu_custom_call.1} parent=5 // pred_check
        _
      $region30: #{tpu_custom_call.1} parent=5 // pred_check_branch
        %244 = sbr.rel (%p241) target = $region32
      $region31: #{tpu_custom_call.1} parent=5 // pred_region
        %s245 = ssub.s32 %s21, 1
        %s246 = sand.u32 %s54, 1
        %s247 = scalar_lea.sflag [#allocation5], %s246
        %s248 = sand.u32 %s54, 1
        %s249 = smul.addr %s248, 64
        %s250 = scalar_lea.vmem [#allocation4], %s249
        // Predicated region
        $region33: #{tpu_custom_call.1} parent=31 // pred_check
          %p251 = pneg %p67
        $region34: #{tpu_custom_call.1} parent=31 // pred_check_branch
          %253 = sbr.rel (%p251) target = $region36
        $region35: #{tpu_custom_call.1} parent=31 // pred_region
          %254 = dma.done %s247, 1024
        $region36: #{tpu_custom_call.1} parent=31 // pred_fallthru
          _
        // Predicated region
        $region37: #{tpu_custom_call.1} parent=31 // pred_check
          %p255 = pneg %p93
        $region38: #{tpu_custom_call.1} parent=31 // pred_check_branch
          %257 = sbr.rel (%p255) target = $region40
        $region39: #{tpu_custom_call.1} parent=31 // pred_region
          %258 = dma.done [#allocation8], 4096
        $region40: #{tpu_custom_call.1} parent=31 // pred_fallthru
          _
        %s259 = sand.u32 %s54, 1
        %s260 = scalar_lea.sflag [#allocation5], %s259
        %s261 = sand.u32 %s54, 1
        %s262 = smul.addr %s261, 64
        %s263 = scalar_lea.vmem [#allocation4], %s262
        %p264 = pneg %p67
        %p265 = pneg %p64
        %p266 = pneg %p93
        %p267 = pneg %p90
        %p268 = pneg %p114
        %p269 = pneg %p111
        %p270 = pneg %p148
        %p271 = pneg %p145
        %s272 = sand.u32 %s135, 1
        %s273 = scalar_lea.sflag [#allocation6], %s272
        %s274 = sand.u32 %s135, 1
        %s275 = smul.addr %s274, 16
        %s276 = scalar_lea.vmem [#allocation9], %s275
        %p277 = pneg %p174
        %p278 = pneg %p171
        %s279 = sand.u32 %s161, 1
        %s280 = scalar_lea.sflag [#allocation11], %s279
        %s281 = sand.u32 %s161, 1
        %s282 = smul.addr %s281, 8
        %s283 = scalar_lea.vmem [#allocation10], %s282
        %p284 = scmp.eq.s32.totalorder %s30, 1
        %s285 = ssub.s32 1, %s31
        %s286 = scalar_select %p284, %s285, %s31
        %s287 = smul.u32 4, %s286
        %p288 = scmp.eq.s32.totalorder %s30, 1
        %s289 = ssub.s32 1, %s31
        %s290 = scalar_select %p288, %s289, %s31
        %s291 = smul.u32 4, %s290
        %p293 = scmp.eq.s32.totalorder %s31, 0
        // Predicated region
        $region41: #{tpu_custom_call.1} parent=31 // pred_check
          %p294 = pneg %p293
        $region42: #{tpu_custom_call.1} parent=31 // pred_check_branch
          %296 = sbr.rel (%p294) target = $region44
        $region43: #{tpu_custom_call.1} parent=31 // pred_region
          %297 = vst [vmem:[#allocation2] sm:$0xff] 0.0
          %298 = vst [vmem:[#allocation3] sm:$0xff] 0.0
        $region44: #{tpu_custom_call.1} parent=31 // pred_fallthru
          _
        %v299 = vld [vmem:[#allocation7] sm:$0xff]
        %v300 = vld [vmem:[#allocation7 + $0x8] sm:$0xff]
        %v301 = vld [vmem:[#allocation7 + $0x10] sm:$0xff]
        %v302 = vld [vmem:[#allocation7 + $0x18] sm:$0xff]
        %v303 = vld [vmem:[#allocation7 + $0x20] sm:$0xff]
        %v304 = vld [vmem:[#allocation7 + $0x28] sm:$0xff]
        %v305 = vld [vmem:[#allocation7 + $0x30] sm:$0xff]
        %v306 = vld [vmem:[#allocation7 + $0x38] sm:$0xff]
        %v307 = vld [vmem:[#allocation7 + $0x40] sm:$0xff]
        %v308 = vld [vmem:[#allocation7 + $0x48] sm:$0xff]
        %v309 = vld [vmem:[#allocation7 + $0x50] sm:$0xff]
        %v310 = vld [vmem:[#allocation7 + $0x58] sm:$0xff]
        %v311 = vld [vmem:[#allocation7 + $0x60] sm:$0xff]
        %v312 = vld [vmem:[#allocation7 + $0x68] sm:$0xff]
        %v313 = vld [vmem:[#allocation7 + $0x70] sm:$0xff]
        %v314 = vld [vmem:[#allocation7 + $0x78] sm:$0xff]
        %v315 = vld [vmem:[#allocation7 + $0x80] sm:$0xff]
        %v316 = vld [vmem:[#allocation7 + $0x88] sm:$0xff]
        %v317 = vld [vmem:[#allocation7 + $0x90] sm:$0xff]
        %v318 = vld [vmem:[#allocation7 + $0x98] sm:$0xff]
        %v319 = vld [vmem:[#allocation7 + $0xa0] sm:$0xff]
        %v320 = vld [vmem:[#allocation7 + $0xa8] sm:$0xff]
        %v321 = vld [vmem:[#allocation7 + $0xb0] sm:$0xff]
        %v322 = vld [vmem:[#allocation7 + $0xb8] sm:$0xff]
        %v323 = vld [vmem:[#allocation7 + $0xc0] sm:$0xff]
        %v324 = vld [vmem:[#allocation7 + $0xc8] sm:$0xff]
        %v325 = vld [vmem:[#allocation7 + $0xd0] sm:$0xff]
        %v326 = vld [vmem:[#allocation7 + $0xd8] sm:$0xff]
        %v327 = vld [vmem:[#allocation7 + $0xe0] sm:$0xff]
        %v328 = vld [vmem:[#allocation7 + $0xe8] sm:$0xff]
        %v329 = vld [vmem:[#allocation7 + $0xf0] sm:$0xff]
        %v330 = vld [vmem:[#allocation7 + $0xf8] sm:$0xff]
        %v331 = vld [vmem:[%s2] sm:$0xff]
        %p332 = scmp.eq.s32.totalorder %s30, 0
        // Predicated region
        $region45: #{tpu_custom_call.1} parent=31 // pred_check
          %p333 = pneg %p332
        $region46: #{tpu_custom_call.1} parent=31 // pred_check_branch
          %335 = sbr.rel (%p333) target = $region48
        $region47: #{tpu_custom_call.1} parent=31 // pred_region
          %s336 = smul.u32 %s31, 4
          %v337 = vld [vmem:[#allocation2] sm:$0xff]
          %v338 = vld [vmem:[#allocation3] sm:$0xff]
          %v339 = vld [vmem:[%s250] sm:$0xff]
          %v340 = vld [vmem:[%s250 + $0x8] sm:$0xff]
          %v341 = vunpack.c.l.bf16 %v339
          %v342 = vunpack.c.h.bf16 %v339
          %v343 = vunpack.c.l.bf16 %v340
          %v344 = vunpack.c.h.bf16 %v340
          %v345 = vpack.c.bf16 %v337, %v337
          %v378 = vunpack.c.l.b16 %v299
          %v379 = vunpack.c.h.b16 %v299
          %v380 = vunpack.c.l.b16 %v300
          %v381 = vunpack.c.h.b16 %v300
          %v382 = vunpack.c.l.b16 %v301
          %v383 = vunpack.c.h.b16 %v301
          %v384 = vunpack.c.l.b16 %v302
          %v385 = vunpack.c.h.b16 %v302
          %v386 = vunpack.c.l.b16 %v303
          %v387 = vunpack.c.h.b16 %v303
          %v388 = vunpack.c.l.b16 %v304
          %v389 = vunpack.c.h.b16 %v304
          %v390 = vunpack.c.l.b16 %v305
          %v391 = vunpack.c.h.b16 %v305
          %v392 = vunpack.c.l.b16 %v306
          %v393 = vunpack.c.h.b16 %v306
          %v394 = vunpack.c.l.b16 %v307
          %v395 = vunpack.c.h.b16 %v307
          %v396 = vunpack.c.l.b16 %v308
          %v397 = vunpack.c.h.b16 %v308
          %v398 = vunpack.c.l.b16 %v309
          %v399 = vunpack.c.h.b16 %v309
          %v400 = vunpack.c.l.b16 %v310
          %v401 = vunpack.c.h.b16 %v310
          %v402 = vunpack.c.l.b16 %v311
          %v403 = vunpack.c.h.b16 %v311
          %v404 = vunpack.c.l.b16 %v312
          %v405 = vunpack.c.h.b16 %v312
          %v406 = vunpack.c.l.b16 %v313
          %v407 = vunpack.c.h.b16 %v313
          %v408 = vunpack.c.l.b16 %v314
          %v409 = vunpack.c.h.b16 %v314
          %v410 = vunpack.c.l.b16 %v315
          %v411 = vunpack.c.h.b16 %v315
          %v412 = vunpack.c.l.b16 %v316
          %v413 = vunpack.c.h.b16 %v316
          %v414 = vunpack.c.l.b16 %v317
          %v415 = vunpack.c.h.b16 %v317
          %v416 = vunpack.c.l.b16 %v318
          %v417 = vunpack.c.h.b16 %v318
          %v418 = vunpack.c.l.b16 %v319
          %v419 = vunpack.c.h.b16 %v319
          %v420 = vunpack.c.l.b16 %v320
          %v421 = vunpack.c.h.b16 %v320
          %v422 = vunpack.c.l.b16 %v321
          %v423 = vunpack.c.h.b16 %v321
          %v424 = vunpack.c.l.b16 %v322
          %v425 = vunpack.c.h.b16 %v322
          %v426 = vunpack.c.l.b16 %v323
          %v427 = vunpack.c.h.b16 %v323
          %v428 = vunpack.c.l.b16 %v324
          %v429 = vunpack.c.h.b16 %v324
          %v430 = vunpack.c.l.b16 %v325
          %v431 = vunpack.c.h.b16 %v325
          %v432 = vunpack.c.l.b16 %v326
          %v433 = vunpack.c.h.b16 %v326
          %v434 = vunpack.c.l.b16 %v327
          %v435 = vunpack.c.h.b16 %v327
          %v436 = vunpack.c.l.b16 %v328
          %v437 = vunpack.c.h.b16 %v328
          %v438 = vunpack.c.l.b16 %v329
          %v439 = vunpack.c.h.b16 %v329
          %v440 = vunpack.c.l.b16 %v330
          %v441 = vunpack.c.h.b16 %v330
          %v442 = vpack.c.b16 %v382, %v378
          %v443 = vpack.c.b16 %v383, %v379
          %v444 = vpack.c.b16 %v384, %v380
          %v445 = vpack.c.b16 %v385, %v381
          %v446 = vpack.c.b16 %v390, %v386
          %v447 = vpack.c.b16 %v391, %v387
          %v448 = vpack.c.b16 %v392, %v388
          %v449 = vpack.c.b16 %v393, %v389
          %v450 = vpack.c.b16 %v398, %v394
          %v451 = vpack.c.b16 %v399, %v395
          %v452 = vpack.c.b16 %v400, %v396
          %v453 = vpack.c.b16 %v401, %v397
          %v454 = vpack.c.b16 %v406, %v402
          %v455 = vpack.c.b16 %v407, %v403
          %v456 = vpack.c.b16 %v408, %v404
          %v457 = vpack.c.b16 %v409, %v405
          %v458 = vpack.c.b16 %v414, %v410
          %v459 = vpack.c.b16 %v415, %v411
          %v460 = vpack.c.b16 %v416, %v412
          %v461 = vpack.c.b16 %v417, %v413
          %v462 = vpack.c.b16 %v422, %v418
          %v463 = vpack.c.b16 %v423, %v419
          %v464 = vpack.c.b16 %v424, %v420
          %v465 = vpack.c.b16 %v425, %v421
          %v466 = vpack.c.b16 %v430, %v426
          %v467 = vpack.c.b16 %v431, %v427
          %v468 = vpack.c.b16 %v432, %v428
          %v469 = vpack.c.b16 %v433, %v429
          %v470 = vpack.c.b16 %v438, %v434
          %v471 = vpack.c.b16 %v439, %v435
          %v472 = vpack.c.b16 %v440, %v436
          %v473 = vpack.c.b16 %v441, %v437
          %506 = vmatprep.subr.bf16.mxu0 %v443
          %507 = vmatpush1.bf16.msra.mxu0 %v442
          %508 = vmatprep.subr.bf16.mxu0 %v447
          %509 = vmatpush1.bf16.msra.mxu0 %v446
          %510 = vmatprep.subr.bf16.mxu0 %v451
          %511 = vmatpush1.bf16.msra.mxu0 %v450
          %512 = vmatprep.subr.bf16.mxu0 %v455
          %513 = vmatpush1.bf16.msra.mxu0 %v454
          %514 = vmatprep.subr.bf16.mxu0 %v459
          %515 = vmatpush1.bf16.msra.mxu0 %v458
          %516 = vmatprep.subr.bf16.mxu0 %v463
          %517 = vmatpush1.bf16.msra.mxu0 %v462
          %518 = vmatprep.subr.bf16.mxu0 %v467
          %519 = vmatpush1.bf16.msra.mxu0 %v466
          %520 = vmatprep.subr.bf16.mxu0 %v471
          %521 = vmatpush1.bf16.msra.mxu0 %v470
          %522 = vmatprep.subr.bf16.mxu0 0
          %523 = vmatpush1.bf16.msra.mxu0 0
          %524 = vmatprep.subr.bf16.mxu0 0
          %525 = vmatpush1.bf16.msra.mxu0 0
          %526 = vmatprep.subr.bf16.mxu0 0
          %527 = vmatpush1.bf16.msra.mxu0 0
          %528 = vmatprep.subr.bf16.mxu0 0
          %529 = vmatpush1.bf16.msra.mxu0 0
          %530 = vmatprep.subr.bf16.mxu0 0
          %531 = vmatpush1.bf16.msra.mxu0 0
          %532 = vmatprep.subr.bf16.mxu0 0
          %533 = vmatpush1.bf16.msra.mxu0 0
          %534 = vmatprep.subr.bf16.mxu0 0
          %535 = vmatpush1.bf16.msra.mxu0 0
          %536 = vmatprep.subr.bf16.mxu0 0
          %537 = vmatpush1.bf16.msra.mxu0 0
          %538 = vmatprep.mubr.bf16.mxu0 0
          %539 = vmatmul.mubr.bf16.gmra.mrb[0].mxu0 %v345
          %v540 = vpop.f32.mrb[0].mxu0
          %v541 = vadd.f32 0.0, %v540
          %v542 = vpop.f32.mrb[0].mxu0
          %v543 = vadd.f32 0.0, %v542
          %v544 = vpop.f32.mrb[0].mxu0
          %v545 = vpop.f32.mrb[0].mxu0
          %546 = vdwg.mxu0
          %547 = vmatprep.subr.bf16.mxu0 %v445
          %548 = vmatpush1.bf16.msra.mxu0 %v444
          %549 = vmatprep.subr.bf16.mxu0 %v449
          %550 = vmatpush1.bf16.msra.mxu0 %v448
          %551 = vmatprep.subr.bf16.mxu0 %v453
          %552 = vmatpush1.bf16.msra.mxu0 %v452
          %553 = vmatprep.subr.bf16.mxu0 %v457
          %554 = vmatpush1.bf16.msra.mxu0 %v456
          %555 = vmatprep.subr.bf16.mxu0 %v461
          %556 = vmatpush1.bf16.msra.mxu0 %v460
          %557 = vmatprep.subr.bf16.mxu0 %v465
          %558 = vmatpush1.bf16.msra.mxu0 %v464
          %559 = vmatprep.subr.bf16.mxu0 %v469
          %560 = vmatpush1.bf16.msra.mxu0 %v468
          %561 = vmatprep.subr.bf16.mxu0 %v473
          %562 = vmatpush1.bf16.msra.mxu0 %v472
          %563 = vmatprep.subr.bf16.mxu0 0
          %564 = vmatpush1.bf16.msra.mxu0 0
          %565 = vmatprep.subr.bf16.mxu0 0
          %566 = vmatpush1.bf16.msra.mxu0 0
          %567 = vmatprep.subr.bf16.mxu0 0
          %568 = vmatpush1.bf16.msra.mxu0 0
          %569 = vmatprep.subr.bf16.mxu0 0
          %570 = vmatpush1.bf16.msra.mxu0 0
          %571 = vmatprep.subr.bf16.mxu0 0
          %572 = vmatpush1.bf16.msra.mxu0 0
          %573 = vmatprep.subr.bf16.mxu0 0
          %574 = vmatpush1.bf16.msra.mxu0 0
          %575 = vmatprep.subr.bf16.mxu0 0
          %576 = vmatpush1.bf16.msra.mxu0 0
          %577 = vmatprep.subr.bf16.mxu0 0
          %578 = vmatpush1.bf16.msra.mxu0 0
          %579 = vmatprep.mubr.bf16.mxu0 0
          %580 = vmatmul.mubr.bf16.gmra.mrb[0].mxu0 %v345
          %v581 = vpop.f32.mrb[0].mxu0
          %v582 = vadd.f32 0.0, %v581
          %v583 = vpop.f32.mrb[0].mxu0
          %v584 = vadd.f32 0.0, %v583
          %v585 = vpop.f32.mrb[0].mxu0
          %v586 = vpop.f32.mrb[0].mxu0
          %587 = vdwg.mxu0
          %v588 = vadd.f32 %v341, %v541
          %v589 = vadd.f32 %v342, %v543
          %v590 = vadd.f32 %v343, %v582
          %v591 = vadd.f32 %v344, %v584
          %v592 = vmul.f32 %v588, 0.5
          %v593 = vtanh.pop %v592
          %v594 = vmul.f32 %v593, 0.5
          %v595 = vadd.f32 %v594, 0.5
          %v596 = vmul.f32 %v589, 0.5
          %v597 = vtanh.pop %v596
          %v598 = vmul.f32 %v597, 0.5
          %v599 = vadd.f32 %v598, 0.5
          %v600 = vtanh.pop %v590
          %v601 = vmul.f32 %v591, 0.5
          %v602 = vtanh.pop %v601
          %v603 = vmul.f32 %v602, 0.5
          %v604 = vadd.f32 %v603, 0.5
          %v605 = vmul.f32 %v599, %v338
          %v606 = vmul.f32 %v595, %v600
          %v607 = vadd.f32 %v605, %v606
          %v608 = vtanh.pop %v607
          %v609 = vmul.f32 %v604, %v608
          %v610 = vstv %s336
          %vm611 = vcmp.lt.s32.totalorder %v610, %v331
          %v612 = vsel %vm611, 1, 0
          %613 = vset.pattern.permute.xlu0 0
          %614 = vperm.xlu0 %613, %v612
          %v615 = vpop.permute.xlu0 %614
          %vm616 = vcmp.eq.s32.totalorder %v615, 1
          %v617 = vsel %vm616, %v609, %v337
          %v618 = vsel %vm616, %v607, %v338
          %v619 = vsel %vm616, %v609, 0.0
          %v620 = vpack.c.bf16 %v619, %v619
          %621 = vst [vmem:[%s276] sm:$0xf] %v620
          %s622 = scalar_lea.vmem %s250, 16 [#allocation4]
          %v623 = vld [vmem:[%s622] sm:$0xff]
          %v624 = vld [vmem:[%s622 + $0x8] sm:$0xff]
          %v625 = vunpack.c.l.bf16 %v623
          %v626 = vunpack.c.h.bf16 %v623
          %v627 = vunpack.c.l.bf16 %v624
          %v628 = vunpack.c.h.bf16 %v624
          %v629 = vpack.c.bf16 %v617, %v617
          %630 = vmatprep.subr.bf16.mxu0 %v443
          %631 = vmatpush1.bf16.msra.mxu0 %v442
          %632 = vmatprep.subr.bf16.mxu0 %v447
          %633 = vmatpush1.bf16.msra.mxu0 %v446
          %634 = vmatprep.subr.bf16.mxu0 %v451
          %635 = vmatpush1.bf16.msra.mxu0 %v450
          %636 = vmatprep.subr.bf16.mxu0 %v455
          %637 = vmatpush1.bf16.msra.mxu0 %v454
          %638 = vmatprep.subr.bf16.mxu0 %v459
          %639 = vmatpush1.bf16.msra.mxu0 %v458
          %640 = vmatprep.subr.bf16.mxu0 %v463
          %641 = vmatpush1.bf16.msra.mxu0 %v462
          %642 = vmatprep.subr.bf16.mxu0 %v467
          %643 = vmatpush1.bf16.msra.mxu0 %v466
          %644 = vmatprep.subr.bf16.mxu0 %v471
          %645 = vmatpush1.bf16.msra.mxu0 %v470
          %646 = vmatprep.subr.bf16.mxu0 0
          %647 = vmatpush1.bf16.msra.mxu0 0
          %648 = vmatprep.subr.bf16.mxu0 0
          %649 = vmatpush1.bf16.msra.mxu0 0
          %650 = vmatprep.subr.bf16.mxu0 0
          %651 = vmatpush1.bf16.msra.mxu0 0
          %652 = vmatprep.subr.bf16.mxu0 0
          %653 = vmatpush1.bf16.msra.mxu0 0
          %654 = vmatprep.subr.bf16.mxu0 0
          %655 = vmatpush1.bf16.msra.mxu0 0
          %656 = vmatprep.subr.bf16.mxu0 0
          %657 = vmatpush1.bf16.msra.mxu0 0
          %658 = vmatprep.subr.bf16.mxu0 0
          %659 = vmatpush1.bf16.msra.mxu0 0
          %660 = vmatprep.subr.bf16.mxu0 0
          %661 = vmatpush1.bf16.msra.mxu0 0
          %662 = vmatprep.mubr.bf16.mxu0 0
          %663 = vmatmul.mubr.bf16.gmra.mrb[0].mxu0 %v629
          %v664 = vpop.f32.mrb[0].mxu0
          %v665 = vadd.f32 0.0, %v664
          %v666 = vpop.f32.mrb[0].mxu0
          %v667 = vadd.f32 0.0, %v666
          %v668 = vpop.f32.mrb[0].mxu0
          %v669 = vpop.f32.mrb[0].mxu0
          %670 = vdwg.mxu0
          %671 = vmatprep.subr.bf16.mxu0 %v445
          %672 = vmatpush1.bf16.msra.mxu0 %v444
          %673 = vmatprep.subr.bf16.mxu0 %v449
          %674 = vmatpush1.bf16.msra.mxu0 %v448
          %675 = vmatprep.subr.bf16.mxu0 %v453
          %676 = vmatpush1.bf16.msra.mxu0 %v452
          %677 = vmatprep.subr.bf16.mxu0 %v457
          %678 = vmatpush1.bf16.msra.mxu0 %v456
          %679 = vmatprep.subr.bf16.mxu0 %v461
          %680 = vmatpush1.bf16.msra.mxu0 %v460
          %681 = vmatprep.subr.bf16.mxu0 %v465
          %682 = vmatpush1.bf16.msra.mxu0 %v464
          %683 = vmatprep.subr.bf16.mxu0 %v469
          %684 = vmatpush1.bf16.msra.mxu0 %v468
          %685 = vmatprep.subr.bf16.mxu0 %v473
          %686 = vmatpush1.bf16.msra.mxu0 %v472
          %687 = vmatprep.subr.bf16.mxu0 0
          %688 = vmatpush1.bf16.msra.mxu0 0
          %689 = vmatprep.subr.bf16.mxu0 0
          %690 = vmatpush1.bf16.msra.mxu0 0
          %691 = vmatprep.subr.bf16.mxu0 0
          %692 = vmatpush1.bf16.msra.mxu0 0
          %693 = vmatprep.subr.bf16.mxu0 0
          %694 = vmatpush1.bf16.msra.mxu0 0
          %695 = vmatprep.subr.bf16.mxu0 0
          %696 = vmatpush1.bf16.msra.mxu0 0
          %697 = vmatprep.subr.bf16.mxu0 0
          %698 = vmatpush1.bf16.msra.mxu0 0
          %699 = vmatprep.subr.bf16.mxu0 0
          %700 = vmatpush1.bf16.msra.mxu0 0
          %701 = vmatprep.subr.bf16.mxu0 0
          %702 = vmatpush1.bf16.msra.mxu0 0
          %703 = vmatprep.mubr.bf16.mxu0 0
          %704 = vmatmul.mubr.bf16.gmra.mrb[0].mxu0 %v629
          %v705 = vpop.f32.mrb[0].mxu0
          %v706 = vadd.f32 0.0, %v705
          %v707 = vpop.f32.mrb[0].mxu0
          %v708 = vadd.f32 0.0, %v707
          %v709 = vpop.f32.mrb[0].mxu0
          %v710 = vpop.f32.mrb[0].mxu0
          %711 = vdwg.mxu0
          %v712 = vadd.f32 %v625, %v665
          %v713 = vadd.f32 %v626, %v667
          %v714 = vadd.f32 %v627, %v706
          %v715 = vadd.f32 %v628, %v708
          %v716 = vmul.f32 %v712, 0.5
          %v717 = vtanh.pop %v716
          %v718 = vmul.f32 %v717, 0.5
          %v719 = vadd.f32 %v718, 0.5
          %v720 = vmul.f32 %v713, 0.5
          %v721 = vtanh.pop %v720
          %v722 = vmul.f32 %v721, 0.5
          %v723 = vadd.f32 %v722, 0.5
          %v724 = vtanh.pop %v714
          %v725 = vmul.f32 %v715, 0.5
          %v726 = vtanh.pop %v725
          %v727 = vmul.f32 %v726, 0.5
          %v728 = vadd.f32 %v727, 0.5
          %v729 = vmul.f32 %v723, %v618
          %v730 = vmul.f32 %v719, %v724
          %v731 = vadd.f32 %v729, %v730
          %v732 = vtanh.pop %v731
          %v733 = vmul.f32 %v728, %v732
          %s734 = sadd.s32 %s336, 1
          %v735 = vstv %s734
          %vm736 = vcmp.lt.s32.totalorder %v735, %v331
          %v737 = vsel %vm736, 1, 0
          %738 = vset.pattern.permute.xlu0 0
          %739 = vperm.xlu0 %738, %v737
          %v740 = vpop.permute.xlu0 %739
          %vm741 = vcmp.eq.s32.totalorder %v740, 1
          %v742 = vsel %vm741, %v733, %v617
          %v743 = vsel %vm741, %v731, %v618
          %v744 = vsel %vm741, %v733, 0.0
          %v745 = vpack.c.bf16 %v744, %v744
          %s746 = scalar_lea.vmem %s276, 4 [#allocation9]
          %747 = vst [vmem:[%s746] sm:$0xf] %v745
          %s748 = scalar_lea.vmem %s250, 32 [#allocation4]
          %v749 = vld [vmem:[%s748] sm:$0xff]
          %v750 = vld [vmem:[%s748 + $0x8] sm:$0xff]
          %v751 = vunpack.c.l.bf16 %v749
          %v752 = vunpack.c.h.bf16 %v749
          %v753 = vunpack.c.l.bf16 %v750
          %v754 = vunpack.c.h.bf16 %v750
          %v755 = vpack.c.bf16 %v742, %v742
          %756 = vmatprep.subr.bf16.mxu0 %v443
          %757 = vmatpush1.bf16.msra.mxu0 %v442
          %758 = vmatprep.subr.bf16.mxu0 %v447
          %759 = vmatpush1.bf16.msra.mxu0 %v446
          %760 = vmatprep.subr.bf16.mxu0 %v451
          %761 = vmatpush1.bf16.msra.mxu0 %v450
          %762 = vmatprep.subr.bf16.mxu0 %v455
          %763 = vmatpush1.bf16.msra.mxu0 %v454
          %764 = vmatprep.subr.bf16.mxu0 %v459
          %765 = vmatpush1.bf16.msra.mxu0 %v458
          %766 = vmatprep.subr.bf16.mxu0 %v463
          %767 = vmatpush1.bf16.msra.mxu0 %v462
          %768 = vmatprep.subr.bf16.mxu0 %v467
          %769 = vmatpush1.bf16.msra.mxu0 %v466
          %770 = vmatprep.subr.bf16.mxu0 %v471
          %771 = vmatpush1.bf16.msra.mxu0 %v470
          %772 = vmatprep.subr.bf16.mxu0 0
          %773 = vmatpush1.bf16.msra.mxu0 0
          %774 = vmatprep.subr.bf16.mxu0 0
          %775 = vmatpush1.bf16.msra.mxu0 0
          %776 = vmatprep.subr.bf16.mxu0 0
          %777 = vmatpush1.bf16.msra.mxu0 0
          %778 = vmatprep.subr.bf16.mxu0 0
          %779 = vmatpush1.bf16.msra.mxu0 0
          %780 = vmatprep.subr.bf16.mxu0 0
          %781 = vmatpush1.bf16.msra.mxu0 0
          %782 = vmatprep.subr.bf16.mxu0 0
          %783 = vmatpush1.bf16.msra.mxu0 0
          %784 = vmatprep.subr.bf16.mxu0 0
          %785 = vmatpush1.bf16.msra.mxu0 0
          %786 = vmatprep.subr.bf16.mxu0 0
          %787 = vmatpush1.bf16.msra.mxu0 0
          %788 = vmatprep.mubr.bf16.mxu0 0
          %789 = vmatmul.mubr.bf16.gmra.mrb[0].mxu0 %v755
          %v790 = vpop.f32.mrb[0].mxu0
          %v791 = vadd.f32 0.0, %v790
          %v792 = vpop.f32.mrb[0].mxu0
          %v793 = vadd.f32 0.0, %v792
          %v794 = vpop.f32.mrb[0].mxu0
          %v795 = vpop.f32.mrb[0].mxu0
          %796 = vdwg.mxu0
          %797 = vmatprep.subr.bf16.mxu0 %v445
          %798 = vmatpush1.bf16.msra.mxu0 %v444
          %799 = vmatprep.subr.bf16.mxu0 %v449
          %800 = vmatpush1.bf16.msra.mxu0 %v448
          %801 = vmatprep.subr.bf16.mxu0 %v453
          %802 = vmatpush1.bf16.msra.mxu0 %v452
          %803 = vmatprep.subr.bf16.mxu0 %v457
          %804 = vmatpush1.bf16.msra.mxu0 %v456
          %805 = vmatprep.subr.bf16.mxu0 %v461
          %806 = vmatpush1.bf16.msra.mxu0 %v460
          %807 = vmatprep.subr.bf16.mxu0 %v465
          %808 = vmatpush1.bf16.msra.mxu0 %v464
          %809 = vmatprep.subr.bf16.mxu0 %v469
          %810 = vmatpush1.bf16.msra.mxu0 %v468
          %811 = vmatprep.subr.bf16.mxu0 %v473
          %812 = vmatpush1.bf16.msra.mxu0 %v472
          %813 = vmatprep.subr.bf16.mxu0 0
          %814 = vmatpush1.bf16.msra.mxu0 0
          %815 = vmatprep.subr.bf16.mxu0 0
          %816 = vmatpush1.bf16.msra.mxu0 0
          %817 = vmatprep.subr.bf16.mxu0 0
          %818 = vmatpush1.bf16.msra.mxu0 0
          %819 = vmatprep.subr.bf16.mxu0 0
          %820 = vmatpush1.bf16.msra.mxu0 0
          %821 = vmatprep.subr.bf16.mxu0 0
          %822 = vmatpush1.bf16.msra.mxu0 0
          %823 = vmatprep.subr.bf16.mxu0 0
          %824 = vmatpush1.bf16.msra.mxu0 0
          %825 = vmatprep.subr.bf16.mxu0 0
          %826 = vmatpush1.bf16.msra.mxu0 0
          %827 = vmatprep.subr.bf16.mxu0 0
          %828 = vmatpush1.bf16.msra.mxu0 0
          %829 = vmatprep.mubr.bf16.mxu0 0
          %830 = vmatmul.mubr.bf16.gmra.mrb[0].mxu0 %v755
          %v831 = vpop.f32.mrb[0].mxu0
          %v832 = vadd.f32 0.0, %v831
          %v833 = vpop.f32.mrb[0].mxu0
          %v834 = vadd.f32 0.0, %v833
          %v835 = vpop.f32.mrb[0].mxu0
          %v836 = vpop.f32.mrb[0].mxu0
          %837 = vdwg.mxu0
          %v838 = vadd.f32 %v751, %v791
          %v839 = vadd.f32 %v752, %v793
          %v840 = vadd.f32 %v753, %v832
          %v841 = vadd.f32 %v754, %v834
          %v842 = vmul.f32 %v838, 0.5
          %v843 = vtanh.pop %v842
          %v844 = vmul.f32 %v843, 0.5
          %v845 = vadd.f32 %v844, 0.5
          %v846 = vmul.f32 %v839, 0.5
          %v847 = vtanh.pop %v846
          %v848 = vmul.f32 %v847, 0.5
          %v849 = vadd.f32 %v848, 0.5
          %v850 = vtanh.pop %v840
          %v851 = vmul.f32 %v841, 0.5
          %v852 = vtanh.pop %v851
          %v853 = vmul.f32 %v852, 0.5
          %v854 = vadd.f32 %v853, 0.5
          %v855 = vmul.f32 %v849, %v743
          %v856 = vmul.f32 %v845, %v850
          %v857 = vadd.f32 %v855, %v856
          %v858 = vtanh.pop %v857
          %v859 = vmul.f32 %v854, %v858
          %s860 = sadd.s32 %s336, 2
          %v861 = vstv %s860
          %vm862 = vcmp.lt.s32.totalorder %v861, %v331
          %v863 = vsel %vm862, 1, 0
          %864 = vset.pattern.permute.xlu0 0
          %865 = vperm.xlu0 %864, %v863
          %v866 = vpop.permute.xlu0 %865
          %vm867 = vcmp.eq.s32.totalorder %v866, 1
          %v868 = vsel %vm867, %v859, %v742
          %v869 = vsel %vm867, %v857, %v743
          %v870 = vsel %vm867, %v859, 0.0
          %v871 = vpack.c.bf16 %v870, %v870
          %s872 = scalar_lea.vmem %s276, 8 [#allocation9]
          %873 = vst [vmem:[%s872] sm:$0xf] %v871
          %s874 = scalar_lea.vmem %s250, 48 [#allocation4]
          %v875 = vld [vmem:[%s874] sm:$0xff]
          %v876 = vld [vmem:[%s874 + $0x8] sm:$0xff]
          %v877 = vunpack.c.l.bf16 %v875
          %v878 = vunpack.c.h.bf16 %v875
          %v879 = vunpack.c.l.bf16 %v876
          %v880 = vunpack.c.h.bf16 %v876
          %v881 = vpack.c.bf16 %v868, %v868
          %882 = vmatprep.subr.bf16.mxu0 %v443
          %883 = vmatpush1.bf16.msra.mxu0 %v442
          %884 = vmatprep.subr.bf16.mxu0 %v447
          %885 = vmatpush1.bf16.msra.mxu0 %v446
          %886 = vmatprep.subr.bf16.mxu0 %v451
          %887 = vmatpush1.bf16.msra.mxu0 %v450
          %888 = vmatprep.subr.bf16.mxu0 %v455
          %889 = vmatpush1.bf16.msra.mxu0 %v454
          %890 = vmatprep.subr.bf16.mxu0 %v459
          %891 = vmatpush1.bf16.msra.mxu0 %v458
          %892 = vmatprep.subr.bf16.mxu0 %v463
          %893 = vmatpush1.bf16.msra.mxu0 %v462
          %894 = vmatprep.subr.bf16.mxu0 %v467
          %895 = vmatpush1.bf16.msra.mxu0 %v466
          %896 = vmatprep.subr.bf16.mxu0 %v471
          %897 = vmatpush1.bf16.msra.mxu0 %v470
          %898 = vmatprep.subr.bf16.mxu0 0
          %899 = vmatpush1.bf16.msra.mxu0 0
          %900 = vmatprep.subr.bf16.mxu0 0
          %901 = vmatpush1.bf16.msra.mxu0 0
          %902 = vmatprep.subr.bf16.mxu0 0
          %903 = vmatpush1.bf16.msra.mxu0 0
          %904 = vmatprep.subr.bf16.mxu0 0
          %905 = vmatpush1.bf16.msra.mxu0 0
          %906 = vmatprep.subr.bf16.mxu0 0
          %907 = vmatpush1.bf16.msra.mxu0 0
          %908 = vmatprep.subr.bf16.mxu0 0
          %909 = vmatpush1.bf16.msra.mxu0 0
          %910 = vmatprep.subr.bf16.mxu0 0
          %911 = vmatpush1.bf16.msra.mxu0 0
          %912 = vmatprep.subr.bf16.mxu0 0
          %913 = vmatpush1.bf16.msra.mxu0 0
          %914 = vmatprep.mubr.bf16.mxu0 0
          %915 = vmatmul.mubr.bf16.gmra.mrb[0].mxu0 %v881
          %v916 = vpop.f32.mrb[0].mxu0
          %v917 = vadd.f32 0.0, %v916
          %v918 = vpop.f32.mrb[0].mxu0
          %v919 = vadd.f32 0.0, %v918
          %v920 = vpop.f32.mrb[0].mxu0
          %v921 = vpop.f32.mrb[0].mxu0
          %922 = vdwg.mxu0
          %923 = vmatprep.subr.bf16.mxu0 %v445
          %924 = vmatpush1.bf16.msra.mxu0 %v444
          %925 = vmatprep.subr.bf16.mxu0 %v449
          %926 = vmatpush1.bf16.msra.mxu0 %v448
          %927 = vmatprep.subr.bf16.mxu0 %v453
          %928 = vmatpush1.bf16.msra.mxu0 %v452
          %929 = vmatprep.subr.bf16.mxu0 %v457
          %930 = vmatpush1.bf16.msra.mxu0 %v456
          %931 = vmatprep.subr.bf16.mxu0 %v461
          %932 = vmatpush1.bf16.msra.mxu0 %v460
          %933 = vmatprep.subr.bf16.mxu0 %v465
          %934 = vmatpush1.bf16.msra.mxu0 %v464
          %935 = vmatprep.subr.bf16.mxu0 %v469
          %936 = vmatpush1.bf16.msra.mxu0 %v468
          %937 = vmatprep.subr.bf16.mxu0 %v473
          %938 = vmatpush1.bf16.msra.mxu0 %v472
          %939 = vmatprep.subr.bf16.mxu0 0
          %940 = vmatpush1.bf16.msra.mxu0 0
          %941 = vmatprep.subr.bf16.mxu0 0
          %942 = vmatpush1.bf16.msra.mxu0 0
          %943 = vmatprep.subr.bf16.mxu0 0
          %944 = vmatpush1.bf16.msra.mxu0 0
          %945 = vmatprep.subr.bf16.mxu0 0
          %946 = vmatpush1.bf16.msra.mxu0 0
          %947 = vmatprep.subr.bf16.mxu0 0
          %948 = vmatpush1.bf16.msra.mxu0 0
          %949 = vmatprep.subr.bf16.mxu0 0
          %950 = vmatpush1.bf16.msra.mxu0 0
          %951 = vmatprep.subr.bf16.mxu0 0
          %952 = vmatpush1.bf16.msra.mxu0 0
          %953 = vmatprep.subr.bf16.mxu0 0
          %954 = vmatpush1.bf16.msra.mxu0 0
          %955 = vmatprep.mubr.bf16.mxu0 0
          %956 = vmatmul.mubr.bf16.gmra.mrb[0].mxu0 %v881
          %v957 = vpop.f32.mrb[0].mxu0
          %v958 = vadd.f32 0.0, %v957
          %v959 = vpop.f32.mrb[0].mxu0
          %v960 = vadd.f32 0.0, %v959
          %v961 = vpop.f32.mrb[0].mxu0
          %v962 = vpop.f32.mrb[0].mxu0
          %963 = vdwg.mxu0
          %v964 = vadd.f32 %v877, %v917
          %v965 = vadd.f32 %v878, %v919
          %v966 = vadd.f32 %v879, %v958
          %v967 = vadd.f32 %v880, %v960
          %v968 = vmul.f32 %v964, 0.5
          %v969 = vtanh.pop %v968
          %v970 = vmul.f32 %v969, 0.5
          %v971 = vadd.f32 %v970, 0.5
          %v972 = vmul.f32 %v965, 0.5
          %v973 = vtanh.pop %v972
          %v974 = vmul.f32 %v973, 0.5
          %v975 = vadd.f32 %v974, 0.5
          %v976 = vtanh.pop %v966
          %v977 = vmul.f32 %v967, 0.5
          %v978 = vtanh.pop %v977
          %v979 = vmul.f32 %v978, 0.5
          %v980 = vadd.f32 %v979, 0.5
          %v981 = vmul.f32 %v975, %v869
          %v982 = vmul.f32 %v971, %v976
          %v983 = vadd.f32 %v981, %v982
          %v984 = vtanh.pop %v983
          %v985 = vmul.f32 %v980, %v984
          %s986 = sadd.s32 %s336, 3
          %v987 = vstv %s986
          %vm988 = vcmp.lt.s32.totalorder %v987, %v331
          %v989 = vsel %vm988, 1, 0
          %990 = vset.pattern.permute.xlu0 0
          %991 = vperm.xlu0 %990, %v989
          %v992 = vpop.permute.xlu0 %991
          %vm993 = vcmp.eq.s32.totalorder %v992, 1
          %v994 = vsel %vm993, %v985, %v868
          %v995 = vsel %vm993, %v983, %v869
          %v996 = vsel %vm993, %v985, 0.0
          %v997 = vpack.c.bf16 %v996, %v996
          %s998 = scalar_lea.vmem %s276, 12 [#allocation9]
          %999 = vst [vmem:[%s998] sm:$0xf] %v997
          %1000 = vst [vmem:[#allocation2] sm:$0xff] %v994
          %1001 = vst [vmem:[#allocation3] sm:$0xff] %v995
        $region48: #{tpu_custom_call.1} parent=31 // pred_fallthru
          _
        %p1002 = scmp.eq.s32.totalorder %s30, 1
        // Predicated region
        $region49: #{tpu_custom_call.1} parent=31 // pred_check
          %p1003 = pneg %p1002
        $region50: #{tpu_custom_call.1} parent=31 // pred_check_branch
          %1005 = sbr.rel (%p1003) target = $region52
        $region51: #{tpu_custom_call.1} parent=31 // pred_region
          %s1006 = ssub.s32 1, %s31
          %s1007 = smul.u32 %s1006, 4
          %v1008 = vld [vmem:[#allocation2] sm:$0xff]
          %v1009 = vld [vmem:[#allocation3] sm:$0xff]
          %s1010 = scalar_lea.vmem %s250, 48 [#allocation4]
          %v1011 = vld [vmem:[%s1010] sm:$0xff]
          %v1012 = vld [vmem:[%s1010 + $0x8] sm:$0xff]
          %v1013 = vunpack.c.l.bf16 %v1011
          %v1014 = vunpack.c.h.bf16 %v1011
          %v1015 = vunpack.c.l.bf16 %v1012
          %v1016 = vunpack.c.h.bf16 %v1012
          %v1017 = vpack.c.bf16 %v1008, %v1008
          %v1050 = vunpack.c.l.b16 %v299
          %v1051 = vunpack.c.h.b16 %v299
          %v1052 = vunpack.c.l.b16 %v300
          %v1053 = vunpack.c.h.b16 %v300
          %v1054 = vunpack.c.l.b16 %v301
          %v1055 = vunpack.c.h.b16 %v301
          %v1056 = vunpack.c.l.b16 %v302
          %v1057 = vunpack.c.h.b16 %v302
          %v1058 = vunpack.c.l.b16 %v303
          %v1059 = vunpack.c.h.b16 %v303
          %v1060 = vunpack.c.l.b16 %v304
          %v1061 = vunpack.c.h.b16 %v304
          %v1062 = vunpack.c.l.b16 %v305
          %v1063 = vunpack.c.h.b16 %v305
          %v1064 = vunpack.c.l.b16 %v306
          %v1065 = vunpack.c.h.b16 %v306
          %v1066 = vunpack.c.l.b16 %v307
          %v1067 = vunpack.c.h.b16 %v307
          %v1068 = vunpack.c.l.b16 %v308
          %v1069 = vunpack.c.h.b16 %v308
          %v1070 = vunpack.c.l.b16 %v309
          %v1071 = vunpack.c.h.b16 %v309
          %v1072 = vunpack.c.l.b16 %v310
          %v1073 = vunpack.c.h.b16 %v310
          %v1074 = vunpack.c.l.b16 %v311
          %v1075 = vunpack.c.h.b16 %v311
          %v1076 = vunpack.c.l.b16 %v312
          %v1077 = vunpack.c.h.b16 %v312
          %v1078 = vunpack.c.l.b16 %v313
          %v1079 = vunpack.c.h.b16 %v313
          %v1080 = vunpack.c.l.b16 %v314
          %v1081 = vunpack.c.h.b16 %v314
          %v1082 = vunpack.c.l.b16 %v315
          %v1083 = vunpack.c.h.b16 %v315
          %v1084 = vunpack.c.l.b16 %v316
          %v1085 = vunpack.c.h.b16 %v316
          %v1086 = vunpack.c.l.b16 %v317
          %v1087 = vunpack.c.h.b16 %v317
          %v1088 = vunpack.c.l.b16 %v318
          %v1089 = vunpack.c.h.b16 %v318
          %v1090 = vunpack.c.l.b16 %v319
          %v1091 = vunpack.c.h.b16 %v319
          %v1092 = vunpack.c.l.b16 %v320
          %v1093 = vunpack.c.h.b16 %v320
          %v1094 = vunpack.c.l.b16 %v321
          %v1095 = vunpack.c.h.b16 %v321
          %v1096 = vunpack.c.l.b16 %v322
          %v1097 = vunpack.c.h.b16 %v322
          %v1098 = vunpack.c.l.b16 %v323
          %v1099 = vunpack.c.h.b16 %v323
          %v1100 = vunpack.c.l.b16 %v324
          %v1101 = vunpack.c.h.b16 %v324
          %v1102 = vunpack.c.l.b16 %v325
          %v1103 = vunpack.c.h.b16 %v325
          %v1104 = vunpack.c.l.b16 %v326
          %v1105 = vunpack.c.h.b16 %v326
          %v1106 = vunpack.c.l.b16 %v327
          %v1107 = vunpack.c.h.b16 %v327
          %v1108 = vunpack.c.l.b16 %v328
          %v1109 = vunpack.c.h.b16 %v328
          %v1110 = vunpack.c.l.b16 %v329
          %v1111 = vunpack.c.h.b16 %v329
          %v1112 = vunpack.c.l.b16 %v330
          %v1113 = vunpack.c.h.b16 %v330
          %v1114 = vpack.c.b16 %v1054, %v1050
          %v1115 = vpack.c.b16 %v1055, %v1051
          %v1116 = vpack.c.b16 %v1056, %v1052
          %v1117 = vpack.c.b16 %v1057, %v1053
          %v1118 = vpack.c.b16 %v1062, %v1058
          %v1119 = vpack.c.b16 %v1063, %v1059
          %v1120 = vpack.c.b16 %v1064, %v1060
          %v1121 = vpack.c.b16 %v1065, %v1061
          %v1122 = vpack.c.b16 %v1070, %v1066
          %v1123 = vpack.c.b16 %v1071, %v1067
          %v1124 = vpack.c.b16 %v1072, %v1068
          %v1125 = vpack.c.b16 %v1073, %v1069
          %v1126 = vpack.c.b16 %v1078, %v1074
          %v1127 = vpack.c.b16 %v1079, %v1075
          %v1128 = vpack.c.b16 %v1080, %v1076
          %v1129 = vpack.c.b16 %v1081, %v1077
          %v1130 = vpack.c.b16 %v1086, %v1082
          %v1131 = vpack.c.b16 %v1087, %v1083
          %v1132 = vpack.c.b16 %v1088, %v1084
          %v1133 = vpack.c.b16 %v1089, %v1085
          %v1134 = vpack.c.b16 %v1094, %v1090
          %v1135 = vpack.c.b16 %v1095, %v1091
          %v1136 = vpack.c.b16 %v1096, %v1092
          %v1137 = vpack.c.b16 %v1097, %v1093
          %v1138 = vpack.c.b16 %v1102, %v1098
          %v1139 = vpack.c.b16 %v1103, %v1099
          %v1140 = vpack.c.b16 %v1104, %v1100
          %v1141 = vpack.c.b16 %v1105, %v1101
          %v1142 = vpack.c.b16 %v1110, %v1106
          %v1143 = vpack.c.b16 %v1111, %v1107
          %v1144 = vpack.c.b16 %v1112, %v1108
          %v1145 = vpack.c.b16 %v1113, %v1109
          %1178 = vmatprep.subr.bf16.mxu0 %v1115
          %1179 = vmatpush1.bf16.msra.mxu0 %v1114
          %1180 = vmatprep.subr.bf16.mxu0 %v1119
          %1181 = vmatpush1.bf16.msra.mxu0 %v1118
          %1182 = vmatprep.subr.bf16.mxu0 %v1123
          %1183 = vmatpush1.bf16.msra.mxu0 %v1122
          %1184 = vmatprep.subr.bf16.mxu0 %v1127
          %1185 = vmatpush1.bf16.msra.mxu0 %v1126
          %1186 = vmatprep.subr.bf16.mxu0 %v1131
          %1187 = vmatpush1.bf16.msra.mxu0 %v1130
          %1188 = vmatprep.subr.bf16.mxu0 %v1135
          %1189 = vmatpush1.bf16.msra.mxu0 %v1134
          %1190 = vmatprep.subr.bf16.mxu0 %v1139
          %1191 = vmatpush1.bf16.msra.mxu0 %v1138
          %1192 = vmatprep.subr.bf16.mxu0 %v1143
          %1193 = vmatpush1.bf16.msra.mxu0 %v1142
          %1194 = vmatprep.subr.bf16.mxu0 0
          %1195 = vmatpush1.bf16.msra.mxu0 0
          %1196 = vmatprep.subr.bf16.mxu0 0
          %1197 = vmatpush1.bf16.msra.mxu0 0
          %1198 = vmatprep.subr.bf16.mxu0 0
          %1199 = vmatpush1.bf16.msra.mxu0 0
          %1200 = vmatprep.subr.bf16.mxu0 0
          %1201 = vmatpush1.bf16.msra.mxu0 0
          %1202 = vmatprep.subr.bf16.mxu0 0
          %1203 = vmatpush1.bf16.msra.mxu0 0
          %1204 = vmatprep.subr.bf16.mxu0 0
          %1205 = vmatpush1.bf16.msra.mxu0 0
          %1206 = vmatprep.subr.bf16.mxu0 0
          %1207 = vmatpush1.bf16.msra.mxu0 0
          %1208 = vmatprep.subr.bf16.mxu0 0
          %1209 = vmatpush1.bf16.msra.mxu0 0
          %1210 = vmatprep.mubr.bf16.mxu0 0
          %1211 = vmatmul.mubr.bf16.gmra.mrb[0].mxu0 %v1017
          %v1212 = vpop.f32.mrb[0].mxu0
          %v1213 = vadd.f32 0.0, %v1212
          %v1214 = vpop.f32.mrb[0].mxu0
          %v1215 = vadd.f32 0.0, %v1214
          %v1216 = vpop.f32.mrb[0].mxu0
          %v1217 = vpop.f32.mrb[0].mxu0
          %1218 = vdwg.mxu0
          %1219 = vmatprep.subr.bf16.mxu0 %v1117
          %1220 = vmatpush1.bf16.msra.mxu0 %v1116
          %1221 = vmatprep.subr.bf16.mxu0 %v1121
          %1222 = vmatpush1.bf16.msra.mxu0 %v1120
          %1223 = vmatprep.subr.bf16.mxu0 %v1125
          %1224 = vmatpush1.bf16.msra.mxu0 %v1124
          %1225 = vmatprep.subr.bf16.mxu0 %v1129
          %1226 = vmatpush1.bf16.msra.mxu0 %v1128
          %1227 = vmatprep.subr.bf16.mxu0 %v1133
          %1228 = vmatpush1.bf16.msra.mxu0 %v1132
          %1229 = vmatprep.subr.bf16.mxu0 %v1137
          %1230 = vmatpush1.bf16.msra.mxu0 %v1136
          %1231 = vmatprep.subr.bf16.mxu0 %v1141
          %1232 = vmatpush1.bf16.msra.mxu0 %v1140
          %1233 = vmatprep.subr.bf16.mxu0 %v1145
          %1234 = vmatpush1.bf16.msra.mxu0 %v1144
          %1235 = vmatprep.subr.bf16.mxu0 0
          %1236 = vmatpush1.bf16.msra.mxu0 0
          %1237 = vmatprep.subr.bf16.mxu0 0
          %1238 = vmatpush1.bf16.msra.mxu0 0
          %1239 = vmatprep.subr.bf16.mxu0 0
          %1240 = vmatpush1.bf16.msra.mxu0 0
          %1241 = vmatprep.subr.bf16.mxu0 0
          %1242 = vmatpush1.bf16.msra.mxu0 0
          %1243 = vmatprep.subr.bf16.mxu0 0
          %1244 = vmatpush1.bf16.msra.mxu0 0
          %1245 = vmatprep.subr.bf16.mxu0 0
          %1246 = vmatpush1.bf16.msra.mxu0 0
          %1247 = vmatprep.subr.bf16.mxu0 0
          %1248 = vmatpush1.bf16.msra.mxu0 0
          %1249 = vmatprep.subr.bf16.mxu0 0
          %1250 = vmatpush1.bf16.msra.mxu0 0
          %1251 = vmatprep.mubr.bf16.mxu0 0
          %1252 = vmatmul.mubr.bf16.gmra.mrb[0].mxu0 %v1017
          %v1253 = vpop.f32.mrb[0].mxu0
          %v1254 = vadd.f32 0.0, %v1253
          %v1255 = vpop.f32.mrb[0].mxu0
          %v1256 = vadd.f32 0.0, %v1255
          %v1257 = vpop.f32.mrb[0].mxu0
          %v1258 = vpop.f32.mrb[0].mxu0
          %1259 = vdwg.mxu0
          %v1260 = vadd.f32 %v1013, %v1213
          %v1261 = vadd.f32 %v1014, %v1215
          %v1262 = vadd.f32 %v1015, %v1254
          %v1263 = vadd.f32 %v1016, %v1256
          %v1264 = vmul.f32 %v1260, 0.5
          %v1265 = vtanh.pop %v1264
          %v1266 = vmul.f32 %v1265, 0.5
          %v1267 = vadd.f32 %v1266, 0.5
          %v1268 = vmul.f32 %v1261, 0.5
          %v1269 = vtanh.pop %v1268
          %v1270 = vmul.f32 %v1269, 0.5
          %v1271 = vadd.f32 %v1270, 0.5
          %v1272 = vtanh.pop %v1262
          %v1273 = vmul.f32 %v1263, 0.5
          %v1274 = vtanh.pop %v1273
          %v1275 = vmul.f32 %v1274, 0.5
          %v1276 = vadd.f32 %v1275, 0.5
          %v1277 = vmul.f32 %v1271, %v1009
          %v1278 = vmul.f32 %v1267, %v1272
          %v1279 = vadd.f32 %v1277, %v1278
          %v1280 = vtanh.pop %v1279
          %v1281 = vmul.f32 %v1276, %v1280
          %s1282 = sadd.s32 %s1007, 3
          %v1283 = vstv %s1282
          %vm1284 = vcmp.lt.s32.totalorder %v1283, %v331
          %v1285 = vsel %vm1284, 1, 0
          %1286 = vset.pattern.permute.xlu0 0
          %1287 = vperm.xlu0 %1286, %v1285
          %v1288 = vpop.permute.xlu0 %1287
          %vm1289 = vcmp.eq.s32.totalorder %v1288, 1
          %v1290 = vsel %vm1289, %v1281, %v1008
          %v1291 = vsel %vm1289, %v1279, %v1009
          %v1292 = vsel %vm1289, %v1281, 0.0
          %v1293 = vpack.c.bf16 %v1292, %v1292
          %s1294 = scalar_lea.vmem %s276, 12 [#allocation9]
          %1295 = vst [vmem:[%s1294] sm:$0xf] %v1293
          %s1296 = scalar_lea.vmem %s250, 32 [#allocation4]
          %v1297 = vld [vmem:[%s1296] sm:$0xff]
          %v1298 = vld [vmem:[%s1296 + $0x8] sm:$0xff]
          %v1299 = vunpack.c.l.bf16 %v1297
          %v1300 = vunpack.c.h.bf16 %v1297
          %v1301 = vunpack.c.l.bf16 %v1298
          %v1302 = vunpack.c.h.bf16 %v1298
          %v1303 = vpack.c.bf16 %v1290, %v1290
          %1304 = vmatprep.subr.bf16.mxu0 %v1115
          %1305 = vmatpush1.bf16.msra.mxu0 %v1114
          %1306 = vmatprep.subr.bf16.mxu0 %v1119
          %1307 = vmatpush1.bf16.msra.mxu0 %v1118
          %1308 = vmatprep.subr.bf16.mxu0 %v1123
          %1309 = vmatpush1.bf16.msra.mxu0 %v1122
          %1310 = vmatprep.subr.bf16.mxu0 %v1127
          %1311 = vmatpush1.bf16.msra.mxu0 %v1126
          %1312 = vmatprep.subr.bf16.mxu0 %v1131
          %1313 = vmatpush1.bf16.msra.mxu0 %v1130
          %1314 = vmatprep.subr.bf16.mxu0 %v1135
          %1315 = vmatpush1.bf16.msra.mxu0 %v1134
          %1316 = vmatprep.subr.bf16.mxu0 %v1139
          %1317 = vmatpush1.bf16.msra.mxu0 %v1138
          %1318 = vmatprep.subr.bf16.mxu0 %v1143
          %1319 = vmatpush1.bf16.msra.mxu0 %v1142
          %1320 = vmatprep.subr.bf16.mxu0 0
          %1321 = vmatpush1.bf16.msra.mxu0 0
          %1322 = vmatprep.subr.bf16.mxu0 0
          %1323 = vmatpush1.bf16.msra.mxu0 0
          %1324 = vmatprep.subr.bf16.mxu0 0
          %1325 = vmatpush1.bf16.msra.mxu0 0
          %1326 = vmatprep.subr.bf16.mxu0 0
          %1327 = vmatpush1.bf16.msra.mxu0 0
          %1328 = vmatprep.subr.bf16.mxu0 0
          %1329 = vmatpush1.bf16.msra.mxu0 0
          %1330 = vmatprep.subr.bf16.mxu0 0
          %1331 = vmatpush1.bf16.msra.mxu0 0
          %1332 = vmatprep.subr.bf16.mxu0 0
          %1333 = vmatpush1.bf16.msra.mxu0 0
          %1334 = vmatprep.subr.bf16.mxu0 0
          %1335 = vmatpush1.bf16.msra.mxu0 0
          %1336 = vmatprep.mubr.bf16.mxu0 0
          %1337 = vmatmul.mubr.bf16.gmra.mrb[0].mxu0 %v1303
          %v1338 = vpop.f32.mrb[0].mxu0
          %v1339 = vadd.f32 0.0, %v1338
          %v1340 = vpop.f32.mrb[0].mxu0
          %v1341 = vadd.f32 0.0, %v1340
          %v1342 = vpop.f32.mrb[0].mxu0
          %v1343 = vpop.f32.mrb[0].mxu0
          %1344 = vdwg.mxu0
          %1345 = vmatprep.subr.bf16.mxu0 %v1117
          %1346 = vmatpush1.bf16.msra.mxu0 %v1116
          %1347 = vmatprep.subr.bf16.mxu0 %v1121
          %1348 = vmatpush1.bf16.msra.mxu0 %v1120
          %1349 = vmatprep.subr.bf16.mxu0 %v1125
          %1350 = vmatpush1.bf16.msra.mxu0 %v1124
          %1351 = vmatprep.subr.bf16.mxu0 %v1129
          %1352 = vmatpush1.bf16.msra.mxu0 %v1128
          %1353 = vmatprep.subr.bf16.mxu0 %v1133
          %1354 = vmatpush1.bf16.msra.mxu0 %v1132
          %1355 = vmatprep.subr.bf16.mxu0 %v1137
          %1356 = vmatpush1.bf16.msra.mxu0 %v1136
          %1357 = vmatprep.subr.bf16.mxu0 %v1141
          %1358 = vmatpush1.bf16.msra.mxu0 %v1140
          %1359 = vmatprep.subr.bf16.mxu0 %v1145
          %1360 = vmatpush1.bf16.msra.mxu0 %v1144
          %1361 = vmatprep.subr.bf16.mxu0 0
          %1362 = vmatpush1.bf16.msra.mxu0 0
          %1363 = vmatprep.subr.bf16.mxu0 0
          %1364 = vmatpush1.bf16.msra.mxu0 0
          %1365 = vmatprep.subr.bf16.mxu0 0
          %1366 = vmatpush1.bf16.msra.mxu0 0
          %1367 = vmatprep.subr.bf16.mxu0 0
          %1368 = vmatpush1.bf16.msra.mxu0 0
          %1369 = vmatprep.subr.bf16.mxu0 0
          %1370 = vmatpush1.bf16.msra.mxu0 0
          %1371 = vmatprep.subr.bf16.mxu0 0
          %1372 = vmatpush1.bf16.msra.mxu0 0
          %1373 = vmatprep.subr.bf16.mxu0 0
          %1374 = vmatpush1.bf16.msra.mxu0 0
          %1375 = vmatprep.subr.bf16.mxu0 0
          %1376 = vmatpush1.bf16.msra.mxu0 0
          %1377 = vmatprep.mubr.bf16.mxu0 0
          %1378 = vmatmul.mubr.bf16.gmra.mrb[0].mxu0 %v1303
          %v1379 = vpop.f32.mrb[0].mxu0
          %v1380 = vadd.f32 0.0, %v1379
          %v1381 = vpop.f32.mrb[0].mxu0
          %v1382 = vadd.f32 0.0, %v1381
          %v1383 = vpop.f32.mrb[0].mxu0
          %v1384 = vpop.f32.mrb[0].mxu0
          %1385 = vdwg.mxu0
          %v1386 = vadd.f32 %v1299, %v1339
          %v1387 = vadd.f32 %v1300, %v1341
          %v1388 = vadd.f32 %v1301, %v1380
          %v1389 = vadd.f32 %v1302, %v1382
          %v1390 = vmul.f32 %v1386, 0.5
          %v1391 = vtanh.pop %v1390
          %v1392 = vmul.f32 %v1391, 0.5
          %v1393 = vadd.f32 %v1392, 0.5
          %v1394 = vmul.f32 %v1387, 0.5
          %v1395 = vtanh.pop %v1394
          %v1396 = vmul.f32 %v1395, 0.5
          %v1397 = vadd.f32 %v1396, 0.5
          %v1398 = vtanh.pop %v1388
          %v1399 = vmul.f32 %v1389, 0.5
          %v1400 = vtanh.pop %v1399
          %v1401 = vmul.f32 %v1400, 0.5
          %v1402 = vadd.f32 %v1401, 0.5
          %v1403 = vmul.f32 %v1397, %v1291
          %v1404 = vmul.f32 %v1393, %v1398
          %v1405 = vadd.f32 %v1403, %v1404
          %v1406 = vtanh.pop %v1405
          %v1407 = vmul.f32 %v1402, %v1406
          %s1408 = sadd.s32 %s1007, 2
          %v1409 = vstv %s1408
          %vm1410 = vcmp.lt.s32.totalorder %v1409, %v331
          %v1411 = vsel %vm1410, 1, 0
          %1412 = vset.pattern.permute.xlu0 0
          %1413 = vperm.xlu0 %1412, %v1411
          %v1414 = vpop.permute.xlu0 %1413
          %vm1415 = vcmp.eq.s32.totalorder %v1414, 1
          %v1416 = vsel %vm1415, %v1407, %v1290
          %v1417 = vsel %vm1415, %v1405, %v1291
          %v1418 = vsel %vm1415, %v1407, 0.0
          %v1419 = vpack.c.bf16 %v1418, %v1418
          %s1420 = scalar_lea.vmem %s276, 8 [#allocation9]
          %1421 = vst [vmem:[%s1420] sm:$0xf] %v1419
          %s1422 = scalar_lea.vmem %s250, 16 [#allocation4]
          %v1423 = vld [vmem:[%s1422] sm:$0xff]
          %v1424 = vld [vmem:[%s1422 + $0x8] sm:$0xff]
          %v1425 = vunpack.c.l.bf16 %v1423
          %v1426 = vunpack.c.h.bf16 %v1423
          %v1427 = vunpack.c.l.bf16 %v1424
          %v1428 = vunpack.c.h.bf16 %v1424
          %v1429 = vpack.c.bf16 %v1416, %v1416
          %1430 = vmatprep.subr.bf16.mxu0 %v1115
          %1431 = vmatpush1.bf16.msra.mxu0 %v1114
          %1432 = vmatprep.subr.bf16.mxu0 %v1119
          %1433 = vmatpush1.bf16.msra.mxu0 %v1118
          %1434 = vmatprep.subr.bf16.mxu0 %v1123
          %1435 = vmatpush1.bf16.msra.mxu0 %v1122
          %1436 = vmatprep.subr.bf16.mxu0 %v1127
          %1437 = vmatpush1.bf16.msra.mxu0 %v1126
          %1438 = vmatprep.subr.bf16.mxu0 %v1131
          %1439 = vmatpush1.bf16.msra.mxu0 %v1130
          %1440 = vmatprep.subr.bf16.mxu0 %v1135
          %1441 = vmatpush1.bf16.msra.mxu0 %v1134
          %1442 = vmatprep.subr.bf16.mxu0 %v1139
          %1443 = vmatpush1.bf16.msra.mxu0 %v1138
          %1444 = vmatprep.subr.bf16.mxu0 %v1143
          %1445 = vmatpush1.bf16.msra.mxu0 %v1142
          %1446 = vmatprep.subr.bf16.mxu0 0
          %1447 = vmatpush1.bf16.msra.mxu0 0
          %1448 = vmatprep.subr.bf16.mxu0 0
          %1449 = vmatpush1.bf16.msra.mxu0 0
          %1450 = vmatprep.subr.bf16.mxu0 0
          %1451 = vmatpush1.bf16.msra.mxu0 0
          %1452 = vmatprep.subr.bf16.mxu0 0
          %1453 = vmatpush1.bf16.msra.mxu0 0
          %1454 = vmatprep.subr.bf16.mxu0 0
          %1455 = vmatpush1.bf16.msra.mxu0 0
          %1456 = vmatprep.subr.bf16.mxu0 0
          %1457 = vmatpush1.bf16.msra.mxu0 0
          %1458 = vmatprep.subr.bf16.mxu0 0
          %1459 = vmatpush1.bf16.msra.mxu0 0
          %1460 = vmatprep.subr.bf16.mxu0 0
          %1461 = vmatpush1.bf16.msra.mxu0 0
          %1462 = vmatprep.mubr.bf16.mxu0 0
          %1463 = vmatmul.mubr.bf16.gmra.mrb[0].mxu0 %v1429
          %v1464 = vpop.f32.mrb[0].mxu0
          %v1465 = vadd.f32 0.0, %v1464
          %v1466 = vpop.f32.mrb[0].mxu0
          %v1467 = vadd.f32 0.0, %v1466
          %v1468 = vpop.f32.mrb[0].mxu0
          %v1469 = vpop.f32.mrb[0].mxu0
          %1470 = vdwg.mxu0
          %1471 = vmatprep.subr.bf16.mxu0 %v1117
          %1472 = vmatpush1.bf16.msra.mxu0 %v1116
          %1473 = vmatprep.subr.bf16.mxu0 %v1121
          %1474 = vmatpush1.bf16.msra.mxu0 %v1120
          %1475 = vmatprep.subr.bf16.mxu0 %v1125
          %1476 = vmatpush1.bf16.msra.mxu0 %v1124
          %1477 = vmatprep.subr.bf16.mxu0 %v1129
          %1478 = vmatpush1.bf16.msra.mxu0 %v1128
          %1479 = vmatprep.subr.bf16.mxu0 %v1133
          %1480 = vmatpush1.bf16.msra.mxu0 %v1132
          %1481 = vmatprep.subr.bf16.mxu0 %v1137
          %1482 = vmatpush1.bf16.msra.mxu0 %v1136
          %1483 = vmatprep.subr.bf16.mxu0 %v1141
          %1484 = vmatpush1.bf16.msra.mxu0 %v1140
          %1485 = vmatprep.subr.bf16.mxu0 %v1145
          %1486 = vmatpush1.bf16.msra.mxu0 %v1144
          %1487 = vmatprep.subr.bf16.mxu0 0
          %1488 = vmatpush1.bf16.msra.mxu0 0
          %1489 = vmatprep.subr.bf16.mxu0 0
          %1490 = vmatpush1.bf16.msra.mxu0 0
          %1491 = vmatprep.subr.bf16.mxu0 0
          %1492 = vmatpush1.bf16.msra.mxu0 0
          %1493 = vmatprep.subr.bf16.mxu0 0
          %1494 = vmatpush1.bf16.msra.mxu0 0
          %1495 = vmatprep.subr.bf16.mxu0 0
          %1496 = vmatpush1.bf16.msra.mxu0 0
          %1497 = vmatprep.subr.bf16.mxu0 0
          %1498 = vmatpush1.bf16.msra.mxu0 0
          %1499 = vmatprep.subr.bf16.mxu0 0
          %1500 = vmatpush1.bf16.msra.mxu0 0
          %1501 = vmatprep.subr.bf16.mxu0 0
          %1502 = vmatpush1.bf16.msra.mxu0 0
          %1503 = vmatprep.mubr.bf16.mxu0 0
          %1504 = vmatmul.mubr.bf16.gmra.mrb[0].mxu0 %v1429
          %v1505 = vpop.f32.mrb[0].mxu0
          %v1506 = vadd.f32 0.0, %v1505
          %v1507 = vpop.f32.mrb[0].mxu0
          %v1508 = vadd.f32 0.0, %v1507
          %v1509 = vpop.f32.mrb[0].mxu0
          %v1510 = vpop.f32.mrb[0].mxu0
          %1511 = vdwg.mxu0
          %v1512 = vadd.f32 %v1425, %v1465
          %v1513 = vadd.f32 %v1426, %v1467
          %v1514 = vadd.f32 %v1427, %v1506
          %v1515 = vadd.f32 %v1428, %v1508
          %v1516 = vmul.f32 %v1512, 0.5
          %v1517 = vtanh.pop %v1516
          %v1518 = vmul.f32 %v1517, 0.5
          %v1519 = vadd.f32 %v1518, 0.5
          %v1520 = vmul.f32 %v1513, 0.5
          %v1521 = vtanh.pop %v1520
          %v1522 = vmul.f32 %v1521, 0.5
          %v1523 = vadd.f32 %v1522, 0.5
          %v1524 = vtanh.pop %v1514
          %v1525 = vmul.f32 %v1515, 0.5
          %v1526 = vtanh.pop %v1525
          %v1527 = vmul.f32 %v1526, 0.5
          %v1528 = vadd.f32 %v1527, 0.5
          %v1529 = vmul.f32 %v1523, %v1417
          %v1530 = vmul.f32 %v1519, %v1524
          %v1531 = vadd.f32 %v1529, %v1530
          %v1532 = vtanh.pop %v1531
          %v1533 = vmul.f32 %v1528, %v1532
          %s1534 = sadd.s32 %s1007, 1
          %v1535 = vstv %s1534
          %vm1536 = vcmp.lt.s32.totalorder %v1535, %v331
          %v1537 = vsel %vm1536, 1, 0
          %1538 = vset.pattern.permute.xlu0 0
          %1539 = vperm.xlu0 %1538, %v1537
          %v1540 = vpop.permute.xlu0 %1539
          %vm1541 = vcmp.eq.s32.totalorder %v1540, 1
          %v1542 = vsel %vm1541, %v1533, %v1416
          %v1543 = vsel %vm1541, %v1531, %v1417
          %v1544 = vsel %vm1541, %v1533, 0.0
          %v1545 = vpack.c.bf16 %v1544, %v1544
          %s1546 = scalar_lea.vmem %s276, 4 [#allocation9]
          %1547 = vst [vmem:[%s1546] sm:$0xf] %v1545
          %v1548 = vld [vmem:[%s250] sm:$0xff]
          %v1549 = vld [vmem:[%s250 + $0x8] sm:$0xff]
          %v1550 = vunpack.c.l.bf16 %v1548
          %v1551 = vunpack.c.h.bf16 %v1548
          %v1552 = vunpack.c.l.bf16 %v1549
          %v1553 = vunpack.c.h.bf16 %v1549
          %v1554 = vpack.c.bf16 %v1542, %v1542
          %1555 = vmatprep.subr.bf16.mxu0 %v1115
          %1556 = vmatpush1.bf16.msra.mxu0 %v1114
          %1557 = vmatprep.subr.bf16.mxu0 %v1119
          %1558 = vmatpush1.bf16.msra.mxu0 %v1118
          %1559 = vmatprep.subr.bf16.mxu0 %v1123
          %1560 = vmatpush1.bf16.msra.mxu0 %v1122
          %1561 = vmatprep.subr.bf16.mxu0 %v1127
          %1562 = vmatpush1.bf16.msra.mxu0 %v1126
          %1563 = vmatprep.subr.bf16.mxu0 %v1131
          %1564 = vmatpush1.bf16.msra.mxu0 %v1130
          %1565 = vmatprep.subr.bf16.mxu0 %v1135
          %1566 = vmatpush1.bf16.msra.mxu0 %v1134
          %1567 = vmatprep.subr.bf16.mxu0 %v1139
          %1568 = vmatpush1.bf16.msra.mxu0 %v1138
          %1569 = vmatprep.subr.bf16.mxu0 %v1143
          %1570 = vmatpush1.bf16.msra.mxu0 %v1142
          %1571 = vmatprep.subr.bf16.mxu0 0
          %1572 = vmatpush1.bf16.msra.mxu0 0
          %1573 = vmatprep.subr.bf16.mxu0 0
          %1574 = vmatpush1.bf16.msra.mxu0 0
          %1575 = vmatprep.subr.bf16.mxu0 0
          %1576 = vmatpush1.bf16.msra.mxu0 0
          %1577 = vmatprep.subr.bf16.mxu0 0
          %1578 = vmatpush1.bf16.msra.mxu0 0
          %1579 = vmatprep.subr.bf16.mxu0 0
          %1580 = vmatpush1.bf16.msra.mxu0 0
          %1581 = vmatprep.subr.bf16.mxu0 0
          %1582 = vmatpush1.bf16.msra.mxu0 0
          %1583 = vmatprep.subr.bf16.mxu0 0
          %1584 = vmatpush1.bf16.msra.mxu0 0
          %1585 = vmatprep.subr.bf16.mxu0 0
          %1586 = vmatpush1.bf16.msra.mxu0 0
          %1587 = vmatprep.mubr.bf16.mxu0 0
          %1588 = vmatmul.mubr.bf16.gmra.mrb[0].mxu0 %v1554
          %v1589 = vpop.f32.mrb[0].mxu0
          %v1590 = vadd.f32 0.0, %v1589
          %v1591 = vpop.f32.mrb[0].mxu0
          %v1592 = vadd.f32 0.0, %v1591
          %v1593 = vpop.f32.mrb[0].mxu0
          %v1594 = vpop.f32.mrb[0].mxu0
          %1595 = vdwg.mxu0
          %1596 = vmatprep.subr.bf16.mxu0 %v1117
          %1597 = vmatpush1.bf16.msra.mxu0 %v1116
          %1598 = vmatprep.subr.bf16.mxu0 %v1121
          %1599 = vmatpush1.bf16.msra.mxu0 %v1120
          %1600 = vmatprep.subr.bf16.mxu0 %v1125
          %1601 = vmatpush1.bf16.msra.mxu0 %v1124
          %1602 = vmatprep.subr.bf16.mxu0 %v1129
          %1603 = vmatpush1.bf16.msra.mxu0 %v1128
          %1604 = vmatprep.subr.bf16.mxu0 %v1133
          %1605 = vmatpush1.bf16.msra.mxu0 %v1132
          %1606 = vmatprep.subr.bf16.mxu0 %v1137
          %1607 = vmatpush1.bf16.msra.mxu0 %v1136
          %1608 = vmatprep.subr.bf16.mxu0 %v1141
          %1609 = vmatpush1.bf16.msra.mxu0 %v1140
          %1610 = vmatprep.subr.bf16.mxu0 %v1145
          %1611 = vmatpush1.bf16.msra.mxu0 %v1144
          %1612 = vmatprep.subr.bf16.mxu0 0
          %1613 = vmatpush1.bf16.msra.mxu0 0
          %1614 = vmatprep.subr.bf16.mxu0 0
          %1615 = vmatpush1.bf16.msra.mxu0 0
          %1616 = vmatprep.subr.bf16.mxu0 0
          %1617 = vmatpush1.bf16.msra.mxu0 0
          %1618 = vmatprep.subr.bf16.mxu0 0
          %1619 = vmatpush1.bf16.msra.mxu0 0
          %1620 = vmatprep.subr.bf16.mxu0 0
          %1621 = vmatpush1.bf16.msra.mxu0 0
          %1622 = vmatprep.subr.bf16.mxu0 0
          %1623 = vmatpush1.bf16.msra.mxu0 0
          %1624 = vmatprep.subr.bf16.mxu0 0
          %1625 = vmatpush1.bf16.msra.mxu0 0
          %1626 = vmatprep.subr.bf16.mxu0 0
          %1627 = vmatpush1.bf16.msra.mxu0 0
          %1628 = vmatprep.mubr.bf16.mxu0 0
          %1629 = vmatmul.mubr.bf16.gmra.mrb[0].mxu0 %v1554
          %v1630 = vpop.f32.mrb[0].mxu0
          %v1631 = vadd.f32 0.0, %v1630
          %v1632 = vpop.f32.mrb[0].mxu0
          %v1633 = vadd.f32 0.0, %v1632
          %v1634 = vpop.f32.mrb[0].mxu0
          %v1635 = vpop.f32.mrb[0].mxu0
          %1636 = vdwg.mxu0
          %v1637 = vadd.f32 %v1550, %v1590
          %v1638 = vadd.f32 %v1551, %v1592
          %v1639 = vadd.f32 %v1552, %v1631
          %v1640 = vadd.f32 %v1553, %v1633
          %v1641 = vmul.f32 %v1637, 0.5
          %v1642 = vtanh.pop %v1641
          %v1643 = vmul.f32 %v1642, 0.5
          %v1644 = vadd.f32 %v1643, 0.5
          %v1645 = vmul.f32 %v1638, 0.5
          %v1646 = vtanh.pop %v1645
          %v1647 = vmul.f32 %v1646, 0.5
          %v1648 = vadd.f32 %v1647, 0.5
          %v1649 = vtanh.pop %v1639
          %v1650 = vmul.f32 %v1640, 0.5
          %v1651 = vtanh.pop %v1650
          %v1652 = vmul.f32 %v1651, 0.5
          %v1653 = vadd.f32 %v1652, 0.5
          %v1654 = vmul.f32 %v1648, %v1543
          %v1655 = vmul.f32 %v1644, %v1649
          %v1656 = vadd.f32 %v1654, %v1655
          %v1657 = vtanh.pop %v1656
          %v1658 = vmul.f32 %v1653, %v1657
          %v1659 = vstv %s1007
          %vm1660 = vcmp.lt.s32.totalorder %v1659, %v331
          %v1661 = vsel %vm1660, 1, 0
          %1662 = vset.pattern.permute.xlu0 0
          %1663 = vperm.xlu0 %1662, %v1661
          %v1664 = vpop.permute.xlu0 %1663
          %vm1665 = vcmp.eq.s32.totalorder %v1664, 1
          %v1666 = vsel %vm1665, %v1658, %v1542
          %v1667 = vsel %vm1665, %v1656, %v1543
          %v1668 = vsel %vm1665, %v1658, 0.0
          %v1669 = vpack.c.bf16 %v1668, %v1668
          %1670 = vst [vmem:[%s276] sm:$0xf] %v1669
          %1671 = vst [vmem:[#allocation2] sm:$0xff] %v1666
          %1672 = vst [vmem:[#allocation3] sm:$0xff] %v1667
        $region52: #{tpu_custom_call.1} parent=31 // pred_fallthru
          _
        %p1673 = scmp.eq.s32.totalorder %s31, 1
        // Predicated region
        $region53: #{tpu_custom_call.1} parent=31 // pred_check
          %p1674 = pneg %p1673
        $region54: #{tpu_custom_call.1} parent=31 // pred_check_branch
          %1676 = sbr.rel (%p1674) target = $region56
        $region55: #{tpu_custom_call.1} parent=31 // pred_region
          %v1677 = vld [vmem:[#allocation2] sm:$0xff]
          %1678 = vst [vmem:[%s283] sm:$0xff] %v1677
        $region56: #{tpu_custom_call.1} parent=31 // pred_fallthru
          _
        %s1679 = sand.u32 %s135, 1
        %s1680 = scalar_lea.sflag [#allocation6], %s1679
        %s1681 = sand.u32 %s135, 1
        %s1682 = smul.addr %s1681, 16
        %s1683 = scalar_lea.vmem [#allocation9], %s1682
        %s1684 = sand.u32 %s161, 1
        %s1685 = scalar_lea.sflag [#allocation11], %s1684
        %s1686 = sand.u32 %s161, 1
        %s1687 = smul.addr %s1686, 8
        %s1688 = scalar_lea.vmem [#allocation10], %s1687
        // Predicated region
        $region57: #{tpu_custom_call.1} parent=31 // pred_check
          %p1689 = pneg %p145
        $region58: #{tpu_custom_call.1} parent=31 // pred_check_branch
          %1691 = sbr.rel (%p1689) target = $region60
        $region59: #{tpu_custom_call.1} parent=31 // pred_region
          %p1692 = scmp.eq.s32.totalorder %s30, 1
          %s1693 = ssub.s32 1, %s31
          %s1694 = scalar_select %p1692, %s1693, %s31
          %s1695 = smul.u32 4, %s1694
          %s1697 = ssub.s32 256, 256
          %1698 = vsyncadd %s1680, %s1697
          %s1699 = smul.addr %s1695, 2
          %s1700 = sadd.s32 %s30, %s1699
          %s1701 = smul.addr %s1700, 64
          %s1702 = scalar_lea.hbm %s3, %s1701
          %s1703 = sshll.u32 %s1683, 4
          %s1704 = int_to_ptr.vmem [resolvable:$true] %s1703
          %1709 = dma.vmem_to_hbm [thread:$0]  %s1704, 256, %s1702, %s1680, 64, 128, 4
        $region60: #{tpu_custom_call.1} parent=31 // pred_fallthru
          _
        // Predicated region
        $region61: #{tpu_custom_call.1} parent=31 // pred_check
          %p1710 = pneg %p171
        $region62: #{tpu_custom_call.1} parent=31 // pred_check_branch
          %1712 = sbr.rel (%p1710) target = $region64
        $region63: #{tpu_custom_call.1} parent=31 // pred_region
          %s1714 = ssub.s32 128, 128
          %1715 = vsyncadd %s1685, %s1714
          %s1716 = smul.addr %s30, 128
          %s1717 = scalar_lea.hbm %s4, %s1716
          %s1719 = sshll.u32 %s1688, 4
          %s1720 = int_to_ptr.vmem [resolvable:$true] %s1719
          %1722 = dma.vmem_to_hbm [thread:$0]  %s1720, 128, %s1717, %s1685
        $region64: #{tpu_custom_call.1} parent=31 // pred_fallthru
          _
      $region32: #{tpu_custom_call.1} parent=5 // pred_fallthru
        _
      %p1723 = scmp.le.s32.totalorder 2, %s21
      // Predicated region
      $region65: #{tpu_custom_call.1} parent=5 // pred_check
        %p1724 = pneg %p1723
      $region66: #{tpu_custom_call.1} parent=5 // pred_check_branch
        %1726 = sbr.rel (%p1724) target = $region68
      $region67: #{tpu_custom_call.1} parent=5 // pred_region
        %s1727 = ssub.s32 %s21, 2
        // Predicated region
        $region69: #{tpu_custom_call.1} parent=67 // pred_check
          %p1728 = pneg %p151
        $region70: #{tpu_custom_call.1} parent=67 // pred_check_branch
          %1730 = sbr.rel (%p1728) target = $region72
        $region71: #{tpu_custom_call.1} parent=67 // pred_region
          %s1731 = sand.u32 %s136, 1
          %s1732 = scalar_lea.sflag [#allocation6], %s1731
          %s1733 = sand.u32 %s136, 1
          %s1734 = smul.addr %s1733, 16
          %s1735 = scalar_lea.vmem [#allocation9], %s1734
          %1736 = dma.done %s1732, 256
        $region72: #{tpu_custom_call.1} parent=67 // pred_fallthru
          _
        // Predicated region
        $region73: #{tpu_custom_call.1} parent=67 // pred_check
          %p1737 = pneg %p177
        $region74: #{tpu_custom_call.1} parent=67 // pred_check_branch
          %1739 = sbr.rel (%p1737) target = $region76
        $region75: #{tpu_custom_call.1} parent=67 // pred_region
          %s1740 = sand.u32 %s162, 1
          %s1741 = scalar_lea.sflag [#allocation11], %s1740
          %s1742 = sand.u32 %s162, 1
          %s1743 = smul.addr %s1742, 8
          %s1744 = scalar_lea.vmem [#allocation10], %s1743
          %1745 = dma.done %s1741, 128
        $region76: #{tpu_custom_call.1} parent=67 // pred_fallthru
          _
      $region68: #{tpu_custom_call.1} parent=5 // pred_fallthru
        _
    $region6: #{tpu_custom_call.1} parent=1 // loop_footer
      %s25 = sadd.s32 1, %s21
    $region7: #{tpu_custom_call.1} parent=1 // loop_footer_branch
      %20 = sbr.rel target = $region3
    $region8: #{tpu_custom_call.1} parent=1 // loop_exit
      _
    %1746 = vsyncpa [#allocation5], 1
    %s1747 = scalar_lea.sflag [#allocation5], 1
    %1748 = vsyncpa %s1747, 1
    %1749 = vsyncpa [#allocation8], 1
    %1750 = vsyncpa [#allocation6], 1
    %s1751 = scalar_lea.sflag [#allocation6], 1
    %1752 = vsyncpa %s1751, 1
    %1753 = vsyncpa [#allocation11], 1
    %s1754 = scalar_lea.sflag [#allocation11], 1
    %1755 = vsyncpa %s1754, 1

// kernel: tpu_custom_call.1
$region0: #{tpu_custom_call.1}
  #allocation0 [shape = 'u32[]', space=smem, size = 0x4, offset = 0x4, fixed_abs, tag = 'smem constant byte address 0x4 - core index']
  #allocation1 [shape = 'u32[144,128]{1,0:T(1,128)}', space=vmem, size = 0x12000, scoped, tag = 'internal scratch']
  #allocation2 [shape = 'f32[8,128]{1,0:T(8,128)}', space=vmem, size = 0x1000, scoped, tag = 'scratch operand']
  #allocation3 [shape = 'f32[8,128]{1,0:T(8,128)}', space=vmem, size = 0x1000, scoped, tag = 'scratch operand']
  %s0 = inlined_call_operand.hbm [shape: bf16[2,8,8,512], index: 0, kind: input, shape index: {}]
  %s1 = inlined_call_operand.hbm [shape: bf16[2,128,512], index: 1, kind: input, shape index: {}]
  %s2 = inlined_call_operand.vmem [shape: s32[8,1], index: 2, kind: input, shape index: {}]
  %s3 = inlined_call_operand.hbm [shape: bf16[8,8,256], index: 3, kind: output, shape index: {0}]
  %s4 = inlined_call_operand.hbm [shape: f32[2,8,128], index: 4, kind: output, shape index: {1}]
  %5 = xla_tuple %s3, %s4
  %s6 = sld [smem:[#allocation0]]
  $region77: #{tpu_custom_call.1} parent=0
    _
  %s8 = ssub.s32 1, %s6
  %s9 = scalar_select 0, %s8, %s6
  $region1: #{tpu_custom_call.1} parent=0
    #allocation4 [shape = 'u8[65536]{0}', space=vmem, size = 0x10000, scoped, tag = 'input window, operand 0']
    #allocation5 [shape = 's32[2]{0}', space=sflag, size = 0x8, scoped, tag = 'scoped memory for tpu_custom_call.1']
    #allocation6 [shape = 's32[2]{0}', space=sflag, size = 0x8, scoped, tag = 'scoped memory for tpu_custom_call.1']
    #allocation7 [shape = 'u8[262144]{0}', space=vmem, size = 0x40000, scoped, tag = 'input window, operand 1']
    #allocation8 [shape = 's32[2]{0}', space=sflag, size = 0x8, scoped, tag = 'scoped memory for tpu_custom_call.1']
    #allocation9 [shape = 'u8[16384]{0}', space=vmem, size = 0x4000, scoped, tag = 'output window, operand 0']
    #allocation10 [shape = 'u8[8192]{0}', space=vmem, size = 0x2000, scoped, tag = 'output window, operand 1']
    #allocation11 [shape = 's32[2]{0}', space=sflag, size = 0x8, scoped, tag = 'scoped memory for tpu_custom_call.1']
    %10 = vsyncpa [#allocation5], 0
    %s11 = scalar_lea.sflag [#allocation5], 1
    %12 = vsyncpa %s11, 0
    %13 = vsyncpa [#allocation8], 0
    %s14 = scalar_lea.sflag [#allocation8], 1
    %15 = vsyncpa %s14, 0
    %16 = vsyncpa [#allocation6], 0
    %s17 = scalar_lea.sflag [#allocation6], 1
    %18 = vsyncpa %s17, 0
    %19 = vsyncpa [#allocation11], 0
    %s20 = scalar_lea.sflag [#allocation11], 1
    %21 = vsyncpa %s20, 0
    loop: start=0, step=1, limit=6
    $region2: #{tpu_custom_call.1} parent=1 // loop_pre_header
      _
    $region3: #{tpu_custom_call.1} parent=1 // loop_header
      %s23 = sphi 0, %s27
      %p24 = scmp.ge.s32.totalorder %s23, 6
      %s30 = sphi 0, %s42
      %s31 = sphi 0, %s38
      %s32 = sphi 0, %s30
      %s33 = sphi 0, %s31
      %s34 = sphi 0, %s32
      %s35 = sphi 0, %s33
      %s53 = sphi 0, %s55
      %s56 = sphi 0, %s53
      %s57 = sphi 0, %s56
      %s73 = sphi 0, %s57
      %s79 = sphi 0, %s81
      %s82 = sphi 0, %s79
      %s83 = sphi 0, %s82
      %s99 = sphi 0, %s83
      %s103 = sphi 0, %s103
      %s105 = sphi 0, %s103
      %s106 = sphi 0, %s105
      %s120 = sphi 0, %s106
      %s134 = sphi 0, %s136
      %s137 = sphi 0, %s134
      %s138 = sphi 0, %s137
      %s154 = sphi 0, %s138
      %s160 = sphi 0, %s162
      %s163 = sphi 0, %s160
      %s164 = sphi 0, %s163
      %s180 = sphi 0, %s164
    $region4: #{tpu_custom_call.1} parent=1 // loop_header_branch
      %26 = sbr.rel (%p24) target = $region8
    $region5: #{tpu_custom_call.1} parent=1 // loop_body
      %s28 = ssub.s32 %s23, 1
      %s29 = ssub.s32 %s23, 2
      %s36 = sadd.s32 1, %s31
      %p37 = scmp.ge.s32.totalorder %s36, 2
      %s38 = scalar_select %p37, 0, %s36
      %s39 = sadd.s32 1, %s30
      %s40 = scalar_select %p37, %s39, %s30
      %p41 = scmp.ge.s32.totalorder %s40, 2
      %s42 = scalar_select %p41, 0, %s40
      %p43 = scmp.eq.s32.totalorder %s30, 1
      %s44 = ssub.s32 1, %s31
      %s45 = scalar_select %p43, %s44, %s31
      %p46 = scmp.eq.s32.totalorder %s42, 1
      %s47 = ssub.s32 1, %s38
      %s48 = scalar_select %p46, %s47, %s38
      %s49 = ssub.s32 %s30, %s42
      %s50 = ssub.s32 %s45, %s48
      %s51 = sor.u32 %s49, %s50
      %p52 = scmp.eq.s32.totalorder %s51, 0
      %s54 = sadd.s32 %s53, 1
      %s55 = scalar_select %p52, %s53, %s54
      %p58 = pneg %p52
      %p59 = scmp.eq.s32.totalorder %s23, 3
      %p60 = por %p58, %p59
      %p61 = scmp.ne.s32.totalorder %s53, %s56
      %p62 = scmp.eq.s32.totalorder %s23, 0
      %p63 = por %p61, %p62
      %p64 = scmp.ne.s32.totalorder %s53, %s56
      %p65 = scmp.eq.s32.totalorder %s28, 3
      %p66 = por %p64, %p65
      %p67 = scmp.ne.s32.totalorder %s56, %s57
      %p68 = scmp.eq.s32.totalorder %s28, 0
      %p69 = por %p67, %p68
      %p70 = scmp.ne.s32.totalorder %s56, %s57
      %p71 = scmp.eq.s32.totalorder %s29, 3
      %p72 = por %p70, %p71
      %p74 = scmp.ne.s32.totalorder %s57, %s73
      %p75 = scmp.eq.s32.totalorder %s29, 0
      %p76 = por %p74, %p75
      %s77 = ssub.s32 %s30, %s42
      %p78 = scmp.eq.s32.totalorder %s77, 0
      %s80 = sadd.s32 %s79, 1
      %s81 = scalar_select %p78, %s79, %s80
      %p84 = pneg %p78
      %p85 = scmp.eq.s32.totalorder %s23, 3
      %p86 = por %p84, %p85
      %p87 = scmp.ne.s32.totalorder %s79, %s82
      %p88 = scmp.eq.s32.totalorder %s23, 0
      %p89 = por %p87, %p88
      %p90 = scmp.ne.s32.totalorder %s79, %s82
      %p91 = scmp.eq.s32.totalorder %s28, 3
      %p92 = por %p90, %p91
      %p93 = scmp.ne.s32.totalorder %s82, %s83
      %p94 = scmp.eq.s32.totalorder %s28, 0
      %p95 = por %p93, %p94
      %p96 = scmp.ne.s32.totalorder %s82, %s83
      %p97 = scmp.eq.s32.totalorder %s29, 3
      %p98 = por %p96, %p97
      %p100 = scmp.ne.s32.totalorder %s83, %s99
      %p101 = scmp.eq.s32.totalorder %s29, 0
      %p102 = por %p100, %p101
      %s104 = sadd.s32 %s103, 1
      %p107 = scmp.eq.s32.totalorder %s23, 3
      %p108 = scmp.ne.s32.totalorder %s103, %s105
      %p109 = scmp.eq.s32.totalorder %s23, 0
      %p110 = por %p108, %p109
      %p111 = scmp.ne.s32.totalorder %s103, %s105
      %p112 = scmp.eq.s32.totalorder %s28, 3
      %p113 = por %p111, %p112
      %p114 = scmp.ne.s32.totalorder %s105, %s106
      %p115 = scmp.eq.s32.totalorder %s28, 0
      %p116 = por %p114, %p115
      %p117 = scmp.ne.s32.totalorder %s105, %s106
      %p118 = scmp.eq.s32.totalorder %s29, 3
      %p119 = por %p117, %p118
      %p121 = scmp.ne.s32.totalorder %s106, %s120
      %p122 = scmp.eq.s32.totalorder %s29, 0
      %p123 = por %p121, %p122
      %p124 = scmp.eq.s32.totalorder %s30, 1
      %s125 = ssub.s32 1, %s31
      %s126 = scalar_select %p124, %s125, %s31
      %p127 = scmp.eq.s32.totalorder %s42, 1
      %s128 = ssub.s32 1, %s38
      %s129 = scalar_select %p127, %s128, %s38
      %s130 = ssub.s32 %s126, %s129
      %s131 = ssub.s32 %s30, %s42
      %s132 = sor.u32 %s130, %s131
      %p133 = scmp.eq.s32.totalorder %s132, 0
      %s135 = sadd.s32 %s134, 1
      %s136 = scalar_select %p133, %s134, %s135
      %p139 = pneg %p133
      %p140 = scmp.eq.s32.totalorder %s23, 3
      %p141 = por %p139, %p140
      %p142 = scmp.ne.s32.totalorder %s134, %s137
      %p143 = scmp.eq.s32.totalorder %s23, 0
      %p144 = por %p142, %p143
      %p145 = scmp.ne.s32.totalorder %s134, %s137
      %p146 = scmp.eq.s32.totalorder %s28, 3
      %p147 = por %p145, %p146
      %p148 = scmp.ne.s32.totalorder %s137, %s138
      %p149 = scmp.eq.s32.totalorder %s28, 0
      %p150 = por %p148, %p149
      %p151 = scmp.ne.s32.totalorder %s137, %s138
      %p152 = scmp.eq.s32.totalorder %s29, 3
      %p153 = por %p151, %p152
      %p155 = scmp.ne.s32.totalorder %s138, %s154
      %p156 = scmp.eq.s32.totalorder %s29, 0
      %p157 = por %p155, %p156
      %s158 = ssub.s32 %s30, %s42
      %p159 = scmp.eq.s32.totalorder %s158, 0
      %s161 = sadd.s32 %s160, 1
      %s162 = scalar_select %p159, %s160, %s161
      %p165 = pneg %p159
      %p166 = scmp.eq.s32.totalorder %s23, 3
      %p167 = por %p165, %p166
      %p168 = scmp.ne.s32.totalorder %s160, %s163
      %p169 = scmp.eq.s32.totalorder %s23, 0
      %p170 = por %p168, %p169
      %p171 = scmp.ne.s32.totalorder %s160, %s163
      %p172 = scmp.eq.s32.totalorder %s28, 3
      %p173 = por %p171, %p172
      %p174 = scmp.ne.s32.totalorder %s163, %s164
      %p175 = scmp.eq.s32.totalorder %s28, 0
      %p176 = por %p174, %p175
      %p177 = scmp.ne.s32.totalorder %s163, %s164
      %p178 = scmp.eq.s32.totalorder %s29, 3
      %p179 = por %p177, %p178
      %p181 = scmp.ne.s32.totalorder %s164, %s180
      %p182 = scmp.eq.s32.totalorder %s29, 0
      %p183 = por %p181, %p182
      %p184 = scmp.le.s32.totalorder 1, %s23
      %p185 = scmp.lt.s32.totalorder %s23, 5
      %p186 = pnand %p184, %p185
      %p187 = pneg %p186
      // Predicated region
      $region9: #{tpu_custom_call.1} parent=5 // pred_check
        _
      $region10: #{tpu_custom_call.1} parent=5 // pred_check_branch
        %189 = sbr.rel (%p186) target = $region12
      $region11: #{tpu_custom_call.1} parent=5 // pred_region
        %s190 = ssub.s32 %s23, 1
        // Predicated region
        $region13: #{tpu_custom_call.1} parent=11 // pred_check
          %p191 = pneg %p116
        $region14: #{tpu_custom_call.1} parent=11 // pred_check_branch
          %193 = sbr.rel (%p191) target = $region16
        $region15: #{tpu_custom_call.1} parent=11 // pred_region
          _
        $region16: #{tpu_custom_call.1} parent=11 // pred_fallthru
          _
      $region12: #{tpu_custom_call.1} parent=5 // pred_fallthru
        _
      %p194 = scmp.lt.s32.totalorder %s23, 4
      // Predicated region
      $region17: #{tpu_custom_call.1} parent=5 // pred_check
        %p195 = pneg %p194
      $region18: #{tpu_custom_call.1} parent=5 // pred_check_branch
        %197 = sbr.rel (%p195) target = $region20
      $region19: #{tpu_custom_call.1} parent=5 // pred_region
        // Predicated region
        $region21: #{tpu_custom_call.1} parent=19 // pred_check
          %p198 = pneg %p63
        $region22: #{tpu_custom_call.1} parent=19 // pred_check_branch
          %200 = sbr.rel (%p198) target = $region24
        $region23: #{tpu_custom_call.1} parent=19 // pred_region
          %s201 = sand.u32 %s53, 1
          %s202 = scalar_lea.sflag [#allocation5], %s201
          %s203 = sand.u32 %s53, 1
          %s204 = smul.addr %s203, 64
          %s205 = scalar_lea.vmem [#allocation4], %s204
          %p206 = scmp.eq.s32.totalorder %s30, 1
          %s207 = ssub.s32 1, %s31
          %s208 = scalar_select %p206, %s207, %s31
          %s209 = smul.u32 4, %s208
          %s211 = ssub.s32 1024, 1024
          %212 = vsyncadd %s202, %s211
          %s213 = smul.addr %s209, 4
          %s214 = smul.addr %s30, 32
          %s215 = sadd.s32 %s213, %s214
          %s216 = smul.addr %s215, 64
          %s217 = scalar_lea.hbm %s0, %s216
          %s218 = sshll.u32 %s205, 4
          %s219 = int_to_ptr.vmem [resolvable:$true] %s218
          %224 = dma.hbm_to_vmem [thread:$0]  %s217, 1024, %s219, %s202, 256, 256, 16
        $region24: #{tpu_custom_call.1} parent=19 // pred_fallthru
          _
        // Predicated region
        $region25: #{tpu_custom_call.1} parent=19 // pred_check
          %p225 = pneg %p89
        $region26: #{tpu_custom_call.1} parent=19 // pred_check_branch
          %227 = sbr.rel (%p225) target = $region28
        $region27: #{tpu_custom_call.1} parent=19 // pred_region
          %s228 = sand.u32 %s79, 1
          %s229 = scalar_lea.sflag [#allocation8], %s228
          %s230 = sand.u32 %s79, 1
          %s231 = smul.addr %s230, 256
          %s232 = scalar_lea.vmem [#allocation7], %s231
          %s234 = ssub.s32 4096, 4096
          %235 = vsyncadd %s229, %s234
          %s236 = smul.addr %s30, 64
          %s237 = smul.addr %s236, 64
          %s238 = scalar_lea.hbm %s1, %s237
          %s239 = sshll.u32 %s232, 4
          %s240 = int_to_ptr.vmem [resolvable:$true] %s239
          %245 = dma.hbm_to_vmem [thread:$0]  %s238, 4096, %s240, %s229, 256, 256, 16
        $region28: #{tpu_custom_call.1} parent=19 // pred_fallthru
          _
      $region20: #{tpu_custom_call.1} parent=5 // pred_fallthru
        _
      %p246 = scmp.le.s32.totalorder 1, %s23
      %p247 = scmp.lt.s32.totalorder %s23, 5
      %p248 = pnand %p246, %p247
      %p249 = pneg %p248
      // Predicated region
      $region29: #{tpu_custom_call.1} parent=5 // pred_check
        _
      $region30: #{tpu_custom_call.1} parent=5 // pred_check_branch
        %251 = sbr.rel (%p248) target = $region32
      $region31: #{tpu_custom_call.1} parent=5 // pred_region
        %s252 = ssub.s32 %s23, 1
        %s253 = sand.u32 %s56, 1
        %s254 = scalar_lea.sflag [#allocation5], %s253
        %s255 = sand.u32 %s56, 1
        %s256 = smul.addr %s255, 64
        %s257 = scalar_lea.vmem [#allocation4], %s256
        // Predicated region
        $region33: #{tpu_custom_call.1} parent=31 // pred_check
          %p258 = pneg %p69
        $region34: #{tpu_custom_call.1} parent=31 // pred_check_branch
          %260 = sbr.rel (%p258) target = $region36
        $region35: #{tpu_custom_call.1} parent=31 // pred_region
          %261 = dma.done %s254, 1024
        $region36: #{tpu_custom_call.1} parent=31 // pred_fallthru
          _
        %s262 = sand.u32 %s82, 1
        %s263 = scalar_lea.sflag [#allocation8], %s262
        %s264 = sand.u32 %s82, 1
        %s265 = smul.addr %s264, 256
        %s266 = scalar_lea.vmem [#allocation7], %s265
        // Predicated region
        $region37: #{tpu_custom_call.1} parent=31 // pred_check
          %p267 = pneg %p95
        $region38: #{tpu_custom_call.1} parent=31 // pred_check_branch
          %269 = sbr.rel (%p267) target = $region40
        $region39: #{tpu_custom_call.1} parent=31 // pred_region
          %270 = dma.done %s263, 4096
        $region40: #{tpu_custom_call.1} parent=31 // pred_fallthru
          _
        %s271 = sand.u32 %s56, 1
        %s272 = scalar_lea.sflag [#allocation5], %s271
        %s273 = sand.u32 %s56, 1
        %s274 = smul.addr %s273, 64
        %s275 = scalar_lea.vmem [#allocation4], %s274
        %p276 = pneg %p69
        %p277 = pneg %p66
        %s278 = sand.u32 %s82, 1
        %s279 = scalar_lea.sflag [#allocation8], %s278
        %s280 = sand.u32 %s82, 1
        %s281 = smul.addr %s280, 256
        %s282 = scalar_lea.vmem [#allocation7], %s281
        %p283 = pneg %p95
        %p284 = pneg %p92
        %p285 = pneg %p116
        %p286 = pneg %p113
        %p287 = pneg %p150
        %p288 = pneg %p147
        %s289 = sand.u32 %s137, 1
        %s290 = scalar_lea.sflag [#allocation6], %s289
        %s291 = sand.u32 %s137, 1
        %s292 = smul.addr %s291, 16
        %s293 = scalar_lea.vmem [#allocation9], %s292
        %p294 = pneg %p176
        %p295 = pneg %p173
        %s296 = sand.u32 %s163, 1
        %s297 = scalar_lea.sflag [#allocation11], %s296
        %s298 = sand.u32 %s163, 1
        %s299 = smul.addr %s298, 8
        %s300 = scalar_lea.vmem [#allocation10], %s299
        %p301 = scmp.eq.s32.totalorder %s32, 1
        %s302 = ssub.s32 1, %s33
        %s303 = scalar_select %p301, %s302, %s33
        %s304 = smul.u32 4, %s303
        %p305 = scmp.eq.s32.totalorder %s32, 1
        %s306 = ssub.s32 1, %s33
        %s307 = scalar_select %p305, %s306, %s33
        %s308 = smul.u32 4, %s307
        %p310 = scmp.eq.s32.totalorder %s33, 0
        // Predicated region
        $region41: #{tpu_custom_call.1} parent=31 // pred_check
          %p311 = pneg %p310
        $region42: #{tpu_custom_call.1} parent=31 // pred_check_branch
          %313 = sbr.rel (%p311) target = $region44
        $region43: #{tpu_custom_call.1} parent=31 // pred_region
          %314 = vst [vmem:[#allocation2] sm:$0xff] 0.0
          %315 = vst [vmem:[#allocation3] sm:$0xff] 0.0
        $region44: #{tpu_custom_call.1} parent=31 // pred_fallthru
          _
        %v316 = vld [vmem:[%s266] sm:$0xff]
        %v317 = vld [vmem:[%s266 + $0x8] sm:$0xff]
        %v318 = vld [vmem:[%s266 + $0x10] sm:$0xff]
        %v319 = vld [vmem:[%s266 + $0x18] sm:$0xff]
        %v320 = vld [vmem:[%s266 + $0x20] sm:$0xff]
        %v321 = vld [vmem:[%s266 + $0x28] sm:$0xff]
        %v322 = vld [vmem:[%s266 + $0x30] sm:$0xff]
        %v323 = vld [vmem:[%s266 + $0x38] sm:$0xff]
        %v324 = vld [vmem:[%s266 + $0x40] sm:$0xff]
        %v325 = vld [vmem:[%s266 + $0x48] sm:$0xff]
        %v326 = vld [vmem:[%s266 + $0x50] sm:$0xff]
        %v327 = vld [vmem:[%s266 + $0x58] sm:$0xff]
        %v328 = vld [vmem:[%s266 + $0x60] sm:$0xff]
        %v329 = vld [vmem:[%s266 + $0x68] sm:$0xff]
        %v330 = vld [vmem:[%s266 + $0x70] sm:$0xff]
        %v331 = vld [vmem:[%s266 + $0x78] sm:$0xff]
        %v332 = vld [vmem:[%s266 + $0x80] sm:$0xff]
        %v333 = vld [vmem:[%s266 + $0x88] sm:$0xff]
        %v334 = vld [vmem:[%s266 + $0x90] sm:$0xff]
        %v335 = vld [vmem:[%s266 + $0x98] sm:$0xff]
        %v336 = vld [vmem:[%s266 + $0xa0] sm:$0xff]
        %v337 = vld [vmem:[%s266 + $0xa8] sm:$0xff]
        %v338 = vld [vmem:[%s266 + $0xb0] sm:$0xff]
        %v339 = vld [vmem:[%s266 + $0xb8] sm:$0xff]
        %v340 = vld [vmem:[%s266 + $0xc0] sm:$0xff]
        %v341 = vld [vmem:[%s266 + $0xc8] sm:$0xff]
        %v342 = vld [vmem:[%s266 + $0xd0] sm:$0xff]
        %v343 = vld [vmem:[%s266 + $0xd8] sm:$0xff]
        %v344 = vld [vmem:[%s266 + $0xe0] sm:$0xff]
        %v345 = vld [vmem:[%s266 + $0xe8] sm:$0xff]
        %v346 = vld [vmem:[%s266 + $0xf0] sm:$0xff]
        %v347 = vld [vmem:[%s266 + $0xf8] sm:$0xff]
        %v348 = vld [vmem:[%s2] sm:$0xff]
        %p349 = scmp.eq.s32.totalorder %s32, 0
        // Predicated region
        $region45: #{tpu_custom_call.1} parent=31 // pred_check
          %p350 = pneg %p349
        $region46: #{tpu_custom_call.1} parent=31 // pred_check_branch
          %352 = sbr.rel (%p350) target = $region48
        $region47: #{tpu_custom_call.1} parent=31 // pred_region
          %s353 = smul.u32 %s33, 4
          %v354 = vld [vmem:[#allocation2] sm:$0xff]
          %v355 = vld [vmem:[#allocation3] sm:$0xff]
          %v356 = vld [vmem:[%s257] sm:$0xff]
          %v357 = vld [vmem:[%s257 + $0x8] sm:$0xff]
          %v358 = vunpack.c.l.bf16 %v356
          %v359 = vunpack.c.h.bf16 %v356
          %v360 = vunpack.c.l.bf16 %v357
          %v361 = vunpack.c.h.bf16 %v357
          %v362 = vpack.c.bf16 %v354, %v354
          %v395 = vunpack.c.l.b16 %v316
          %v396 = vunpack.c.h.b16 %v316
          %v397 = vunpack.c.l.b16 %v317
          %v398 = vunpack.c.h.b16 %v317
          %v399 = vunpack.c.l.b16 %v318
          %v400 = vunpack.c.h.b16 %v318
          %v401 = vunpack.c.l.b16 %v319
          %v402 = vunpack.c.h.b16 %v319
          %v403 = vunpack.c.l.b16 %v320
          %v404 = vunpack.c.h.b16 %v320
          %v405 = vunpack.c.l.b16 %v321
          %v406 = vunpack.c.h.b16 %v321
          %v407 = vunpack.c.l.b16 %v322
          %v408 = vunpack.c.h.b16 %v322
          %v409 = vunpack.c.l.b16 %v323
          %v410 = vunpack.c.h.b16 %v323
          %v411 = vunpack.c.l.b16 %v324
          %v412 = vunpack.c.h.b16 %v324
          %v413 = vunpack.c.l.b16 %v325
          %v414 = vunpack.c.h.b16 %v325
          %v415 = vunpack.c.l.b16 %v326
          %v416 = vunpack.c.h.b16 %v326
          %v417 = vunpack.c.l.b16 %v327
          %v418 = vunpack.c.h.b16 %v327
          %v419 = vunpack.c.l.b16 %v328
          %v420 = vunpack.c.h.b16 %v328
          %v421 = vunpack.c.l.b16 %v329
          %v422 = vunpack.c.h.b16 %v329
          %v423 = vunpack.c.l.b16 %v330
          %v424 = vunpack.c.h.b16 %v330
          %v425 = vunpack.c.l.b16 %v331
          %v426 = vunpack.c.h.b16 %v331
          %v427 = vunpack.c.l.b16 %v332
          %v428 = vunpack.c.h.b16 %v332
          %v429 = vunpack.c.l.b16 %v333
          %v430 = vunpack.c.h.b16 %v333
          %v431 = vunpack.c.l.b16 %v334
          %v432 = vunpack.c.h.b16 %v334
          %v433 = vunpack.c.l.b16 %v335
          %v434 = vunpack.c.h.b16 %v335
          %v435 = vunpack.c.l.b16 %v336
          %v436 = vunpack.c.h.b16 %v336
          %v437 = vunpack.c.l.b16 %v337
          %v438 = vunpack.c.h.b16 %v337
          %v439 = vunpack.c.l.b16 %v338
          %v440 = vunpack.c.h.b16 %v338
          %v441 = vunpack.c.l.b16 %v339
          %v442 = vunpack.c.h.b16 %v339
          %v443 = vunpack.c.l.b16 %v340
          %v444 = vunpack.c.h.b16 %v340
          %v445 = vunpack.c.l.b16 %v341
          %v446 = vunpack.c.h.b16 %v341
          %v447 = vunpack.c.l.b16 %v342
          %v448 = vunpack.c.h.b16 %v342
          %v449 = vunpack.c.l.b16 %v343
          %v450 = vunpack.c.h.b16 %v343
          %v451 = vunpack.c.l.b16 %v344
          %v452 = vunpack.c.h.b16 %v344
          %v453 = vunpack.c.l.b16 %v345
          %v454 = vunpack.c.h.b16 %v345
          %v455 = vunpack.c.l.b16 %v346
          %v456 = vunpack.c.h.b16 %v346
          %v457 = vunpack.c.l.b16 %v347
          %v458 = vunpack.c.h.b16 %v347
          %v459 = vpack.c.b16 %v399, %v395
          %v460 = vpack.c.b16 %v400, %v396
          %v461 = vpack.c.b16 %v401, %v397
          %v462 = vpack.c.b16 %v402, %v398
          %v463 = vpack.c.b16 %v407, %v403
          %v464 = vpack.c.b16 %v408, %v404
          %v465 = vpack.c.b16 %v409, %v405
          %v466 = vpack.c.b16 %v410, %v406
          %v467 = vpack.c.b16 %v415, %v411
          %v468 = vpack.c.b16 %v416, %v412
          %v469 = vpack.c.b16 %v417, %v413
          %v470 = vpack.c.b16 %v418, %v414
          %v471 = vpack.c.b16 %v423, %v419
          %v472 = vpack.c.b16 %v424, %v420
          %v473 = vpack.c.b16 %v425, %v421
          %v474 = vpack.c.b16 %v426, %v422
          %v475 = vpack.c.b16 %v431, %v427
          %v476 = vpack.c.b16 %v432, %v428
          %v477 = vpack.c.b16 %v433, %v429
          %v478 = vpack.c.b16 %v434, %v430
          %v479 = vpack.c.b16 %v439, %v435
          %v480 = vpack.c.b16 %v440, %v436
          %v481 = vpack.c.b16 %v441, %v437
          %v482 = vpack.c.b16 %v442, %v438
          %v483 = vpack.c.b16 %v447, %v443
          %v484 = vpack.c.b16 %v448, %v444
          %v485 = vpack.c.b16 %v449, %v445
          %v486 = vpack.c.b16 %v450, %v446
          %v487 = vpack.c.b16 %v455, %v451
          %v488 = vpack.c.b16 %v456, %v452
          %v489 = vpack.c.b16 %v457, %v453
          %v490 = vpack.c.b16 %v458, %v454
          %523 = vmatprep.subr.bf16.mxu0 %v460
          %524 = vmatpush1.bf16.msra.mxu0 %v459
          %525 = vmatprep.subr.bf16.mxu0 %v464
          %526 = vmatpush1.bf16.msra.mxu0 %v463
          %527 = vmatprep.subr.bf16.mxu0 %v468
          %528 = vmatpush1.bf16.msra.mxu0 %v467
          %529 = vmatprep.subr.bf16.mxu0 %v472
          %530 = vmatpush1.bf16.msra.mxu0 %v471
          %531 = vmatprep.subr.bf16.mxu0 %v476
          %532 = vmatpush1.bf16.msra.mxu0 %v475
          %533 = vmatprep.subr.bf16.mxu0 %v480
          %534 = vmatpush1.bf16.msra.mxu0 %v479
          %535 = vmatprep.subr.bf16.mxu0 %v484
          %536 = vmatpush1.bf16.msra.mxu0 %v483
          %537 = vmatprep.subr.bf16.mxu0 %v488
          %538 = vmatpush1.bf16.msra.mxu0 %v487
          %539 = vmatprep.subr.bf16.mxu0 0
          %540 = vmatpush1.bf16.msra.mxu0 0
          %541 = vmatprep.subr.bf16.mxu0 0
          %542 = vmatpush1.bf16.msra.mxu0 0
          %543 = vmatprep.subr.bf16.mxu0 0
          %544 = vmatpush1.bf16.msra.mxu0 0
          %545 = vmatprep.subr.bf16.mxu0 0
          %546 = vmatpush1.bf16.msra.mxu0 0
          %547 = vmatprep.subr.bf16.mxu0 0
          %548 = vmatpush1.bf16.msra.mxu0 0
          %549 = vmatprep.subr.bf16.mxu0 0
          %550 = vmatpush1.bf16.msra.mxu0 0
          %551 = vmatprep.subr.bf16.mxu0 0
          %552 = vmatpush1.bf16.msra.mxu0 0
          %553 = vmatprep.subr.bf16.mxu0 0
          %554 = vmatpush1.bf16.msra.mxu0 0
          %555 = vmatprep.mubr.bf16.mxu0 0
          %556 = vmatmul.mubr.bf16.gmra.mrb[0].mxu0 %v362
          %v557 = vpop.f32.mrb[0].mxu0
          %v558 = vadd.f32 0.0, %v557
          %v559 = vpop.f32.mrb[0].mxu0
          %v560 = vadd.f32 0.0, %v559
          %v561 = vpop.f32.mrb[0].mxu0
          %v562 = vpop.f32.mrb[0].mxu0
          %563 = vdwg.mxu0
          %564 = vmatprep.subr.bf16.mxu0 %v462
          %565 = vmatpush1.bf16.msra.mxu0 %v461
          %566 = vmatprep.subr.bf16.mxu0 %v466
          %567 = vmatpush1.bf16.msra.mxu0 %v465
          %568 = vmatprep.subr.bf16.mxu0 %v470
          %569 = vmatpush1.bf16.msra.mxu0 %v469
          %570 = vmatprep.subr.bf16.mxu0 %v474
          %571 = vmatpush1.bf16.msra.mxu0 %v473
          %572 = vmatprep.subr.bf16.mxu0 %v478
          %573 = vmatpush1.bf16.msra.mxu0 %v477
          %574 = vmatprep.subr.bf16.mxu0 %v482
          %575 = vmatpush1.bf16.msra.mxu0 %v481
          %576 = vmatprep.subr.bf16.mxu0 %v486
          %577 = vmatpush1.bf16.msra.mxu0 %v485
          %578 = vmatprep.subr.bf16.mxu0 %v490
          %579 = vmatpush1.bf16.msra.mxu0 %v489
          %580 = vmatprep.subr.bf16.mxu0 0
          %581 = vmatpush1.bf16.msra.mxu0 0
          %582 = vmatprep.subr.bf16.mxu0 0
          %583 = vmatpush1.bf16.msra.mxu0 0
          %584 = vmatprep.subr.bf16.mxu0 0
          %585 = vmatpush1.bf16.msra.mxu0 0
          %586 = vmatprep.subr.bf16.mxu0 0
          %587 = vmatpush1.bf16.msra.mxu0 0
          %588 = vmatprep.subr.bf16.mxu0 0
          %589 = vmatpush1.bf16.msra.mxu0 0
          %590 = vmatprep.subr.bf16.mxu0 0
          %591 = vmatpush1.bf16.msra.mxu0 0
          %592 = vmatprep.subr.bf16.mxu0 0
          %593 = vmatpush1.bf16.msra.mxu0 0
          %594 = vmatprep.subr.bf16.mxu0 0
          %595 = vmatpush1.bf16.msra.mxu0 0
          %596 = vmatprep.mubr.bf16.mxu0 0
          %597 = vmatmul.mubr.bf16.gmra.mrb[0].mxu0 %v362
          %v598 = vpop.f32.mrb[0].mxu0
          %v599 = vadd.f32 0.0, %v598
          %v600 = vpop.f32.mrb[0].mxu0
          %v601 = vadd.f32 0.0, %v600
          %v602 = vpop.f32.mrb[0].mxu0
          %v603 = vpop.f32.mrb[0].mxu0
          %604 = vdwg.mxu0
          %v605 = vadd.f32 %v358, %v558
          %v606 = vadd.f32 %v359, %v560
          %v607 = vadd.f32 %v360, %v599
          %v608 = vadd.f32 %v361, %v601
          %v609 = vmul.f32 %v605, 0.5
          %v610 = vtanh.pop %v609
          %v611 = vmul.f32 %v610, 0.5
          %v612 = vadd.f32 %v611, 0.5
          %v613 = vmul.f32 %v606, 0.5
          %v614 = vtanh.pop %v613
          %v615 = vmul.f32 %v614, 0.5
          %v616 = vadd.f32 %v615, 0.5
          %v617 = vtanh.pop %v607
          %v618 = vmul.f32 %v608, 0.5
          %v619 = vtanh.pop %v618
          %v620 = vmul.f32 %v619, 0.5
          %v621 = vadd.f32 %v620, 0.5
          %v622 = vmul.f32 %v616, %v355
          %v623 = vmul.f32 %v612, %v617
          %v624 = vadd.f32 %v622, %v623
          %v625 = vtanh.pop %v624
          %v626 = vmul.f32 %v621, %v625
          %v627 = vstv %s353
          %vm628 = vcmp.lt.s32.totalorder %v627, %v348
          %v629 = vsel %vm628, 1, 0
          %630 = vset.pattern.permute.xlu0 0
          %631 = vperm.xlu0 %630, %v629
          %v632 = vpop.permute.xlu0 %631
          %vm633 = vcmp.eq.s32.totalorder %v632, 1
          %v634 = vsel %vm633, %v626, %v354
          %v635 = vsel %vm633, %v624, %v355
          %v636 = vsel %vm633, %v626, 0.0
          %v637 = vpack.c.bf16 %v636, %v636
          %638 = vst [vmem:[%s293] sm:$0xf] %v637
          %s639 = scalar_lea.vmem %s257, 16 [#allocation4]
          %v640 = vld [vmem:[%s639] sm:$0xff]
          %v641 = vld [vmem:[%s639 + $0x8] sm:$0xff]
          %v642 = vunpack.c.l.bf16 %v640
          %v643 = vunpack.c.h.bf16 %v640
          %v644 = vunpack.c.l.bf16 %v641
          %v645 = vunpack.c.h.bf16 %v641
          %v646 = vpack.c.bf16 %v634, %v634
          %647 = vmatprep.subr.bf16.mxu0 %v460
          %648 = vmatpush1.bf16.msra.mxu0 %v459
          %649 = vmatprep.subr.bf16.mxu0 %v464
          %650 = vmatpush1.bf16.msra.mxu0 %v463
          %651 = vmatprep.subr.bf16.mxu0 %v468
          %652 = vmatpush1.bf16.msra.mxu0 %v467
          %653 = vmatprep.subr.bf16.mxu0 %v472
          %654 = vmatpush1.bf16.msra.mxu0 %v471
          %655 = vmatprep.subr.bf16.mxu0 %v476
          %656 = vmatpush1.bf16.msra.mxu0 %v475
          %657 = vmatprep.subr.bf16.mxu0 %v480
          %658 = vmatpush1.bf16.msra.mxu0 %v479
          %659 = vmatprep.subr.bf16.mxu0 %v484
          %660 = vmatpush1.bf16.msra.mxu0 %v483
          %661 = vmatprep.subr.bf16.mxu0 %v488
          %662 = vmatpush1.bf16.msra.mxu0 %v487
          %663 = vmatprep.subr.bf16.mxu0 0
          %664 = vmatpush1.bf16.msra.mxu0 0
          %665 = vmatprep.subr.bf16.mxu0 0
          %666 = vmatpush1.bf16.msra.mxu0 0
          %667 = vmatprep.subr.bf16.mxu0 0
          %668 = vmatpush1.bf16.msra.mxu0 0
          %669 = vmatprep.subr.bf16.mxu0 0
          %670 = vmatpush1.bf16.msra.mxu0 0
          %671 = vmatprep.subr.bf16.mxu0 0
          %672 = vmatpush1.bf16.msra.mxu0 0
          %673 = vmatprep.subr.bf16.mxu0 0
          %674 = vmatpush1.bf16.msra.mxu0 0
          %675 = vmatprep.subr.bf16.mxu0 0
          %676 = vmatpush1.bf16.msra.mxu0 0
          %677 = vmatprep.subr.bf16.mxu0 0
          %678 = vmatpush1.bf16.msra.mxu0 0
          %679 = vmatprep.mubr.bf16.mxu0 0
          %680 = vmatmul.mubr.bf16.gmra.mrb[0].mxu0 %v646
          %v681 = vpop.f32.mrb[0].mxu0
          %v682 = vadd.f32 0.0, %v681
          %v683 = vpop.f32.mrb[0].mxu0
          %v684 = vadd.f32 0.0, %v683
          %v685 = vpop.f32.mrb[0].mxu0
          %v686 = vpop.f32.mrb[0].mxu0
          %687 = vdwg.mxu0
          %688 = vmatprep.subr.bf16.mxu0 %v462
          %689 = vmatpush1.bf16.msra.mxu0 %v461
          %690 = vmatprep.subr.bf16.mxu0 %v466
          %691 = vmatpush1.bf16.msra.mxu0 %v465
          %692 = vmatprep.subr.bf16.mxu0 %v470
          %693 = vmatpush1.bf16.msra.mxu0 %v469
          %694 = vmatprep.subr.bf16.mxu0 %v474
          %695 = vmatpush1.bf16.msra.mxu0 %v473
          %696 = vmatprep.subr.bf16.mxu0 %v478
          %697 = vmatpush1.bf16.msra.mxu0 %v477
          %698 = vmatprep.subr.bf16.mxu0 %v482
          %699 = vmatpush1.bf16.msra.mxu0 %v481
          %700 = vmatprep.subr.bf16.mxu0 %v486
          %701 = vmatpush1.bf16.msra.mxu0 %v485
          %702 = vmatprep.subr.bf16.mxu0 %v490
          %703 = vmatpush1.bf16.msra.mxu0 %v489
          %704 = vmatprep.subr.bf16.mxu0 0
          %705 = vmatpush1.bf16.msra.mxu0 0
          %706 = vmatprep.subr.bf16.mxu0 0
          %707 = vmatpush1.bf16.msra.mxu0 0
          %708 = vmatprep.subr.bf16.mxu0 0
          %709 = vmatpush1.bf16.msra.mxu0 0
          %710 = vmatprep.subr.bf16.mxu0 0
          %711 = vmatpush1.bf16.msra.mxu0 0
          %712 = vmatprep.subr.bf16.mxu0 0
          %713 = vmatpush1.bf16.msra.mxu0 0
          %714 = vmatprep.subr.bf16.mxu0 0
          %715 = vmatpush1.bf16.msra.mxu0 0
          %716 = vmatprep.subr.bf16.mxu0 0
          %717 = vmatpush1.bf16.msra.mxu0 0
          %718 = vmatprep.subr.bf16.mxu0 0
          %719 = vmatpush1.bf16.msra.mxu0 0
          %720 = vmatprep.mubr.bf16.mxu0 0
          %721 = vmatmul.mubr.bf16.gmra.mrb[0].mxu0 %v646
          %v722 = vpop.f32.mrb[0].mxu0
          %v723 = vadd.f32 0.0, %v722
          %v724 = vpop.f32.mrb[0].mxu0
          %v725 = vadd.f32 0.0, %v724
          %v726 = vpop.f32.mrb[0].mxu0
          %v727 = vpop.f32.mrb[0].mxu0
          %728 = vdwg.mxu0
          %v729 = vadd.f32 %v642, %v682
          %v730 = vadd.f32 %v643, %v684
          %v731 = vadd.f32 %v644, %v723
          %v732 = vadd.f32 %v645, %v725
          %v733 = vmul.f32 %v729, 0.5
          %v734 = vtanh.pop %v733
          %v735 = vmul.f32 %v734, 0.5
          %v736 = vadd.f32 %v735, 0.5
          %v737 = vmul.f32 %v730, 0.5
          %v738 = vtanh.pop %v737
          %v739 = vmul.f32 %v738, 0.5
          %v740 = vadd.f32 %v739, 0.5
          %v741 = vtanh.pop %v731
          %v742 = vmul.f32 %v732, 0.5
          %v743 = vtanh.pop %v742
          %v744 = vmul.f32 %v743, 0.5
          %v745 = vadd.f32 %v744, 0.5
          %v746 = vmul.f32 %v740, %v635
          %v747 = vmul.f32 %v736, %v741
          %v748 = vadd.f32 %v746, %v747
          %v749 = vtanh.pop %v748
          %v750 = vmul.f32 %v745, %v749
          %s751 = sadd.s32 %s353, 1
          %v752 = vstv %s751
          %vm753 = vcmp.lt.s32.totalorder %v752, %v348
          %v754 = vsel %vm753, 1, 0
          %755 = vset.pattern.permute.xlu0 0
          %756 = vperm.xlu0 %755, %v754
          %v757 = vpop.permute.xlu0 %756
          %vm758 = vcmp.eq.s32.totalorder %v757, 1
          %v759 = vsel %vm758, %v750, %v634
          %v760 = vsel %vm758, %v748, %v635
          %v761 = vsel %vm758, %v750, 0.0
          %v762 = vpack.c.bf16 %v761, %v761
          %s763 = scalar_lea.vmem %s293, 4 [#allocation9]
          %764 = vst [vmem:[%s763] sm:$0xf] %v762
          %s765 = scalar_lea.vmem %s257, 32 [#allocation4]
          %v766 = vld [vmem:[%s765] sm:$0xff]
          %v767 = vld [vmem:[%s765 + $0x8] sm:$0xff]
          %v768 = vunpack.c.l.bf16 %v766
          %v769 = vunpack.c.h.bf16 %v766
          %v770 = vunpack.c.l.bf16 %v767
          %v771 = vunpack.c.h.bf16 %v767
          %v772 = vpack.c.bf16 %v759, %v759
          %773 = vmatprep.subr.bf16.mxu0 %v460
          %774 = vmatpush1.bf16.msra.mxu0 %v459
          %775 = vmatprep.subr.bf16.mxu0 %v464
          %776 = vmatpush1.bf16.msra.mxu0 %v463
          %777 = vmatprep.subr.bf16.mxu0 %v468
          %778 = vmatpush1.bf16.msra.mxu0 %v467
          %779 = vmatprep.subr.bf16.mxu0 %v472
          %780 = vmatpush1.bf16.msra.mxu0 %v471
          %781 = vmatprep.subr.bf16.mxu0 %v476
          %782 = vmatpush1.bf16.msra.mxu0 %v475
          %783 = vmatprep.subr.bf16.mxu0 %v480
          %784 = vmatpush1.bf16.msra.mxu0 %v479
          %785 = vmatprep.subr.bf16.mxu0 %v484
          %786 = vmatpush1.bf16.msra.mxu0 %v483
          %787 = vmatprep.subr.bf16.mxu0 %v488
          %788 = vmatpush1.bf16.msra.mxu0 %v487
          %789 = vmatprep.subr.bf16.mxu0 0
          %790 = vmatpush1.bf16.msra.mxu0 0
          %791 = vmatprep.subr.bf16.mxu0 0
          %792 = vmatpush1.bf16.msra.mxu0 0
          %793 = vmatprep.subr.bf16.mxu0 0
          %794 = vmatpush1.bf16.msra.mxu0 0
          %795 = vmatprep.subr.bf16.mxu0 0
          %796 = vmatpush1.bf16.msra.mxu0 0
          %797 = vmatprep.subr.bf16.mxu0 0
          %798 = vmatpush1.bf16.msra.mxu0 0
          %799 = vmatprep.subr.bf16.mxu0 0
          %800 = vmatpush1.bf16.msra.mxu0 0
          %801 = vmatprep.subr.bf16.mxu0 0
          %802 = vmatpush1.bf16.msra.mxu0 0
          %803 = vmatprep.subr.bf16.mxu0 0
          %804 = vmatpush1.bf16.msra.mxu0 0
          %805 = vmatprep.mubr.bf16.mxu0 0
          %806 = vmatmul.mubr.bf16.gmra.mrb[0].mxu0 %v772
          %v807 = vpop.f32.mrb[0].mxu0
          %v808 = vadd.f32 0.0, %v807
          %v809 = vpop.f32.mrb[0].mxu0
          %v810 = vadd.f32 0.0, %v809
          %v811 = vpop.f32.mrb[0].mxu0
          %v812 = vpop.f32.mrb[0].mxu0
          %813 = vdwg.mxu0
          %814 = vmatprep.subr.bf16.mxu0 %v462
          %815 = vmatpush1.bf16.msra.mxu0 %v461
          %816 = vmatprep.subr.bf16.mxu0 %v466
          %817 = vmatpush1.bf16.msra.mxu0 %v465
          %818 = vmatprep.subr.bf16.mxu0 %v470
          %819 = vmatpush1.bf16.msra.mxu0 %v469
          %820 = vmatprep.subr.bf16.mxu0 %v474
          %821 = vmatpush1.bf16.msra.mxu0 %v473
          %822 = vmatprep.subr.bf16.mxu0 %v478
          %823 = vmatpush1.bf16.msra.mxu0 %v477
          %824 = vmatprep.subr.bf16.mxu0 %v482
          %825 = vmatpush1.bf16.msra.mxu0 %v481
          %826 = vmatprep.subr.bf16.mxu0 %v486
          %827 = vmatpush1.bf16.msra.mxu0 %v485
          %828 = vmatprep.subr.bf16.mxu0 %v490
          %829 = vmatpush1.bf16.msra.mxu0 %v489
          %830 = vmatprep.subr.bf16.mxu0 0
          %831 = vmatpush1.bf16.msra.mxu0 0
          %832 = vmatprep.subr.bf16.mxu0 0
          %833 = vmatpush1.bf16.msra.mxu0 0
          %834 = vmatprep.subr.bf16.mxu0 0
          %835 = vmatpush1.bf16.msra.mxu0 0
          %836 = vmatprep.subr.bf16.mxu0 0
          %837 = vmatpush1.bf16.msra.mxu0 0
          %838 = vmatprep.subr.bf16.mxu0 0
          %839 = vmatpush1.bf16.msra.mxu0 0
          %840 = vmatprep.subr.bf16.mxu0 0
          %841 = vmatpush1.bf16.msra.mxu0 0
          %842 = vmatprep.subr.bf16.mxu0 0
          %843 = vmatpush1.bf16.msra.mxu0 0
          %844 = vmatprep.subr.bf16.mxu0 0
          %845 = vmatpush1.bf16.msra.mxu0 0
          %846 = vmatprep.mubr.bf16.mxu0 0
          %847 = vmatmul.mubr.bf16.gmra.mrb[0].mxu0 %v772
          %v848 = vpop.f32.mrb[0].mxu0
          %v849 = vadd.f32 0.0, %v848
          %v850 = vpop.f32.mrb[0].mxu0
          %v851 = vadd.f32 0.0, %v850
          %v852 = vpop.f32.mrb[0].mxu0
          %v853 = vpop.f32.mrb[0].mxu0
          %854 = vdwg.mxu0
          %v855 = vadd.f32 %v768, %v808
          %v856 = vadd.f32 %v769, %v810
          %v857 = vadd.f32 %v770, %v849
          %v858 = vadd.f32 %v771, %v851
          %v859 = vmul.f32 %v855, 0.5
          %v860 = vtanh.pop %v859
          %v861 = vmul.f32 %v860, 0.5
          %v862 = vadd.f32 %v861, 0.5
          %v863 = vmul.f32 %v856, 0.5
          %v864 = vtanh.pop %v863
          %v865 = vmul.f32 %v864, 0.5
          %v866 = vadd.f32 %v865, 0.5
          %v867 = vtanh.pop %v857
          %v868 = vmul.f32 %v858, 0.5
          %v869 = vtanh.pop %v868
          %v870 = vmul.f32 %v869, 0.5
          %v871 = vadd.f32 %v870, 0.5
          %v872 = vmul.f32 %v866, %v760
          %v873 = vmul.f32 %v862, %v867
          %v874 = vadd.f32 %v872, %v873
          %v875 = vtanh.pop %v874
          %v876 = vmul.f32 %v871, %v875
          %s877 = sadd.s32 %s353, 2
          %v878 = vstv %s877
          %vm879 = vcmp.lt.s32.totalorder %v878, %v348
          %v880 = vsel %vm879, 1, 0
          %881 = vset.pattern.permute.xlu0 0
          %882 = vperm.xlu0 %881, %v880
          %v883 = vpop.permute.xlu0 %882
          %vm884 = vcmp.eq.s32.totalorder %v883, 1
          %v885 = vsel %vm884, %v876, %v759
          %v886 = vsel %vm884, %v874, %v760
          %v887 = vsel %vm884, %v876, 0.0
          %v888 = vpack.c.bf16 %v887, %v887
          %s889 = scalar_lea.vmem %s293, 8 [#allocation9]
          %890 = vst [vmem:[%s889] sm:$0xf] %v888
          %s891 = scalar_lea.vmem %s257, 48 [#allocation4]
          %v892 = vld [vmem:[%s891] sm:$0xff]
          %v893 = vld [vmem:[%s891 + $0x8] sm:$0xff]
          %v894 = vunpack.c.l.bf16 %v892
          %v895 = vunpack.c.h.bf16 %v892
          %v896 = vunpack.c.l.bf16 %v893
          %v897 = vunpack.c.h.bf16 %v893
          %v898 = vpack.c.bf16 %v885, %v885
          %899 = vmatprep.subr.bf16.mxu0 %v460
          %900 = vmatpush1.bf16.msra.mxu0 %v459
          %901 = vmatprep.subr.bf16.mxu0 %v464
          %902 = vmatpush1.bf16.msra.mxu0 %v463
          %903 = vmatprep.subr.bf16.mxu0 %v468
          %904 = vmatpush1.bf16.msra.mxu0 %v467
          %905 = vmatprep.subr.bf16.mxu0 %v472
          %906 = vmatpush1.bf16.msra.mxu0 %v471
          %907 = vmatprep.subr.bf16.mxu0 %v476
          %908 = vmatpush1.bf16.msra.mxu0 %v475
          %909 = vmatprep.subr.bf16.mxu0 %v480
          %910 = vmatpush1.bf16.msra.mxu0 %v479
          %911 = vmatprep.subr.bf16.mxu0 %v484
          %912 = vmatpush1.bf16.msra.mxu0 %v483
          %913 = vmatprep.subr.bf16.mxu0 %v488
          %914 = vmatpush1.bf16.msra.mxu0 %v487
          %915 = vmatprep.subr.bf16.mxu0 0
          %916 = vmatpush1.bf16.msra.mxu0 0
          %917 = vmatprep.subr.bf16.mxu0 0
          %918 = vmatpush1.bf16.msra.mxu0 0
          %919 = vmatprep.subr.bf16.mxu0 0
          %920 = vmatpush1.bf16.msra.mxu0 0
          %921 = vmatprep.subr.bf16.mxu0 0
          %922 = vmatpush1.bf16.msra.mxu0 0
          %923 = vmatprep.subr.bf16.mxu0 0
          %924 = vmatpush1.bf16.msra.mxu0 0
          %925 = vmatprep.subr.bf16.mxu0 0
          %926 = vmatpush1.bf16.msra.mxu0 0
          %927 = vmatprep.subr.bf16.mxu0 0
          %928 = vmatpush1.bf16.msra.mxu0 0
          %929 = vmatprep.subr.bf16.mxu0 0
          %930 = vmatpush1.bf16.msra.mxu0 0
          %931 = vmatprep.mubr.bf16.mxu0 0
          %932 = vmatmul.mubr.bf16.gmra.mrb[0].mxu0 %v898
          %v933 = vpop.f32.mrb[0].mxu0
          %v934 = vadd.f32 0.0, %v933
          %v935 = vpop.f32.mrb[0].mxu0
          %v936 = vadd.f32 0.0, %v935
          %v937 = vpop.f32.mrb[0].mxu0
          %v938 = vpop.f32.mrb[0].mxu0
          %939 = vdwg.mxu0
          %940 = vmatprep.subr.bf16.mxu0 %v462
          %941 = vmatpush1.bf16.msra.mxu0 %v461
          %942 = vmatprep.subr.bf16.mxu0 %v466
          %943 = vmatpush1.bf16.msra.mxu0 %v465
          %944 = vmatprep.subr.bf16.mxu0 %v470
          %945 = vmatpush1.bf16.msra.mxu0 %v469
          %946 = vmatprep.subr.bf16.mxu0 %v474
          %947 = vmatpush1.bf16.msra.mxu0 %v473
          %948 = vmatprep.subr.bf16.mxu0 %v478
          %949 = vmatpush1.bf16.msra.mxu0 %v477
          %950 = vmatprep.subr.bf16.mxu0 %v482
          %951 = vmatpush1.bf16.msra.mxu0 %v481
          %952 = vmatprep.subr.bf16.mxu0 %v486
          %953 = vmatpush1.bf16.msra.mxu0 %v485
          %954 = vmatprep.subr.bf16.mxu0 %v490
          %955 = vmatpush1.bf16.msra.mxu0 %v489
          %956 = vmatprep.subr.bf16.mxu0 0
          %957 = vmatpush1.bf16.msra.mxu0 0
          %958 = vmatprep.subr.bf16.mxu0 0
          %959 = vmatpush1.bf16.msra.mxu0 0
          %960 = vmatprep.subr.bf16.mxu0 0
          %961 = vmatpush1.bf16.msra.mxu0 0
          %962 = vmatprep.subr.bf16.mxu0 0
          %963 = vmatpush1.bf16.msra.mxu0 0
          %964 = vmatprep.subr.bf16.mxu0 0
          %965 = vmatpush1.bf16.msra.mxu0 0
          %966 = vmatprep.subr.bf16.mxu0 0
          %967 = vmatpush1.bf16.msra.mxu0 0
          %968 = vmatprep.subr.bf16.mxu0 0
          %969 = vmatpush1.bf16.msra.mxu0 0
          %970 = vmatprep.subr.bf16.mxu0 0
          %971 = vmatpush1.bf16.msra.mxu0 0
          %972 = vmatprep.mubr.bf16.mxu0 0
          %973 = vmatmul.mubr.bf16.gmra.mrb[0].mxu0 %v898
          %v974 = vpop.f32.mrb[0].mxu0
          %v975 = vadd.f32 0.0, %v974
          %v976 = vpop.f32.mrb[0].mxu0
          %v977 = vadd.f32 0.0, %v976
          %v978 = vpop.f32.mrb[0].mxu0
          %v979 = vpop.f32.mrb[0].mxu0
          %980 = vdwg.mxu0
          %v981 = vadd.f32 %v894, %v934
          %v982 = vadd.f32 %v895, %v936
          %v983 = vadd.f32 %v896, %v975
          %v984 = vadd.f32 %v897, %v977
          %v985 = vmul.f32 %v981, 0.5
          %v986 = vtanh.pop %v985
          %v987 = vmul.f32 %v986, 0.5
          %v988 = vadd.f32 %v987, 0.5
          %v989 = vmul.f32 %v982, 0.5
          %v990 = vtanh.pop %v989
          %v991 = vmul.f32 %v990, 0.5
          %v992 = vadd.f32 %v991, 0.5
          %v993 = vtanh.pop %v983
          %v994 = vmul.f32 %v984, 0.5
          %v995 = vtanh.pop %v994
          %v996 = vmul.f32 %v995, 0.5
          %v997 = vadd.f32 %v996, 0.5
          %v998 = vmul.f32 %v992, %v886
          %v999 = vmul.f32 %v988, %v993
          %v1000 = vadd.f32 %v998, %v999
          %v1001 = vtanh.pop %v1000
          %v1002 = vmul.f32 %v997, %v1001
          %s1003 = sadd.s32 %s353, 3
          %v1004 = vstv %s1003
          %vm1005 = vcmp.lt.s32.totalorder %v1004, %v348
          %v1006 = vsel %vm1005, 1, 0
          %1007 = vset.pattern.permute.xlu0 0
          %1008 = vperm.xlu0 %1007, %v1006
          %v1009 = vpop.permute.xlu0 %1008
          %vm1010 = vcmp.eq.s32.totalorder %v1009, 1
          %v1011 = vsel %vm1010, %v1002, %v885
          %v1012 = vsel %vm1010, %v1000, %v886
          %v1013 = vsel %vm1010, %v1002, 0.0
          %v1014 = vpack.c.bf16 %v1013, %v1013
          %s1015 = scalar_lea.vmem %s293, 12 [#allocation9]
          %1016 = vst [vmem:[%s1015] sm:$0xf] %v1014
          %1017 = vst [vmem:[#allocation2] sm:$0xff] %v1011
          %1018 = vst [vmem:[#allocation3] sm:$0xff] %v1012
        $region48: #{tpu_custom_call.1} parent=31 // pred_fallthru
          _
        %p1019 = scmp.eq.s32.totalorder %s32, 1
        // Predicated region
        $region49: #{tpu_custom_call.1} parent=31 // pred_check
          %p1020 = pneg %p1019
        $region50: #{tpu_custom_call.1} parent=31 // pred_check_branch
          %1022 = sbr.rel (%p1020) target = $region52
        $region51: #{tpu_custom_call.1} parent=31 // pred_region
          %s1023 = ssub.s32 1, %s33
          %s1024 = smul.u32 %s1023, 4
          %v1025 = vld [vmem:[#allocation2] sm:$0xff]
          %v1026 = vld [vmem:[#allocation3] sm:$0xff]
          %s1027 = scalar_lea.vmem %s257, 48 [#allocation4]
          %v1028 = vld [vmem:[%s1027] sm:$0xff]
          %v1029 = vld [vmem:[%s1027 + $0x8] sm:$0xff]
          %v1030 = vunpack.c.l.bf16 %v1028
          %v1031 = vunpack.c.h.bf16 %v1028
          %v1032 = vunpack.c.l.bf16 %v1029
          %v1033 = vunpack.c.h.bf16 %v1029
          %v1034 = vpack.c.bf16 %v1025, %v1025
          %v1067 = vunpack.c.l.b16 %v316
          %v1068 = vunpack.c.h.b16 %v316
          %v1069 = vunpack.c.l.b16 %v317
          %v1070 = vunpack.c.h.b16 %v317
          %v1071 = vunpack.c.l.b16 %v318
          %v1072 = vunpack.c.h.b16 %v318
          %v1073 = vunpack.c.l.b16 %v319
          %v1074 = vunpack.c.h.b16 %v319
          %v1075 = vunpack.c.l.b16 %v320
          %v1076 = vunpack.c.h.b16 %v320
          %v1077 = vunpack.c.l.b16 %v321
          %v1078 = vunpack.c.h.b16 %v321
          %v1079 = vunpack.c.l.b16 %v322
          %v1080 = vunpack.c.h.b16 %v322
          %v1081 = vunpack.c.l.b16 %v323
          %v1082 = vunpack.c.h.b16 %v323
          %v1083 = vunpack.c.l.b16 %v324
          %v1084 = vunpack.c.h.b16 %v324
          %v1085 = vunpack.c.l.b16 %v325
          %v1086 = vunpack.c.h.b16 %v325
          %v1087 = vunpack.c.l.b16 %v326
          %v1088 = vunpack.c.h.b16 %v326
          %v1089 = vunpack.c.l.b16 %v327
          %v1090 = vunpack.c.h.b16 %v327
          %v1091 = vunpack.c.l.b16 %v328
          %v1092 = vunpack.c.h.b16 %v328
          %v1093 = vunpack.c.l.b16 %v329
          %v1094 = vunpack.c.h.b16 %v329
          %v1095 = vunpack.c.l.b16 %v330
          %v1096 = vunpack.c.h.b16 %v330
          %v1097 = vunpack.c.l.b16 %v331
          %v1098 = vunpack.c.h.b16 %v331
          %v1099 = vunpack.c.l.b16 %v332
          %v1100 = vunpack.c.h.b16 %v332
          %v1101 = vunpack.c.l.b16 %v333
          %v1102 = vunpack.c.h.b16 %v333
          %v1103 = vunpack.c.l.b16 %v334
          %v1104 = vunpack.c.h.b16 %v334
          %v1105 = vunpack.c.l.b16 %v335
          %v1106 = vunpack.c.h.b16 %v335
          %v1107 = vunpack.c.l.b16 %v336
          %v1108 = vunpack.c.h.b16 %v336
          %v1109 = vunpack.c.l.b16 %v337
          %v1110 = vunpack.c.h.b16 %v337
          %v1111 = vunpack.c.l.b16 %v338
          %v1112 = vunpack.c.h.b16 %v338
          %v1113 = vunpack.c.l.b16 %v339
          %v1114 = vunpack.c.h.b16 %v339
          %v1115 = vunpack.c.l.b16 %v340
          %v1116 = vunpack.c.h.b16 %v340
          %v1117 = vunpack.c.l.b16 %v341
          %v1118 = vunpack.c.h.b16 %v341
          %v1119 = vunpack.c.l.b16 %v342
          %v1120 = vunpack.c.h.b16 %v342
          %v1121 = vunpack.c.l.b16 %v343
          %v1122 = vunpack.c.h.b16 %v343
          %v1123 = vunpack.c.l.b16 %v344
          %v1124 = vunpack.c.h.b16 %v344
          %v1125 = vunpack.c.l.b16 %v345
          %v1126 = vunpack.c.h.b16 %v345
          %v1127 = vunpack.c.l.b16 %v346
          %v1128 = vunpack.c.h.b16 %v346
          %v1129 = vunpack.c.l.b16 %v347
          %v1130 = vunpack.c.h.b16 %v347
          %v1131 = vpack.c.b16 %v1071, %v1067
          %v1132 = vpack.c.b16 %v1072, %v1068
          %v1133 = vpack.c.b16 %v1073, %v1069
          %v1134 = vpack.c.b16 %v1074, %v1070
          %v1135 = vpack.c.b16 %v1079, %v1075
          %v1136 = vpack.c.b16 %v1080, %v1076
          %v1137 = vpack.c.b16 %v1081, %v1077
          %v1138 = vpack.c.b16 %v1082, %v1078
          %v1139 = vpack.c.b16 %v1087, %v1083
          %v1140 = vpack.c.b16 %v1088, %v1084
          %v1141 = vpack.c.b16 %v1089, %v1085
          %v1142 = vpack.c.b16 %v1090, %v1086
          %v1143 = vpack.c.b16 %v1095, %v1091
          %v1144 = vpack.c.b16 %v1096, %v1092
          %v1145 = vpack.c.b16 %v1097, %v1093
          %v1146 = vpack.c.b16 %v1098, %v1094
          %v1147 = vpack.c.b16 %v1103, %v1099
          %v1148 = vpack.c.b16 %v1104, %v1100
          %v1149 = vpack.c.b16 %v1105, %v1101
          %v1150 = vpack.c.b16 %v1106, %v1102
          %v1151 = vpack.c.b16 %v1111, %v1107
          %v1152 = vpack.c.b16 %v1112, %v1108
          %v1153 = vpack.c.b16 %v1113, %v1109
          %v1154 = vpack.c.b16 %v1114, %v1110
          %v1155 = vpack.c.b16 %v1119, %v1115
          %v1156 = vpack.c.b16 %v1120, %v1116
          %v1157 = vpack.c.b16 %v1121, %v1117
          %v1158 = vpack.c.b16 %v1122, %v1118
          %v1159 = vpack.c.b16 %v1127, %v1123
          %v1160 = vpack.c.b16 %v1128, %v1124
          %v1161 = vpack.c.b16 %v1129, %v1125
          %v1162 = vpack.c.b16 %v1130, %v1126
          %1195 = vmatprep.subr.bf16.mxu0 %v1132
          %1196 = vmatpush1.bf16.msra.mxu0 %v1131
          %1197 = vmatprep.subr.bf16.mxu0 %v1136
          %1198 = vmatpush1.bf16.msra.mxu0 %v1135
          %1199 = vmatprep.subr.bf16.mxu0 %v1140
          %1200 = vmatpush1.bf16.msra.mxu0 %v1139
          %1201 = vmatprep.subr.bf16.mxu0 %v1144
          %1202 = vmatpush1.bf16.msra.mxu0 %v1143
          %1203 = vmatprep.subr.bf16.mxu0 %v1148
          %1204 = vmatpush1.bf16.msra.mxu0 %v1147
          %1205 = vmatprep.subr.bf16.mxu0 %v1152
          %1206 = vmatpush1.bf16.msra.mxu0 %v1151
          %1207 = vmatprep.subr.bf16.mxu0 %v1156
          %1208 = vmatpush1.bf16.msra.mxu0 %v1155
          %1209 = vmatprep.subr.bf16.mxu0 %v1160
          %1210 = vmatpush1.bf16.msra.mxu0 %v1159
          %1211 = vmatprep.subr.bf16.mxu0 0
          %1212 = vmatpush1.bf16.msra.mxu0 0
          %1213 = vmatprep.subr.bf16.mxu0 0
          %1214 = vmatpush1.bf16.msra.mxu0 0
          %1215 = vmatprep.subr.bf16.mxu0 0
          %1216 = vmatpush1.bf16.msra.mxu0 0
          %1217 = vmatprep.subr.bf16.mxu0 0
          %1218 = vmatpush1.bf16.msra.mxu0 0
          %1219 = vmatprep.subr.bf16.mxu0 0
          %1220 = vmatpush1.bf16.msra.mxu0 0
          %1221 = vmatprep.subr.bf16.mxu0 0
          %1222 = vmatpush1.bf16.msra.mxu0 0
          %1223 = vmatprep.subr.bf16.mxu0 0
          %1224 = vmatpush1.bf16.msra.mxu0 0
          %1225 = vmatprep.subr.bf16.mxu0 0
          %1226 = vmatpush1.bf16.msra.mxu0 0
          %1227 = vmatprep.mubr.bf16.mxu0 0
          %1228 = vmatmul.mubr.bf16.gmra.mrb[0].mxu0 %v1034
          %v1229 = vpop.f32.mrb[0].mxu0
          %v1230 = vadd.f32 0.0, %v1229
          %v1231 = vpop.f32.mrb[0].mxu0
          %v1232 = vadd.f32 0.0, %v1231
          %v1233 = vpop.f32.mrb[0].mxu0
          %v1234 = vpop.f32.mrb[0].mxu0
          %1235 = vdwg.mxu0
          %1236 = vmatprep.subr.bf16.mxu0 %v1134
          %1237 = vmatpush1.bf16.msra.mxu0 %v1133
          %1238 = vmatprep.subr.bf16.mxu0 %v1138
          %1239 = vmatpush1.bf16.msra.mxu0 %v1137
          %1240 = vmatprep.subr.bf16.mxu0 %v1142
          %1241 = vmatpush1.bf16.msra.mxu0 %v1141
          %1242 = vmatprep.subr.bf16.mxu0 %v1146
          %1243 = vmatpush1.bf16.msra.mxu0 %v1145
          %1244 = vmatprep.subr.bf16.mxu0 %v1150
          %1245 = vmatpush1.bf16.msra.mxu0 %v1149
          %1246 = vmatprep.subr.bf16.mxu0 %v1154
          %1247 = vmatpush1.bf16.msra.mxu0 %v1153
          %1248 = vmatprep.subr.bf16.mxu0 %v1158
          %1249 = vmatpush1.bf16.msra.mxu0 %v1157
          %1250 = vmatprep.subr.bf16.mxu0 %v1162
          %1251 = vmatpush1.bf16.msra.mxu0 %v1161
          %1252 = vmatprep.subr.bf16.mxu0 0
          %1253 = vmatpush1.bf16.msra.mxu0 0
          %1254 = vmatprep.subr.bf16.mxu0 0
          %1255 = vmatpush1.bf16.msra.mxu0 0
          %1256 = vmatprep.subr.bf16.mxu0 0
          %1257 = vmatpush1.bf16.msra.mxu0 0
          %1258 = vmatprep.subr.bf16.mxu0 0
          %1259 = vmatpush1.bf16.msra.mxu0 0
          %1260 = vmatprep.subr.bf16.mxu0 0
          %1261 = vmatpush1.bf16.msra.mxu0 0
          %1262 = vmatprep.subr.bf16.mxu0 0
          %1263 = vmatpush1.bf16.msra.mxu0 0
          %1264 = vmatprep.subr.bf16.mxu0 0
          %1265 = vmatpush1.bf16.msra.mxu0 0
          %1266 = vmatprep.subr.bf16.mxu0 0
          %1267 = vmatpush1.bf16.msra.mxu0 0
          %1268 = vmatprep.mubr.bf16.mxu0 0
          %1269 = vmatmul.mubr.bf16.gmra.mrb[0].mxu0 %v1034
          %v1270 = vpop.f32.mrb[0].mxu0
          %v1271 = vadd.f32 0.0, %v1270
          %v1272 = vpop.f32.mrb[0].mxu0
          %v1273 = vadd.f32 0.0, %v1272
          %v1274 = vpop.f32.mrb[0].mxu0
          %v1275 = vpop.f32.mrb[0].mxu0
          %1276 = vdwg.mxu0
          %v1277 = vadd.f32 %v1030, %v1230
          %v1278 = vadd.f32 %v1031, %v1232
          %v1279 = vadd.f32 %v1032, %v1271
          %v1280 = vadd.f32 %v1033, %v1273
          %v1281 = vmul.f32 %v1277, 0.5
          %v1282 = vtanh.pop %v1281
          %v1283 = vmul.f32 %v1282, 0.5
          %v1284 = vadd.f32 %v1283, 0.5
          %v1285 = vmul.f32 %v1278, 0.5
          %v1286 = vtanh.pop %v1285
          %v1287 = vmul.f32 %v1286, 0.5
          %v1288 = vadd.f32 %v1287, 0.5
          %v1289 = vtanh.pop %v1279
          %v1290 = vmul.f32 %v1280, 0.5
          %v1291 = vtanh.pop %v1290
          %v1292 = vmul.f32 %v1291, 0.5
          %v1293 = vadd.f32 %v1292, 0.5
          %v1294 = vmul.f32 %v1288, %v1026
          %v1295 = vmul.f32 %v1284, %v1289
          %v1296 = vadd.f32 %v1294, %v1295
          %v1297 = vtanh.pop %v1296
          %v1298 = vmul.f32 %v1293, %v1297
          %s1299 = sadd.s32 %s1024, 3
          %v1300 = vstv %s1299
          %vm1301 = vcmp.lt.s32.totalorder %v1300, %v348
          %v1302 = vsel %vm1301, 1, 0
          %1303 = vset.pattern.permute.xlu0 0
          %1304 = vperm.xlu0 %1303, %v1302
          %v1305 = vpop.permute.xlu0 %1304
          %vm1306 = vcmp.eq.s32.totalorder %v1305, 1
          %v1307 = vsel %vm1306, %v1298, %v1025
          %v1308 = vsel %vm1306, %v1296, %v1026
          %v1309 = vsel %vm1306, %v1298, 0.0
          %v1310 = vpack.c.bf16 %v1309, %v1309
          %s1311 = scalar_lea.vmem %s293, 12 [#allocation9]
          %1312 = vst [vmem:[%s1311] sm:$0xf] %v1310
          %s1313 = scalar_lea.vmem %s257, 32 [#allocation4]
          %v1314 = vld [vmem:[%s1313] sm:$0xff]
          %v1315 = vld [vmem:[%s1313 + $0x8] sm:$0xff]
          %v1316 = vunpack.c.l.bf16 %v1314
          %v1317 = vunpack.c.h.bf16 %v1314
          %v1318 = vunpack.c.l.bf16 %v1315
          %v1319 = vunpack.c.h.bf16 %v1315
          %v1320 = vpack.c.bf16 %v1307, %v1307
          %1321 = vmatprep.subr.bf16.mxu0 %v1132
          %1322 = vmatpush1.bf16.msra.mxu0 %v1131
          %1323 = vmatprep.subr.bf16.mxu0 %v1136
          %1324 = vmatpush1.bf16.msra.mxu0 %v1135
          %1325 = vmatprep.subr.bf16.mxu0 %v1140
          %1326 = vmatpush1.bf16.msra.mxu0 %v1139
          %1327 = vmatprep.subr.bf16.mxu0 %v1144
          %1328 = vmatpush1.bf16.msra.mxu0 %v1143
          %1329 = vmatprep.subr.bf16.mxu0 %v1148
          %1330 = vmatpush1.bf16.msra.mxu0 %v1147
          %1331 = vmatprep.subr.bf16.mxu0 %v1152
          %1332 = vmatpush1.bf16.msra.mxu0 %v1151
          %1333 = vmatprep.subr.bf16.mxu0 %v1156
          %1334 = vmatpush1.bf16.msra.mxu0 %v1155
          %1335 = vmatprep.subr.bf16.mxu0 %v1160
          %1336 = vmatpush1.bf16.msra.mxu0 %v1159
          %1337 = vmatprep.subr.bf16.mxu0 0
          %1338 = vmatpush1.bf16.msra.mxu0 0
          %1339 = vmatprep.subr.bf16.mxu0 0
          %1340 = vmatpush1.bf16.msra.mxu0 0
          %1341 = vmatprep.subr.bf16.mxu0 0
          %1342 = vmatpush1.bf16.msra.mxu0 0
          %1343 = vmatprep.subr.bf16.mxu0 0
          %1344 = vmatpush1.bf16.msra.mxu0 0
          %1345 = vmatprep.subr.bf16.mxu0 0
          %1346 = vmatpush1.bf16.msra.mxu0 0
          %1347 = vmatprep.subr.bf16.mxu0 0
          %1348 = vmatpush1.bf16.msra.mxu0 0
          %1349 = vmatprep.subr.bf16.mxu0 0
          %1350 = vmatpush1.bf16.msra.mxu0 0
          %1351 = vmatprep.subr.bf16.mxu0 0
          %1352 = vmatpush1.bf16.msra.mxu0 0
          %1353 = vmatprep.mubr.bf16.mxu0 0
          %1354 = vmatmul.mubr.bf16.gmra.mrb[0].mxu0 %v1320
          %v1355 = vpop.f32.mrb[0].mxu0
          %v1356 = vadd.f32 0.0, %v1355
          %v1357 = vpop.f32.mrb[0].mxu0
          %v1358 = vadd.f32 0.0, %v1357
          %v1359 = vpop.f32.mrb[0].mxu0
          %v1360 = vpop.f32.mrb[0].mxu0
          %1361 = vdwg.mxu0
          %1362 = vmatprep.subr.bf16.mxu0 %v1134
          %1363 = vmatpush1.bf16.msra.mxu0 %v1133
          %1364 = vmatprep.subr.bf16.mxu0 %v1138
          %1365 = vmatpush1.bf16.msra.mxu0 %v1137
          %1366 = vmatprep.subr.bf16.mxu0 %v1142
          %1367 = vmatpush1.bf16.msra.mxu0 %v1141
          %1368 = vmatprep.subr.bf16.mxu0 %v1146
          %1369 = vmatpush1.bf16.msra.mxu0 %v1145
          %1370 = vmatprep.subr.bf16.mxu0 %v1150
          %1371 = vmatpush1.bf16.msra.mxu0 %v1149
          %1372 = vmatprep.subr.bf16.mxu0 %v1154
          %1373 = vmatpush1.bf16.msra.mxu0 %v1153
          %1374 = vmatprep.subr.bf16.mxu0 %v1158
          %1375 = vmatpush1.bf16.msra.mxu0 %v1157
          %1376 = vmatprep.subr.bf16.mxu0 %v1162
          %1377 = vmatpush1.bf16.msra.mxu0 %v1161
          %1378 = vmatprep.subr.bf16.mxu0 0
          %1379 = vmatpush1.bf16.msra.mxu0 0
          %1380 = vmatprep.subr.bf16.mxu0 0
          %1381 = vmatpush1.bf16.msra.mxu0 0
          %1382 = vmatprep.subr.bf16.mxu0 0
          %1383 = vmatpush1.bf16.msra.mxu0 0
          %1384 = vmatprep.subr.bf16.mxu0 0
          %1385 = vmatpush1.bf16.msra.mxu0 0
          %1386 = vmatprep.subr.bf16.mxu0 0
          %1387 = vmatpush1.bf16.msra.mxu0 0
          %1388 = vmatprep.subr.bf16.mxu0 0
          %1389 = vmatpush1.bf16.msra.mxu0 0
          %1390 = vmatprep.subr.bf16.mxu0 0
          %1391 = vmatpush1.bf16.msra.mxu0 0
          %1392 = vmatprep.subr.bf16.mxu0 0
          %1393 = vmatpush1.bf16.msra.mxu0 0
          %1394 = vmatprep.mubr.bf16.mxu0 0
          %1395 = vmatmul.mubr.bf16.gmra.mrb[0].mxu0 %v1320
          %v1396 = vpop.f32.mrb[0].mxu0
          %v1397 = vadd.f32 0.0, %v1396
          %v1398 = vpop.f32.mrb[0].mxu0
          %v1399 = vadd.f32 0.0, %v1398
          %v1400 = vpop.f32.mrb[0].mxu0
          %v1401 = vpop.f32.mrb[0].mxu0
          %1402 = vdwg.mxu0
          %v1403 = vadd.f32 %v1316, %v1356
          %v1404 = vadd.f32 %v1317, %v1358
          %v1405 = vadd.f32 %v1318, %v1397
          %v1406 = vadd.f32 %v1319, %v1399
          %v1407 = vmul.f32 %v1403, 0.5
          %v1408 = vtanh.pop %v1407
          %v1409 = vmul.f32 %v1408, 0.5
          %v1410 = vadd.f32 %v1409, 0.5
          %v1411 = vmul.f32 %v1404, 0.5
          %v1412 = vtanh.pop %v1411
          %v1413 = vmul.f32 %v1412, 0.5
          %v1414 = vadd.f32 %v1413, 0.5
          %v1415 = vtanh.pop %v1405
          %v1416 = vmul.f32 %v1406, 0.5
          %v1417 = vtanh.pop %v1416
          %v1418 = vmul.f32 %v1417, 0.5
          %v1419 = vadd.f32 %v1418, 0.5
          %v1420 = vmul.f32 %v1414, %v1308
          %v1421 = vmul.f32 %v1410, %v1415
          %v1422 = vadd.f32 %v1420, %v1421
          %v1423 = vtanh.pop %v1422
          %v1424 = vmul.f32 %v1419, %v1423
          %s1425 = sadd.s32 %s1024, 2
          %v1426 = vstv %s1425
          %vm1427 = vcmp.lt.s32.totalorder %v1426, %v348
          %v1428 = vsel %vm1427, 1, 0
          %1429 = vset.pattern.permute.xlu0 0
          %1430 = vperm.xlu0 %1429, %v1428
          %v1431 = vpop.permute.xlu0 %1430
          %vm1432 = vcmp.eq.s32.totalorder %v1431, 1
          %v1433 = vsel %vm1432, %v1424, %v1307
          %v1434 = vsel %vm1432, %v1422, %v1308
          %v1435 = vsel %vm1432, %v1424, 0.0
          %v1436 = vpack.c.bf16 %v1435, %v1435
          %s1437 = scalar_lea.vmem %s293, 8 [#allocation9]
          %1438 = vst [vmem:[%s1437] sm:$0xf] %v1436
          %s1439 = scalar_lea.vmem %s257, 16 [#allocation4]
          %v1440 = vld [vmem:[%s1439] sm:$0xff]
          %v1441 = vld [vmem:[%s1439 + $0x8] sm:$0xff]
          %v1442 = vunpack.c.l.bf16 %v1440
          %v1443 = vunpack.c.h.bf16 %v1440
          %v1444 = vunpack.c.l.bf16 %v1441
          %v1445 = vunpack.c.h.bf16 %v1441
          %v1446 = vpack.c.bf16 %v1433, %v1433
          %1447 = vmatprep.subr.bf16.mxu0 %v1132
          %1448 = vmatpush1.bf16.msra.mxu0 %v1131
          %1449 = vmatprep.subr.bf16.mxu0 %v1136
          %1450 = vmatpush1.bf16.msra.mxu0 %v1135
          %1451 = vmatprep.subr.bf16.mxu0 %v1140
          %1452 = vmatpush1.bf16.msra.mxu0 %v1139
          %1453 = vmatprep.subr.bf16.mxu0 %v1144
          %1454 = vmatpush1.bf16.msra.mxu0 %v1143
          %1455 = vmatprep.subr.bf16.mxu0 %v1148
          %1456 = vmatpush1.bf16.msra.mxu0 %v1147
          %1457 = vmatprep.subr.bf16.mxu0 %v1152
          %1458 = vmatpush1.bf16.msra.mxu0 %v1151
          %1459 = vmatprep.subr.bf16.mxu0 %v1156
          %1460 = vmatpush1.bf16.msra.mxu0 %v1155
          %1461 = vmatprep.subr.bf16.mxu0 %v1160
          %1462 = vmatpush1.bf16.msra.mxu0 %v1159
          %1463 = vmatprep.subr.bf16.mxu0 0
          %1464 = vmatpush1.bf16.msra.mxu0 0
          %1465 = vmatprep.subr.bf16.mxu0 0
          %1466 = vmatpush1.bf16.msra.mxu0 0
          %1467 = vmatprep.subr.bf16.mxu0 0
          %1468 = vmatpush1.bf16.msra.mxu0 0
          %1469 = vmatprep.subr.bf16.mxu0 0
          %1470 = vmatpush1.bf16.msra.mxu0 0
          %1471 = vmatprep.subr.bf16.mxu0 0
          %1472 = vmatpush1.bf16.msra.mxu0 0
          %1473 = vmatprep.subr.bf16.mxu0 0
          %1474 = vmatpush1.bf16.msra.mxu0 0
          %1475 = vmatprep.subr.bf16.mxu0 0
          %1476 = vmatpush1.bf16.msra.mxu0 0
          %1477 = vmatprep.subr.bf16.mxu0 0
          %1478 = vmatpush1.bf16.msra.mxu0 0
          %1479 = vmatprep.mubr.bf16.mxu0 0
          %1480 = vmatmul.mubr.bf16.gmra.mrb[0].mxu0 %v1446
          %v1481 = vpop.f32.mrb[0].mxu0
          %v1482 = vadd.f32 0.0, %v1481
          %v1483 = vpop.f32.mrb[0].mxu0
          %v1484 = vadd.f32 0.0, %v1483
          %v1485 = vpop.f32.mrb[0].mxu0
          %v1486 = vpop.f32.mrb[0].mxu0
          %1487 = vdwg.mxu0
          %1488 = vmatprep.subr.bf16.mxu0 %v1134
          %1489 = vmatpush1.bf16.msra.mxu0 %v1133
          %1490 = vmatprep.subr.bf16.mxu0 %v1138
          %1491 = vmatpush1.bf16.msra.mxu0 %v1137
          %1492 = vmatprep.subr.bf16.mxu0 %v1142
          %1493 = vmatpush1.bf16.msra.mxu0 %v1141
          %1494 = vmatprep.subr.bf16.mxu0 %v1146
          %1495 = vmatpush1.bf16.msra.mxu0 %v1145
          %1496 = vmatprep.subr.bf16.mxu0 %v1150
          %1497 = vmatpush1.bf16.msra.mxu0 %v1149
          %1498 = vmatprep.subr.bf16.mxu0 %v1154
          %1499 = vmatpush1.bf16.msra.mxu0 %v1153
          %1500 = vmatprep.subr.bf16.mxu0 %v1158
          %1501 = vmatpush1.bf16.msra.mxu0 %v1157
          %1502 = vmatprep.subr.bf16.mxu0 %v1162
          %1503 = vmatpush1.bf16.msra.mxu0 %v1161
          %1504 = vmatprep.subr.bf16.mxu0 0
          %1505 = vmatpush1.bf16.msra.mxu0 0
          %1506 = vmatprep.subr.bf16.mxu0 0
          %1507 = vmatpush1.bf16.msra.mxu0 0
          %1508 = vmatprep.subr.bf16.mxu0 0
          %1509 = vmatpush1.bf16.msra.mxu0 0
          %1510 = vmatprep.subr.bf16.mxu0 0
          %1511 = vmatpush1.bf16.msra.mxu0 0
          %1512 = vmatprep.subr.bf16.mxu0 0
          %1513 = vmatpush1.bf16.msra.mxu0 0
          %1514 = vmatprep.subr.bf16.mxu0 0
          %1515 = vmatpush1.bf16.msra.mxu0 0
          %1516 = vmatprep.subr.bf16.mxu0 0
          %1517 = vmatpush1.bf16.msra.mxu0 0
          %1518 = vmatprep.subr.bf16.mxu0 0
          %1519 = vmatpush1.bf16.msra.mxu0 0
          %1520 = vmatprep.mubr.bf16.mxu0 0
          %1521 = vmatmul.mubr.bf16.gmra.mrb[0].mxu0 %v1446
          %v1522 = vpop.f32.mrb[0].mxu0
          %v1523 = vadd.f32 0.0, %v1522
          %v1524 = vpop.f32.mrb[0].mxu0
          %v1525 = vadd.f32 0.0, %v1524
          %v1526 = vpop.f32.mrb[0].mxu0
          %v1527 = vpop.f32.mrb[0].mxu0
          %1528 = vdwg.mxu0
          %v1529 = vadd.f32 %v1442, %v1482
          %v1530 = vadd.f32 %v1443, %v1484
          %v1531 = vadd.f32 %v1444, %v1523
          %v1532 = vadd.f32 %v1445, %v1525
          %v1533 = vmul.f32 %v1529, 0.5
          %v1534 = vtanh.pop %v1533
          %v1535 = vmul.f32 %v1534, 0.5
          %v1536 = vadd.f32 %v1535, 0.5
          %v1537 = vmul.f32 %v1530, 0.5
          %v1538 = vtanh.pop %v1537
          %v1539 = vmul.f32 %v1538, 0.5
          %v1540 = vadd.f32 %v1539, 0.5
          %v1541 = vtanh.pop %v1531
          %v1542 = vmul.f32 %v1532, 0.5
          %v1543 = vtanh.pop %v1542
          %v1544 = vmul.f32 %v1543, 0.5
          %v1545 = vadd.f32 %v1544, 0.5
          %v1546 = vmul.f32 %v1540, %v1434
          %v1547 = vmul.f32 %v1536, %v1541
          %v1548 = vadd.f32 %v1546, %v1547
          %v1549 = vtanh.pop %v1548
          %v1550 = vmul.f32 %v1545, %v1549
          %s1551 = sadd.s32 %s1024, 1
          %v1552 = vstv %s1551
          %vm1553 = vcmp.lt.s32.totalorder %v1552, %v348
          %v1554 = vsel %vm1553, 1, 0
          %1555 = vset.pattern.permute.xlu0 0
          %1556 = vperm.xlu0 %1555, %v1554
          %v1557 = vpop.permute.xlu0 %1556
          %vm1558 = vcmp.eq.s32.totalorder %v1557, 1
          %v1559 = vsel %vm1558, %v1550, %v1433
          %v1560 = vsel %vm1558, %v1548, %v1434
          %v1561 = vsel %vm1558, %v1550, 0.0
          %v1562 = vpack.c.bf16 %v1561, %v1561
          %s1563 = scalar_lea.vmem %s293, 4 [#allocation9]
          %1564 = vst [vmem:[%s1563] sm:$0xf] %v1562
          %v1565 = vld [vmem:[%s257] sm:$0xff]
          %v1566 = vld [vmem:[%s257 + $0x8] sm:$0xff]
          %v1567 = vunpack.c.l.bf16 %v1565
          %v1568 = vunpack.c.h.bf16 %v1565
          %v1569 = vunpack.c.l.bf16 %v1566
          %v1570 = vunpack.c.h.bf16 %v1566
          %v1571 = vpack.c.bf16 %v1559, %v1559
          %1572 = vmatprep.subr.bf16.mxu0 %v1132
          %1573 = vmatpush1.bf16.msra.mxu0 %v1131
          %1574 = vmatprep.subr.bf16.mxu0 %v1136
          %1575 = vmatpush1.bf16.msra.mxu0 %v1135
          %1576 = vmatprep.subr.bf16.mxu0 %v1140
          %1577 = vmatpush1.bf16.msra.mxu0 %v1139
          %1578 = vmatprep.subr.bf16.mxu0 %v1144
          %1579 = vmatpush1.bf16.msra.mxu0 %v1143
          %1580 = vmatprep.subr.bf16.mxu0 %v1148
          %1581 = vmatpush1.bf16.msra.mxu0 %v1147
          %1582 = vmatprep.subr.bf16.mxu0 %v1152
          %1583 = vmatpush1.bf16.msra.mxu0 %v1151
          %1584 = vmatprep.subr.bf16.mxu0 %v1156
          %1585 = vmatpush1.bf16.msra.mxu0 %v1155
          %1586 = vmatprep.subr.bf16.mxu0 %v1160
          %1587 = vmatpush1.bf16.msra.mxu0 %v1159
          %1588 = vmatprep.subr.bf16.mxu0 0
          %1589 = vmatpush1.bf16.msra.mxu0 0
          %1590 = vmatprep.subr.bf16.mxu0 0
          %1591 = vmatpush1.bf16.msra.mxu0 0
          %1592 = vmatprep.subr.bf16.mxu0 0
          %1593 = vmatpush1.bf16.msra.mxu0 0
          %1594 = vmatprep.subr.bf16.mxu0 0
          %1595 = vmatpush1.bf16.msra.mxu0 0
          %1596 = vmatprep.subr.bf16.mxu0 0
          %1597 = vmatpush1.bf16.msra.mxu0 0
          %1598 = vmatprep.subr.bf16.mxu0 0
          %1599 = vmatpush1.bf16.msra.mxu0 0
          %1600 = vmatprep.subr.bf16.mxu0 0
          %1601 = vmatpush1.bf16.msra.mxu0 0
          %1602 = vmatprep.subr.bf16.mxu0 0
          %1603 = vmatpush1.bf16.msra.mxu0 0
          %1604 = vmatprep.mubr.bf16.mxu0 0
          %1605 = vmatmul.mubr.bf16.gmra.mrb[0].mxu0 %v1571
          %v1606 = vpop.f32.mrb[0].mxu0
          %v1607 = vadd.f32 0.0, %v1606
          %v1608 = vpop.f32.mrb[0].mxu0
          %v1609 = vadd.f32 0.0, %v1608
          %v1610 = vpop.f32.mrb[0].mxu0
          %v1611 = vpop.f32.mrb[0].mxu0
          %1612 = vdwg.mxu0
          %1613 = vmatprep.subr.bf16.mxu0 %v1134
          %1614 = vmatpush1.bf16.msra.mxu0 %v1133
          %1615 = vmatprep.subr.bf16.mxu0 %v1138
          %1616 = vmatpush1.bf16.msra.mxu0 %v1137
          %1617 = vmatprep.subr.bf16.mxu0 %v1142
          %1618 = vmatpush1.bf16.msra.mxu0 %v1141
          %1619 = vmatprep.subr.bf16.mxu0 %v1146
          %1620 = vmatpush1.bf16.msra.mxu0 %v1145
          %1621 = vmatprep.subr.bf16.mxu0 %v1150
          %1622 = vmatpush1.bf16.msra.mxu0 %v1149
          %1623 = vmatprep.subr.bf16.mxu0 %v1154
          %1624 = vmatpush1.bf16.msra.mxu0 %v1153
          %1625 = vmatprep.subr.bf16.mxu0 %v1158
          %1626 = vmatpush1.bf16.msra.mxu0 %v1157
          %1627 = vmatprep.subr.bf16.mxu0 %v1162
          %1628 = vmatpush1.bf16.msra.mxu0 %v1161
          %1629 = vmatprep.subr.bf16.mxu0 0
          %1630 = vmatpush1.bf16.msra.mxu0 0
          %1631 = vmatprep.subr.bf16.mxu0 0
          %1632 = vmatpush1.bf16.msra.mxu0 0
          %1633 = vmatprep.subr.bf16.mxu0 0
          %1634 = vmatpush1.bf16.msra.mxu0 0
          %1635 = vmatprep.subr.bf16.mxu0 0
          %1636 = vmatpush1.bf16.msra.mxu0 0
          %1637 = vmatprep.subr.bf16.mxu0 0
          %1638 = vmatpush1.bf16.msra.mxu0 0
          %1639 = vmatprep.subr.bf16.mxu0 0
          %1640 = vmatpush1.bf16.msra.mxu0 0
          %1641 = vmatprep.subr.bf16.mxu0 0
          %1642 = vmatpush1.bf16.msra.mxu0 0
          %1643 = vmatprep.subr.bf16.mxu0 0
          %1644 = vmatpush1.bf16.msra.mxu0 0
          %1645 = vmatprep.mubr.bf16.mxu0 0
          %1646 = vmatmul.mubr.bf16.gmra.mrb[0].mxu0 %v1571
          %v1647 = vpop.f32.mrb[0].mxu0
          %v1648 = vadd.f32 0.0, %v1647
          %v1649 = vpop.f32.mrb[0].mxu0
          %v1650 = vadd.f32 0.0, %v1649
          %v1651 = vpop.f32.mrb[0].mxu0
          %v1652 = vpop.f32.mrb[0].mxu0
          %1653 = vdwg.mxu0
          %v1654 = vadd.f32 %v1567, %v1607
          %v1655 = vadd.f32 %v1568, %v1609
          %v1656 = vadd.f32 %v1569, %v1648
          %v1657 = vadd.f32 %v1570, %v1650
          %v1658 = vmul.f32 %v1654, 0.5
          %v1659 = vtanh.pop %v1658
          %v1660 = vmul.f32 %v1659, 0.5
          %v1661 = vadd.f32 %v1660, 0.5
          %v1662 = vmul.f32 %v1655, 0.5
          %v1663 = vtanh.pop %v1662
          %v1664 = vmul.f32 %v1663, 0.5
          %v1665 = vadd.f32 %v1664, 0.5
          %v1666 = vtanh.pop %v1656
          %v1667 = vmul.f32 %v1657, 0.5
          %v1668 = vtanh.pop %v1667
          %v1669 = vmul.f32 %v1668, 0.5
          %v1670 = vadd.f32 %v1669, 0.5
          %v1671 = vmul.f32 %v1665, %v1560
          %v1672 = vmul.f32 %v1661, %v1666
          %v1673 = vadd.f32 %v1671, %v1672
          %v1674 = vtanh.pop %v1673
          %v1675 = vmul.f32 %v1670, %v1674
          %v1676 = vstv %s1024
          %vm1677 = vcmp.lt.s32.totalorder %v1676, %v348
          %v1678 = vsel %vm1677, 1, 0
          %1679 = vset.pattern.permute.xlu0 0
          %1680 = vperm.xlu0 %1679, %v1678
          %v1681 = vpop.permute.xlu0 %1680
          %vm1682 = vcmp.eq.s32.totalorder %v1681, 1
          %v1683 = vsel %vm1682, %v1675, %v1559
          %v1684 = vsel %vm1682, %v1673, %v1560
          %v1685 = vsel %vm1682, %v1675, 0.0
          %v1686 = vpack.c.bf16 %v1685, %v1685
          %1687 = vst [vmem:[%s293] sm:$0xf] %v1686
          %1688 = vst [vmem:[#allocation2] sm:$0xff] %v1683
          %1689 = vst [vmem:[#allocation3] sm:$0xff] %v1684
        $region52: #{tpu_custom_call.1} parent=31 // pred_fallthru
          _
        %p1690 = scmp.eq.s32.totalorder %s33, 1
        // Predicated region
        $region53: #{tpu_custom_call.1} parent=31 // pred_check
          %p1691 = pneg %p1690
        $region54: #{tpu_custom_call.1} parent=31 // pred_check_branch
          %1693 = sbr.rel (%p1691) target = $region56
        $region55: #{tpu_custom_call.1} parent=31 // pred_region
          %v1694 = vld [vmem:[#allocation2] sm:$0xff]
          %1695 = vst [vmem:[%s300] sm:$0xff] %v1694
        $region56: #{tpu_custom_call.1} parent=31 // pred_fallthru
          _
        %s1696 = sand.u32 %s137, 1
        %s1697 = scalar_lea.sflag [#allocation6], %s1696
        %s1698 = sand.u32 %s137, 1
        %s1699 = smul.addr %s1698, 16
        %s1700 = scalar_lea.vmem [#allocation9], %s1699
        %s1701 = sand.u32 %s163, 1
        %s1702 = scalar_lea.sflag [#allocation11], %s1701
        %s1703 = sand.u32 %s163, 1
        %s1704 = smul.addr %s1703, 8
        %s1705 = scalar_lea.vmem [#allocation10], %s1704
        // Predicated region
        $region57: #{tpu_custom_call.1} parent=31 // pred_check
          %p1706 = pneg %p147
        $region58: #{tpu_custom_call.1} parent=31 // pred_check_branch
          %1708 = sbr.rel (%p1706) target = $region60
        $region59: #{tpu_custom_call.1} parent=31 // pred_region
          %p1709 = scmp.eq.s32.totalorder %s32, 1
          %s1710 = ssub.s32 1, %s33
          %s1711 = scalar_select %p1709, %s1710, %s33
          %s1712 = smul.u32 4, %s1711
          %s1714 = ssub.s32 256, 256
          %1715 = vsyncadd %s1697, %s1714
          %s1716 = smul.addr %s1712, 2
          %s1717 = sadd.s32 %s32, %s1716
          %s1718 = smul.addr %s1717, 64
          %s1719 = scalar_lea.hbm %s3, %s1718
          %s1720 = sshll.u32 %s1700, 4
          %s1721 = int_to_ptr.vmem [resolvable:$true] %s1720
          %1726 = dma.vmem_to_hbm [thread:$0]  %s1721, 256, %s1719, %s1697, 64, 128, 4
        $region60: #{tpu_custom_call.1} parent=31 // pred_fallthru
          _
        // Predicated region
        $region61: #{tpu_custom_call.1} parent=31 // pred_check
          %p1727 = pneg %p173
        $region62: #{tpu_custom_call.1} parent=31 // pred_check_branch
          %1729 = sbr.rel (%p1727) target = $region64
        $region63: #{tpu_custom_call.1} parent=31 // pred_region
          %s1731 = ssub.s32 128, 128
          %1732 = vsyncadd %s1702, %s1731
          %s1733 = smul.addr %s32, 128
          %s1734 = scalar_lea.hbm %s4, %s1733
          %s1736 = sshll.u32 %s1705, 4
          %s1737 = int_to_ptr.vmem [resolvable:$true] %s1736
          %1739 = dma.vmem_to_hbm [thread:$0]  %s1737, 128, %s1734, %s1702
        $region64: #{tpu_custom_call.1} parent=31 // pred_fallthru
          _
      $region32: #{tpu_custom_call.1} parent=5 // pred_fallthru
        _
      %p1740 = scmp.le.s32.totalorder 2, %s23
      // Predicated region
      $region65: #{tpu_custom_call.1} parent=5 // pred_check
        %p1741 = pneg %p1740
      $region66: #{tpu_custom_call.1} parent=5 // pred_check_branch
        %1743 = sbr.rel (%p1741) target = $region68
      $region67: #{tpu_custom_call.1} parent=5 // pred_region
        %s1744 = ssub.s32 %s23, 2
        // Predicated region
        $region69: #{tpu_custom_call.1} parent=67 // pred_check
          %p1745 = pneg %p153
        $region70: #{tpu_custom_call.1} parent=67 // pred_check_branch
          %1747 = sbr.rel (%p1745) target = $region72
        $region71: #{tpu_custom_call.1} parent=67 // pred_region
          %s1748 = sand.u32 %s138, 1
          %s1749 = scalar_lea.sflag [#allocation6], %s1748
          %s1750 = sand.u32 %s138, 1
          %s1751 = smul.addr %s1750, 16
          %s1752 = scalar_lea.vmem [#allocation9], %s1751
          %1753 = dma.done %s1749, 256
        $region72: #{tpu_custom_call.1} parent=67 // pred_fallthru
          _
        // Predicated region
        $region73: #{tpu_custom_call.1} parent=67 // pred_check
          %p1754 = pneg %p179
        $region74: #{tpu_custom_call.1} parent=67 // pred_check_branch
          %1756 = sbr.rel (%p1754) target = $region76
        $region75: #{tpu_custom_call.1} parent=67 // pred_region
          %s1757 = sand.u32 %s164, 1
          %s1758 = scalar_lea.sflag [#allocation11], %s1757
          %s1759 = sand.u32 %s164, 1
          %s1760 = smul.addr %s1759, 8
          %s1761 = scalar_lea.vmem [#allocation10], %s1760
          %1762 = dma.done %s1758, 128
        $region76: #{tpu_custom_call.1} parent=67 // pred_fallthru
          _
      $region68: #{tpu_custom_call.1} parent=5 // pred_fallthru
        _
    $region6: #{tpu_custom_call.1} parent=1 // loop_footer
      %s27 = sadd.s32 1, %s23
    $region7: #{tpu_custom_call.1} parent=1 // loop_footer_branch
      %22 = sbr.rel target = $region3
    $region8: #{tpu_custom_call.1} parent=1 // loop_exit
      _
    %1763 = vsyncpa [#allocation5], 1
    %s1764 = scalar_lea.sflag [#allocation5], 1
    %1765 = vsyncpa %s1764, 1
    %1766 = vsyncpa [#allocation8], 1
    %s1767 = scalar_lea.sflag [#allocation8], 1
    %1768 = vsyncpa %s1767, 1
    %1769 = vsyncpa [#allocation6], 1
    %s1770 = scalar_lea.sflag [#allocation6], 1
    %1771 = vsyncpa %s1770, 1
    %1772 = vsyncpa [#allocation11], 1
    %s1773 = scalar_lea.sflag [#allocation11], 1
    %1774 = vsyncpa %s1773, 1

</llo_original>
